<compile_context>
chip_gen: v6e
topology: v6e:2x2x1
jax: 0.10.0
libtpu: 0.0.40
codegen_flags: <defaults>
</compile_context>

<pallas_src>
import functools
import math

import jax
import jax.numpy as jnp
from jax import lax
from jax.experimental import pallas as pl
from jax.experimental.pallas import tpu as pltpu


# Operand dtype fed to the MXU. The PyTorch module is float32, so default to
# f32 to keep exact forward semantics at these toy shapes; set to jnp.bfloat16
# at real model sizes (bf16 is MXU-native on v5e/v6e/v7x; accumulation stays
# f32 via preferred_element_type).
MXU_DTYPE = jnp.float32


# ----------------------------- in-kernel helpers -----------------------------

def _mm(a, b):
    """2-D matmul on the MXU with f32 accumulation."""
    return jnp.dot(a.astype(MXU_DTYPE), b.astype(MXU_DTYPE),
                   preferred_element_type=jnp.float32)


def _layernorm(x, g, b, eps=1e-5):
    # x: (N, D), g/b: (1, D); statistics kept in f32.
    mu = jnp.mean(x, axis=-1, keepdims=True)
    var = jnp.mean((x - mu) ** 2, axis=-1, keepdims=True)
    return (x - mu) * lax.rsqrt(var + eps) * g + b


def _gelu_exact(x):
    # nn.GELU() default: exact erf formulation, f32.
    return 0.5 * x * (1.0 + lax.erf(x / jnp.sqrt(jnp.float32(2.0))))


def _causal_mha(xn, wqkv, bqkv, wo, bo, mask_bias, num_heads, batch, seq):
    """Causal multi-head attention on a flattened (N, D) block, N = batch*seq.

    wqkv: (D, 3D) fused Q/K/V projection.
    mask_bias: (1, seq, seq) additive f32 bias (0 on/below diag, -1e30 above).
    """
    N, D = xn.shape
    hd = D // num_heads
    inv_sqrt_dk = jnp.float32(1.0 / math.sqrt(hd))

    # One fused MXU pass for Q, K and V (lane width 3D instead of 3x width D).
    qkv = _mm(xn, wqkv) + bqkv                       # (N, 3D), f32
    qkv = qkv.reshape(batch, seq, 3 * D)             # split leading dim only

    out = jnp.zeros((N, D), jnp.float32)
    for h in range(num_heads):                       # short static unroll
        # Fold the 1/sqrt(d_k) scale into Q (S*hd elems, cheaper than scaling
        # the (S,S) score matrix at real sequence lengths).
        qh = qkv[:, :, h * hd:(h + 1) * hd] * inv_sqrt_dk
        kh = qkv[:, :, D + h * hd:D + (h + 1) * hd]
        vh = qkv[:, :, 2 * D + h * hd:2 * D + (h + 1) * hd]

        # Batched over the batch dim with a single dot_general batch dim.
        s = jnp.einsum('bqd,bkd->bqk',
                       qh.astype(MXU_DTYPE), kh.astype(MXU_DTYPE),
                       preferred_element_type=jnp.float32)
        s = s + mask_bias                            # additive causal mask
        s = s - jnp.max(s, axis=-1, keepdims=True)
        p = jnp.exp(s)                               # probabilities stay f32
        p = p * pl.reciprocal(jnp.sum(p, axis=-1, keepdims=True), approx=True)

        pv = jnp.einsum('bqk,bkd->bqd',
                        p.astype(MXU_DTYPE), vh.astype(MXU_DTYPE),
                        preferred_element_type=jnp.float32)   # (B, S, hd)

        # Fold this head straight into the output projection: equivalent to
        # concat(heads) @ wo, with no concatenate / lane relayout.
        out = out + _mm(pv.reshape(N, hd), wo[h * hd:(h + 1) * hd, :])
    return out + bo


# --------------------------------- the kernel --------------------------------

def decoder_block_kernel(
    x_ref,
    ln1_g, ln1_b, wqkv1, bqkv1, wo1, bo1,
    ln2_g, ln2_b, wqkv2, bqkv2, wo2, bo2,
    ln3_g, ln3_b, w1, b1, w2, b2,
    o_ref, *, num_heads, seq_len,
):
    N, D = x_ref.shape
    batch = N // seq_len
    x = x_ref[...].astype(jnp.float32)               # (B*S, D) residual stream

    # Additive causal mask built once, shared by both MHA blocks.
    row = lax.broadcasted_iota(jnp.int32, (1, seq_len, seq_len), 1)
    col = lax.broadcasted_iota(jnp.int32, (1, seq_len, seq_len), 2)
    mask_bias = jnp.where(row >= col, jnp.float32(0.0), jnp.float32(-1e30))

    # x = x + mha_1(layernorm_1(x))
    x = x + _causal_mha(_layernorm(x, ln1_g[...], ln1_b[...]),
                        wqkv1[...], bqkv1[...], wo1[...], bo1[...],
                        mask_bias, num_heads, batch, seq_len)

    # x = x + mha_2(layernorm_2(x))
    x = x + _causal_mha(_layernorm(x, ln2_g[...], ln2_b[...]),
                        wqkv2[...], bqkv2[...], wo2[...], bo2[...],
                        mask_bias, num_heads, batch, seq_len)

    # x = x + ff(layernorm_3(x))   (dropout = identity at eval)
    h = _layernorm(x, ln3_g[...], ln3_b[...])
    h = _mm(h, w1[...]) + b1[...]
    h = _gelu_exact(h)
    h = _mm(h, w2[...]) + b2[...]
    x = x + h

    o_ref[...] = x.astype(o_ref.dtype)


# --------------------------------- wrapper -----------------------------------

def decoder_block(x, params, num_heads):
    (ln1_g, ln1_b, wq1, bq1, wk1, bk1, wv1, bv1, wo1, bo1,
     ln2_g, ln2_b, wq2, bq2, wk2, bk2, wv2, bv2, wo2, bo2,
     ln3_g, ln3_b, w1, b1, w2, b2) = params
    B, S, D = x.shape
    N = B * S

    # Fuse each MHA block's Q/K/V projections into one (D, 3D) weight so the
    # kernel does a single wide MXU pass per block.
    wqkv1 = jnp.concatenate([wq1, wk1, wv1], axis=1)
    bqkv1 = jnp.concatenate([bq1, bk1, bv1], axis=1)
    wqkv2 = jnp.concatenate([wq2, wk2, wv2], axis=1)
    bqkv2 = jnp.concatenate([bq2, bk2, bv2], axis=1)

    kernel_params = [ln1_g, ln1_b, wqkv1, bqkv1, wo1, bo1,
                     ln2_g, ln2_b, wqkv2, bqkv2, wo2, bo2,
                     ln3_g, ln3_b, w1, b1, w2, b2]

    # Residual stream flattened to (B*S, D): sublane-dense rows, no batch grid
    # (metadata-only reshape on HBM).
    x2 = x.reshape(N, D)

    def full_block(shape):
        nd = len(shape)
        return pl.BlockSpec(shape, lambda i, _nd=nd: (0,) * _nd)

    in_specs = [full_block((N, D))] + [full_block(p.shape) for p in kernel_params]
    out_spec = full_block((N, D))

    kernel = functools.partial(decoder_block_kernel,
                               num_heads=num_heads, seq_len=S)

    # NOTE: at real model sizes (large D/I, long S) the weights should be
    # single-buffered (pl.Buffered(1) or pl.ANY + one manual DMA) and the
    # attention tiled flash-style over S so the live set fits v7x's 64 MiB
    # VMEM; unnecessary at these toy shapes (everything fits in one block).
    y2 = pl.pallas_call(
        kernel,
        out_shape=jax.ShapeDtypeStruct((N, D), x.dtype),
        grid_spec=pltpu.PrefetchScalarGridSpec(
            num_scalar_prefetch=0,
            grid=(1,),                     # single step: no pipeline overhead
            in_specs=in_specs,
            out_specs=out_spec,
        ),
        compiler_params=pltpu.CompilerParams(
            dimension_semantics=("arbitrary",),
            vmem_limit_bytes=32 * 1024 * 1024,
        ),
    )(x2, *kernel_params)
    return y2.reshape(B, S, D)


# -------------------------- pure-JAX reference (check) ------------------------

def _ref_layernorm(x, g, b, eps=1e-5):
    mu = jnp.mean(x, axis=-1, keepdims=True)
    var = jnp.mean((x - mu) ** 2, axis=-1, keepdims=True)
    return (x - mu) / jnp.sqrt(var + eps) * g + b


def _ref_mha(x, wq, bq, wk, bk, wv, bv, wo, bo, num_heads):
    B, S, D = x.shape
    hd = D // num_heads
    q = x @ wq + bq
    k = x @ wk + bk
    v = x @ wv + bv
    mask = jnp.tril(jnp.ones((S, S)))
    outs = []
    for h in range(num_heads):
        qh = q[..., h * hd:(h + 1) * hd]
        kh = k[..., h * hd:(h + 1) * hd]
        vh = v[..., h * hd:(h + 1) * hd]
        s = jnp.einsum("bsd,btd->bst", qh, kh) / math.sqrt(hd)
        s = jnp.where(mask == 0, -jnp.inf, s)
        w = jax.nn.softmax(s, axis=-1)
        outs.append(jnp.einsum("bst,btd->bsd", w, vh))
    return jnp.concatenate(outs, axis=-1) @ wo + bo


def _ref_decoder_block(x, p, num_heads):
    (ln1_g, ln1_b, wq1, bq1, wk1, bk1, wv1, bv1, wo1, bo1,
     ln2_g, ln2_b, wq2, bq2, wk2, bk2, wv2, bv2, wo2, bo2,
     ln3_g, ln3_b, w1, b1, w2, b2) = p
    x = x + _ref_mha(_ref_layernorm(x, ln1_g, ln1_b),
                     wq1, bq1, wk1, bk1, wv1, bv1, wo1, bo1, num_heads)
    x = x + _ref_mha(_ref_layernorm(x, ln2_g, ln2_b),
                     wq2, bq2, wk2, bk2, wv2, bv2, wo2, bo2, num_heads)
    h = _ref_layernorm(x, ln3_g, ln3_b)
    h = h @ w1 + b1
    h = 0.5 * h * (1.0 + lax.erf(h / jnp.sqrt(2.0)))
    h = h @ w2 + b2
    return x + h


# ----------------------------------- main -------------------------------------

def _make_params(key, D, I):
    ks = jax.random.split(key, 32)
    i = iter(range(32))
    nrm = lambda k, s: (0.02 * jax.random.normal(k, s, jnp.float32))

    def linear(kw, kb, din, dout):
        return nrm(kw, (din, dout)), nrm(kb, (1, dout))

    ln1_g = jnp.ones((1, D), jnp.float32); ln1_b = jnp.zeros((1, D), jnp.float32)
    ln2_g = jnp.ones((1, D), jnp.float32); ln2_b = jnp.zeros((1, D), jnp.float32)
    ln3_g = jnp.ones((1, D), jnp.float32); ln3_b = jnp.zeros((1, D), jnp.float32)

    wq1, bq1 = linear(ks[next(i)], ks[next(i)], D, D)
    wk1, bk1 = linear(ks[next(i)], ks[next(i)], D, D)
    wv1, bv1 = linear(ks[next(i)], ks[next(i)], D, D)
    wo1, bo1 = linear(ks[next(i)], ks[next(i)], D, D)
    wq2, bq2 = linear(ks[next(i)], ks[next(i)], D, D)
    wk2, bk2 = linear(ks[next(i)], ks[next(i)], D, D)
    wv2, bv2 = linear(ks[next(i)], ks[next(i)], D, D)
    wo2, bo2 = linear(ks[next(i)], ks[next(i)], D, D)
    w1, b1 = linear(ks[next(i)], ks[next(i)], D, I)
    w2, b2 = linear(ks[next(i)], ks[next(i)], I, D)

    return [ln1_g, ln1_b, wq1, bq1, wk1, bk1, wv1, bv1, wo1, bo1,
            ln2_g, ln2_b, wq2, bq2, wk2, bk2, wv2, bv2, wo2, bo2,
            ln3_g, ln3_b, w1, b1, w2, b2]


if __name__ == "__main__":
    B, S, D = 2, 8, 32          # batch, seq_len, embed_dim
    num_heads = 4               # head_dim = 8
    intermediate = 64           # FeedForward hidden size
    # dropout_p has no effect at eval time (identity).

    key = jax.random.PRNGKey(0)
    kx, kp = jax.random.split(key)
    x = jax.random.normal(kx, (B, S, D), jnp.float32)
    params = _make_params(kp, D, intermediate)

    out = decoder_block(x, params, num_heads)
    out = jax.block_until_ready(out)

    ref = _ref_decoder_block(x, params, num_heads)
    assert out.shape == (B, S, D)
    # Slightly looser than 1e-4 to cover the approximate (EUP) softmax
    # reciprocal; measured error is ~1e-5 at these shapes.
    assert jnp.allclose(out, ref, rtol=5e-4, atol=5e-4), "mismatch vs reference"

    print("KERNEL_OK")
</pallas_src>

<mosaic_0001>
module attributes {stable_mosaic.version = 11 : i64} {
  func.func @decoder_block_kernel(%arg0: i32, %arg1: memref<16x32xf32, #tpu.memory_space<vmem>>, %arg2: memref<1x32xf32, #tpu.memory_space<vmem>>, %arg3: memref<1x32xf32, #tpu.memory_space<vmem>>, %arg4: memref<32x96xf32, #tpu.memory_space<vmem>>, %arg5: memref<1x96xf32, #tpu.memory_space<vmem>>, %arg6: memref<32x32xf32, #tpu.memory_space<vmem>>, %arg7: memref<1x32xf32, #tpu.memory_space<vmem>>, %arg8: memref<1x32xf32, #tpu.memory_space<vmem>>, %arg9: memref<1x32xf32, #tpu.memory_space<vmem>>, %arg10: memref<32x96xf32, #tpu.memory_space<vmem>>, %arg11: memref<1x96xf32, #tpu.memory_space<vmem>>, %arg12: memref<32x32xf32, #tpu.memory_space<vmem>>, %arg13: memref<1x32xf32, #tpu.memory_space<vmem>>, %arg14: memref<1x32xf32, #tpu.memory_space<vmem>>, %arg15: memref<1x32xf32, #tpu.memory_space<vmem>>, %arg16: memref<32x64xf32, #tpu.memory_space<vmem>>, %arg17: memref<1x64xf32, #tpu.memory_space<vmem>>, %arg18: memref<64x32xf32, #tpu.memory_space<vmem>>, %arg19: memref<1x32xf32, #tpu.memory_space<vmem>>, %arg20: memref<16x32xf32, #tpu.memory_space<vmem>>) attributes {dimension_semantics = [#tpu.dimension_semantics<arbitrary>], iteration_bounds = array<i64: 1>, scalar_prefetch = 0 : i64, scratch_operands = 0 : i64, tpu.core_type = #tpu.core_type<tc>, window_params = [{pipeline_mode = #tpu.pipeline_mode<synchronous>, transform_indices = @transform_0, window_bounds = array<i64: 16, 32>}, {pipeline_mode = #tpu.pipeline_mode<synchronous>, transform_indices = @transform_1, window_bounds = array<i64: 1, 32>}, {pipeline_mode = #tpu.pipeline_mode<synchronous>, transform_indices = @transform_2, window_bounds = array<i64: 1, 32>}, {pipeline_mode = #tpu.pipeline_mode<synchronous>, transform_indices = @transform_3, window_bounds = array<i64: 32, 96>}, {pipeline_mode = #tpu.pipeline_mode<synchronous>, transform_indices = @transform_4, window_bounds = array<i64: 1, 96>}, {pipeline_mode = #tpu.pipeline_mode<synchronous>, transform_indices = @transform_5, window_bounds = array<i64: 32, 32>}, {pipeline_mode = #tpu.pipeline_mode<synchronous>, transform_indices = @transform_6, window_bounds = array<i64: 1, 32>}, {pipeline_mode = #tpu.pipeline_mode<synchronous>, transform_indices = @transform_7, window_bounds = array<i64: 1, 32>}, {pipeline_mode = #tpu.pipeline_mode<synchronous>, transform_indices = @transform_8, window_bounds = array<i64: 1, 32>}, {pipeline_mode = #tpu.pipeline_mode<synchronous>, transform_indices = @transform_9, window_bounds = array<i64: 32, 96>}, {pipeline_mode = #tpu.pipeline_mode<synchronous>, transform_indices = @transform_10, window_bounds = array<i64: 1, 96>}, {pipeline_mode = #tpu.pipeline_mode<synchronous>, transform_indices = @transform_11, window_bounds = array<i64: 32, 32>}, {pipeline_mode = #tpu.pipeline_mode<synchronous>, transform_indices = @transform_12, window_bounds = array<i64: 1, 32>}, {pipeline_mode = #tpu.pipeline_mode<synchronous>, transform_indices = @transform_13, window_bounds = array<i64: 1, 32>}, {pipeline_mode = #tpu.pipeline_mode<synchronous>, transform_indices = @transform_14, window_bounds = array<i64: 1, 32>}, {pipeline_mode = #tpu.pipeline_mode<synchronous>, transform_indices = @transform_15, window_bounds = array<i64: 32, 64>}, {pipeline_mode = #tpu.pipeline_mode<synchronous>, transform_indices = @transform_16, window_bounds = array<i64: 1, 64>}, {pipeline_mode = #tpu.pipeline_mode<synchronous>, transform_indices = @transform_17, window_bounds = array<i64: 64, 32>}, {pipeline_mode = #tpu.pipeline_mode<synchronous>, transform_indices = @transform_18, window_bounds = array<i64: 1, 32>}, {pipeline_mode = #tpu.pipeline_mode<synchronous>, transform_indices = @transform_19, window_bounds = array<i64: 16, 32>}]} {
    %c0 = arith.constant 0 : index
    %c0_0 = arith.constant 0 : index
    %0 = vector.load %arg1[%c0, %c0_0] : memref<16x32xf32, #tpu.memory_space<vmem>>, vector<16x32xf32>
    %1 = tpu.iota {dimensions = array<i32: 1>} : vector<1x8x8xi32>
    %2 = tpu.iota {dimensions = array<i32: 2>} : vector<1x8x8xi32>
    %3 = arith.cmpi sge, %1, %2 : vector<1x8x8xi32>
    %cst = arith.constant 0.000000e+00 : f32
    %cst_1 = arith.constant -1.000000e+30 : f32
    %4 = vector.broadcast %cst : f32 to vector<1x8x8xf32>
    %5 = vector.broadcast %cst_1 : f32 to vector<1x8x8xf32>
    %6 = arith.select %3, %4, %5 : vector<1x8x8xi1>, vector<1x8x8xf32>
    %c0_2 = arith.constant 0 : index
    %c0_3 = arith.constant 0 : index
    %7 = vector.load %arg2[%c0_2, %c0_3] : memref<1x32xf32, #tpu.memory_space<vmem>>, vector<1x32xf32>
    %c0_4 = arith.constant 0 : index
    %c0_5 = arith.constant 0 : index
    %8 = vector.load %arg3[%c0_4, %c0_5] : memref<1x32xf32, #tpu.memory_space<vmem>>, vector<1x32xf32>
    %cst_6 = arith.constant dense<0.000000e+00> : vector<16xf32>
    %9 = vector.multi_reduction <add>, %0, %cst_6 [1] : vector<16x32xf32> to vector<16xf32>
    %10 = vector.shape_cast %9 : vector<16xf32> to vector<16x1xf32>
    %cst_7 = arith.constant 3.200000e+01 : f32
    %11 = vector.broadcast %cst_7 : f32 to vector<16x1xf32>
    %12 = arith.divf %10, %11 : vector<16x1xf32>
    %13 = vector.broadcast %12 : vector<16x1xf32> to vector<16x32xf32>
    %14 = arith.subf %0, %13 : vector<16x32xf32>
    %15 = arith.mulf %14, %14 : vector<16x32xf32>
    %cst_8 = arith.constant dense<0.000000e+00> : vector<16xf32>
    %16 = vector.multi_reduction <add>, %15, %cst_8 [1] : vector<16x32xf32> to vector<16xf32>
    %17 = vector.shape_cast %16 : vector<16xf32> to vector<16x1xf32>
    %cst_9 = arith.constant 3.200000e+01 : f32
    %18 = vector.broadcast %cst_9 : f32 to vector<16x1xf32>
    %19 = arith.divf %17, %18 : vector<16x1xf32>
    %20 = vector.broadcast %12 : vector<16x1xf32> to vector<16x32xf32>
    %21 = arith.subf %0, %20 : vector<16x32xf32>
    %cst_10 = arith.constant 9.99999974E-6 : f32
    %22 = vector.broadcast %cst_10 : f32 to vector<16x1xf32>
    %23 = arith.addf %19, %22 : vector<16x1xf32>
    %24 = math.rsqrt %23 : vector<16x1xf32>
    %25 = vector.broadcast %24 : vector<16x1xf32> to vector<16x32xf32>
    %26 = arith.mulf %21, %25 : vector<16x32xf32>
    %27 = vector.broadcast %7 : vector<1x32xf32> to vector<16x32xf32>
    %28 = arith.mulf %26, %27 : vector<16x32xf32>
    %29 = vector.broadcast %8 : vector<1x32xf32> to vector<16x32xf32>
    %30 = arith.addf %28, %29 : vector<16x32xf32>
    %c0_11 = arith.constant 0 : index
    %c0_12 = arith.constant 0 : index
    %31 = vector.load %arg4[%c0_11, %c0_12] : memref<32x96xf32, #tpu.memory_space<vmem>>, vector<32x96xf32>
    %c0_13 = arith.constant 0 : index
    %c0_14 = arith.constant 0 : index
    %32 = vector.load %arg5[%c0_13, %c0_14] : memref<1x96xf32, #tpu.memory_space<vmem>>, vector<1x96xf32>
    %c0_15 = arith.constant 0 : index
    %c0_16 = arith.constant 0 : index
    %33 = vector.load %arg6[%c0_15, %c0_16] : memref<32x32xf32, #tpu.memory_space<vmem>>, vector<32x32xf32>
    %c0_17 = arith.constant 0 : index
    %c0_18 = arith.constant 0 : index
    %34 = vector.load %arg7[%c0_17, %c0_18] : memref<1x32xf32, #tpu.memory_space<vmem>>, vector<1x32xf32>
    %cst_19 = arith.constant dense<0.000000e+00> : vector<16x96xf32>
    %35 = tpu.matmul %30, %31, %cst_19 {dimension_numbers = #tpu.dot_dimension_numbers<[1], [0], [0], [1], [0, 0, 1, 1], [], []>} : vector<16x32xf32>, vector<32x96xf32>, vector<16x96xf32> -> vector<16x96xf32>
    %36 = vector.broadcast %32 : vector<1x96xf32> to vector<16x96xf32>
    %37 = arith.addf %35, %36 : vector<16x96xf32>
    %38 = vector.shape_cast %37 : vector<16x96xf32> to vector<2x8x96xf32>
    %cst_20 = arith.constant 0.000000e+00 : f32
    %39 = vector.broadcast %cst_20 : f32 to vector<16x32xf32>
    %40 = vector.extract_strided_slice %38 {offsets = [0, 0, 0], sizes = [2, 8, 8], strides = [1, 1, 1]} : vector<2x8x96xf32> to vector<2x8x8xf32>
    %cst_21 = arith.constant 0.353553385 : f32
    %41 = vector.broadcast %cst_21 : f32 to vector<2x8x8xf32>
    %42 = arith.mulf %40, %41 : vector<2x8x8xf32>
    %43 = vector.extract_strided_slice %38 {offsets = [0, 0, 32], sizes = [2, 8, 8], strides = [1, 1, 1]} : vector<2x8x96xf32> to vector<2x8x8xf32>
    %44 = vector.extract_strided_slice %38 {offsets = [0, 0, 64], sizes = [2, 8, 8], strides = [1, 1, 1]} : vector<2x8x96xf32> to vector<2x8x8xf32>
    "tpu.trace_start"() <{level = 10 : i32, message = "bqd,bkd->bqk"}> : () -> ()
    %cst_22 = arith.constant dense<0.000000e+00> : vector<2x8x8xf32>
    %45 = tpu.matmul %42, %43, %cst_22 {dimension_numbers = #tpu.dot_dimension_numbers<[2], [2], [1], [1], [0, 0, 0, 1, 1, 1], [0], [0]>} : vector<2x8x8xf32>, vector<2x8x8xf32>, vector<2x8x8xf32> -> vector<2x8x8xf32>
    "tpu.trace_stop"() : () -> ()
    %46 = vector.broadcast %6 : vector<1x8x8xf32> to vector<2x8x8xf32>
    %47 = arith.addf %45, %46 : vector<2x8x8xf32>
    %cst_23 = arith.constant dense<0xFF800000> : vector<2x8xf32>
    %48 = vector.multi_reduction <maximumf>, %47, %cst_23 [2] : vector<2x8x8xf32> to vector<2x8xf32>
    %49 = vector.shape_cast %48 : vector<2x8xf32> to vector<2x8x1xf32>
    %50 = vector.broadcast %49 : vector<2x8x1xf32> to vector<2x8x8xf32>
    %51 = arith.subf %47, %50 : vector<2x8x8xf32>
    %52 = math.exp %51 : vector<2x8x8xf32>
    %cst_24 = arith.constant dense<0.000000e+00> : vector<2x8xf32>
    %53 = vector.multi_reduction <add>, %52, %cst_24 [2] : vector<2x8x8xf32> to vector<2x8xf32>
    %54 = vector.shape_cast %53 : vector<2x8xf32> to vector<2x8x1xf32>
    %55 = tpu.reciprocal %54 {approx = true} : vector<2x8x1xf32> -> vector<2x8x1xf32>
    %56 = vector.broadcast %55 : vector<2x8x1xf32> to vector<2x8x8xf32>
    %57 = arith.mulf %52, %56 : vector<2x8x8xf32>
    "tpu.trace_start"() <{level = 10 : i32, message = "bqk,bkd->bqd"}> : () -> ()
    %cst_25 = arith.constant dense<0.000000e+00> : vector<2x8x8xf32>
    %58 = tpu.matmul %57, %44, %cst_25 {dimension_numbers = #tpu.dot_dimension_numbers<[2], [1], [1], [2], [0, 0, 0, 1, 1, 2], [0], [0]>} : vector<2x8x8xf32>, vector<2x8x8xf32>, vector<2x8x8xf32> -> vector<2x8x8xf32>
    "tpu.trace_stop"() : () -> ()
    %59 = vector.shape_cast %58 : vector<2x8x8xf32> to vector<16x8xf32>
    %60 = vector.extract_strided_slice %33 {offsets = [0, 0], sizes = [8, 32], strides = [1, 1]} : vector<32x32xf32> to vector<8x32xf32>
    %cst_26 = arith.constant dense<0.000000e+00> : vector<16x32xf32>
    %61 = tpu.matmul %59, %60, %cst_26 {dimension_numbers = #tpu.dot_dimension_numbers<[1], [0], [0], [1], [0, 0, 1, 1], [], []>} : vector<16x8xf32>, vector<8x32xf32>, vector<16x32xf32> -> vector<16x32xf32>
    %62 = arith.addf %39, %61 : vector<16x32xf32>
    %63 = vector.extract_strided_slice %38 {offsets = [0, 0, 8], sizes = [2, 8, 8], strides = [1, 1, 1]} : vector<2x8x96xf32> to vector<2x8x8xf32>
    %cst_27 = arith.constant 0.353553385 : f32
    %64 = vector.broadcast %cst_27 : f32 to vector<2x8x8xf32>
    %65 = arith.mulf %63, %64 : vector<2x8x8xf32>
    %66 = vector.extract_strided_slice %38 {offsets = [0, 0, 40], sizes = [2, 8, 8], strides = [1, 1, 1]} : vector<2x8x96xf32> to vector<2x8x8xf32>
    %67 = vector.extract_strided_slice %38 {offsets = [0, 0, 72], sizes = [2, 8, 8], strides = [1, 1, 1]} : vector<2x8x96xf32> to vector<2x8x8xf32>
    "tpu.trace_start"() <{level = 10 : i32, message = "bqd,bkd->bqk"}> : () -> ()
    %cst_28 = arith.constant dense<0.000000e+00> : vector<2x8x8xf32>
    %68 = tpu.matmul %65, %66, %cst_28 {dimension_numbers = #tpu.dot_dimension_numbers<[2], [2], [1], [1], [0, 0, 0, 1, 1, 1], [0], [0]>} : vector<2x8x8xf32>, vector<2x8x8xf32>, vector<2x8x8xf32> -> vector<2x8x8xf32>
    "tpu.trace_stop"() : () -> ()
    %69 = vector.broadcast %6 : vector<1x8x8xf32> to vector<2x8x8xf32>
    %70 = arith.addf %68, %69 : vector<2x8x8xf32>
    %cst_29 = arith.constant dense<0xFF800000> : vector<2x8xf32>
    %71 = vector.multi_reduction <maximumf>, %70, %cst_29 [2] : vector<2x8x8xf32> to vector<2x8xf32>
    %72 = vector.shape_cast %71 : vector<2x8xf32> to vector<2x8x1xf32>
    %73 = vector.broadcast %72 : vector<2x8x1xf32> to vector<2x8x8xf32>
    %74 = arith.subf %70, %73 : vector<2x8x8xf32>
    %75 = math.exp %74 : vector<2x8x8xf32>
    %cst_30 = arith.constant dense<0.000000e+00> : vector<2x8xf32>
    %76 = vector.multi_reduction <add>, %75, %cst_30 [2] : vector<2x8x8xf32> to vector<2x8xf32>
    %77 = vector.shape_cast %76 : vector<2x8xf32> to vector<2x8x1xf32>
    %78 = tpu.reciprocal %77 {approx = true} : vector<2x8x1xf32> -> vector<2x8x1xf32>
    %79 = vector.broadcast %78 : vector<2x8x1xf32> to vector<2x8x8xf32>
    %80 = arith.mulf %75, %79 : vector<2x8x8xf32>
    "tpu.trace_start"() <{level = 10 : i32, message = "bqk,bkd->bqd"}> : () -> ()
    %cst_31 = arith.constant dense<0.000000e+00> : vector<2x8x8xf32>
    %81 = tpu.matmul %80, %67, %cst_31 {dimension_numbers = #tpu.dot_dimension_numbers<[2], [1], [1], [2], [0, 0, 0, 1, 1, 2], [0], [0]>} : vector<2x8x8xf32>, vector<2x8x8xf32>, vector<2x8x8xf32> -> vector<2x8x8xf32>
    "tpu.trace_stop"() : () -> ()
    %82 = vector.shape_cast %81 : vector<2x8x8xf32> to vector<16x8xf32>
    %83 = vector.extract_strided_slice %33 {offsets = [8, 0], sizes = [8, 32], strides = [1, 1]} : vector<32x32xf32> to vector<8x32xf32>
    %cst_32 = arith.constant dense<0.000000e+00> : vector<16x32xf32>
    %84 = tpu.matmul %82, %83, %cst_32 {dimension_numbers = #tpu.dot_dimension_numbers<[1], [0], [0], [1], [0, 0, 1, 1], [], []>} : vector<16x8xf32>, vector<8x32xf32>, vector<16x32xf32> -> vector<16x32xf32>
    %85 = arith.addf %62, %84 : vector<16x32xf32>
    %86 = vector.extract_strided_slice %38 {offsets = [0, 0, 16], sizes = [2, 8, 8], strides = [1, 1, 1]} : vector<2x8x96xf32> to vector<2x8x8xf32>
    %cst_33 = arith.constant 0.353553385 : f32
    %87 = vector.broadcast %cst_33 : f32 to vector<2x8x8xf32>
    %88 = arith.mulf %86, %87 : vector<2x8x8xf32>
    %89 = vector.extract_strided_slice %38 {offsets = [0, 0, 48], sizes = [2, 8, 8], strides = [1, 1, 1]} : vector<2x8x96xf32> to vector<2x8x8xf32>
    %90 = vector.extract_strided_slice %38 {offsets = [0, 0, 80], sizes = [2, 8, 8], strides = [1, 1, 1]} : vector<2x8x96xf32> to vector<2x8x8xf32>
    "tpu.trace_start"() <{level = 10 : i32, message = "bqd,bkd->bqk"}> : () -> ()
    %cst_34 = arith.constant dense<0.000000e+00> : vector<2x8x8xf32>
    %91 = tpu.matmul %88, %89, %cst_34 {dimension_numbers = #tpu.dot_dimension_numbers<[2], [2], [1], [1], [0, 0, 0, 1, 1, 1], [0], [0]>} : vector<2x8x8xf32>, vector<2x8x8xf32>, vector<2x8x8xf32> -> vector<2x8x8xf32>
    "tpu.trace_stop"() : () -> ()
    %92 = vector.broadcast %6 : vector<1x8x8xf32> to vector<2x8x8xf32>
    %93 = arith.addf %91, %92 : vector<2x8x8xf32>
    %cst_35 = arith.constant dense<0xFF800000> : vector<2x8xf32>
    %94 = vector.multi_reduction <maximumf>, %93, %cst_35 [2] : vector<2x8x8xf32> to vector<2x8xf32>
    %95 = vector.shape_cast %94 : vector<2x8xf32> to vector<2x8x1xf32>
    %96 = vector.broadcast %95 : vector<2x8x1xf32> to vector<2x8x8xf32>
    %97 = arith.subf %93, %96 : vector<2x8x8xf32>
    %98 = math.exp %97 : vector<2x8x8xf32>
    %cst_36 = arith.constant dense<0.000000e+00> : vector<2x8xf32>
    %99 = vector.multi_reduction <add>, %98, %cst_36 [2] : vector<2x8x8xf32> to vector<2x8xf32>
    %100 = vector.shape_cast %99 : vector<2x8xf32> to vector<2x8x1xf32>
    %101 = tpu.reciprocal %100 {approx = true} : vector<2x8x1xf32> -> vector<2x8x1xf32>
    %102 = vector.broadcast %101 : vector<2x8x1xf32> to vector<2x8x8xf32>
    %103 = arith.mulf %98, %102 : vector<2x8x8xf32>
    "tpu.trace_start"() <{level = 10 : i32, message = "bqk,bkd->bqd"}> : () -> ()
    %cst_37 = arith.constant dense<0.000000e+00> : vector<2x8x8xf32>
    %104 = tpu.matmul %103, %90, %cst_37 {dimension_numbers = #tpu.dot_dimension_numbers<[2], [1], [1], [2], [0, 0, 0, 1, 1, 2], [0], [0]>} : vector<2x8x8xf32>, vector<2x8x8xf32>, vector<2x8x8xf32> -> vector<2x8x8xf32>
    "tpu.trace_stop"() : () -> ()
    %105 = vector.shape_cast %104 : vector<2x8x8xf32> to vector<16x8xf32>
    %106 = vector.extract_strided_slice %33 {offsets = [16, 0], sizes = [8, 32], strides = [1, 1]} : vector<32x32xf32> to vector<8x32xf32>
    %cst_38 = arith.constant dense<0.000000e+00> : vector<16x32xf32>
    %107 = tpu.matmul %105, %106, %cst_38 {dimension_numbers = #tpu.dot_dimension_numbers<[1], [0], [0], [1], [0, 0, 1, 1], [], []>} : vector<16x8xf32>, vector<8x32xf32>, vector<16x32xf32> -> vector<16x32xf32>
    %108 = arith.addf %85, %107 : vector<16x32xf32>
    %109 = vector.extract_strided_slice %38 {offsets = [0, 0, 24], sizes = [2, 8, 8], strides = [1, 1, 1]} : vector<2x8x96xf32> to vector<2x8x8xf32>
    %cst_39 = arith.constant 0.353553385 : f32
    %110 = vector.broadcast %cst_39 : f32 to vector<2x8x8xf32>
    %111 = arith.mulf %109, %110 : vector<2x8x8xf32>
    %112 = vector.extract_strided_slice %38 {offsets = [0, 0, 56], sizes = [2, 8, 8], strides = [1, 1, 1]} : vector<2x8x96xf32> to vector<2x8x8xf32>
    %113 = vector.extract_strided_slice %38 {offsets = [0, 0, 88], sizes = [2, 8, 8], strides = [1, 1, 1]} : vector<2x8x96xf32> to vector<2x8x8xf32>
    "tpu.trace_start"() <{level = 10 : i32, message = "bqd,bkd->bqk"}> : () -> ()
    %cst_40 = arith.constant dense<0.000000e+00> : vector<2x8x8xf32>
    %114 = tpu.matmul %111, %112, %cst_40 {dimension_numbers = #tpu.dot_dimension_numbers<[2], [2], [1], [1], [0, 0, 0, 1, 1, 1], [0], [0]>} : vector<2x8x8xf32>, vector<2x8x8xf32>, vector<2x8x8xf32> -> vector<2x8x8xf32>
    "tpu.trace_stop"() : () -> ()
    %115 = vector.broadcast %6 : vector<1x8x8xf32> to vector<2x8x8xf32>
    %116 = arith.addf %114, %115 : vector<2x8x8xf32>
    %cst_41 = arith.constant dense<0xFF800000> : vector<2x8xf32>
    %117 = vector.multi_reduction <maximumf>, %116, %cst_41 [2] : vector<2x8x8xf32> to vector<2x8xf32>
    %118 = vector.shape_cast %117 : vector<2x8xf32> to vector<2x8x1xf32>
    %119 = vector.broadcast %118 : vector<2x8x1xf32> to vector<2x8x8xf32>
    %120 = arith.subf %116, %119 : vector<2x8x8xf32>
    %121 = math.exp %120 : vector<2x8x8xf32>
    %cst_42 = arith.constant dense<0.000000e+00> : vector<2x8xf32>
    %122 = vector.multi_reduction <add>, %121, %cst_42 [2] : vector<2x8x8xf32> to vector<2x8xf32>
    %123 = vector.shape_cast %122 : vector<2x8xf32> to vector<2x8x1xf32>
    %124 = tpu.reciprocal %123 {approx = true} : vector<2x8x1xf32> -> vector<2x8x1xf32>
    %125 = vector.broadcast %124 : vector<2x8x1xf32> to vector<2x8x8xf32>
    %126 = arith.mulf %121, %125 : vector<2x8x8xf32>
    "tpu.trace_start"() <{level = 10 : i32, message = "bqk,bkd->bqd"}> : () -> ()
    %cst_43 = arith.constant dense<0.000000e+00> : vector<2x8x8xf32>
    %127 = tpu.matmul %126, %113, %cst_43 {dimension_numbers = #tpu.dot_dimension_numbers<[2], [1], [1], [2], [0, 0, 0, 1, 1, 2], [0], [0]>} : vector<2x8x8xf32>, vector<2x8x8xf32>, vector<2x8x8xf32> -> vector<2x8x8xf32>
    "tpu.trace_stop"() : () -> ()
    %128 = vector.shape_cast %127 : vector<2x8x8xf32> to vector<16x8xf32>
    %129 = vector.extract_strided_slice %33 {offsets = [24, 0], sizes = [8, 32], strides = [1, 1]} : vector<32x32xf32> to vector<8x32xf32>
    %cst_44 = arith.constant dense<0.000000e+00> : vector<16x32xf32>
    %130 = tpu.matmul %128, %129, %cst_44 {dimension_numbers = #tpu.dot_dimension_numbers<[1], [0], [0], [1], [0, 0, 1, 1], [], []>} : vector<16x8xf32>, vector<8x32xf32>, vector<16x32xf32> -> vector<16x32xf32>
    %131 = arith.addf %108, %130 : vector<16x32xf32>
    %132 = vector.broadcast %34 : vector<1x32xf32> to vector<16x32xf32>
    %133 = arith.addf %131, %132 : vector<16x32xf32>
    %134 = arith.addf %0, %133 : vector<16x32xf32>
    %c0_45 = arith.constant 0 : index
    %c0_46 = arith.constant 0 : index
    %135 = vector.load %arg8[%c0_45, %c0_46] : memref<1x32xf32, #tpu.memory_space<vmem>>, vector<1x32xf32>
    %c0_47 = arith.constant 0 : index
    %c0_48 = arith.constant 0 : index
    %136 = vector.load %arg9[%c0_47, %c0_48] : memref<1x32xf32, #tpu.memory_space<vmem>>, vector<1x32xf32>
    %cst_49 = arith.constant dense<0.000000e+00> : vector<16xf32>
    %137 = vector.multi_reduction <add>, %134, %cst_49 [1] : vector<16x32xf32> to vector<16xf32>
    %138 = vector.shape_cast %137 : vector<16xf32> to vector<16x1xf32>
    %cst_50 = arith.constant 3.200000e+01 : f32
    %139 = vector.broadcast %cst_50 : f32 to vector<16x1xf32>
    %140 = arith.divf %138, %139 : vector<16x1xf32>
    %141 = vector.broadcast %140 : vector<16x1xf32> to vector<16x32xf32>
    %142 = arith.subf %134, %141 : vector<16x32xf32>
    %143 = arith.mulf %142, %142 : vector<16x32xf32>
    %cst_51 = arith.constant dense<0.000000e+00> : vector<16xf32>
    %144 = vector.multi_reduction <add>, %143, %cst_51 [1] : vector<16x32xf32> to vector<16xf32>
    %145 = vector.shape_cast %144 : vector<16xf32> to vector<16x1xf32>
    %cst_52 = arith.constant 3.200000e+01 : f32
    %146 = vector.broadcast %cst_52 : f32 to vector<16x1xf32>
    %147 = arith.divf %145, %146 : vector<16x1xf32>
    %148 = vector.broadcast %140 : vector<16x1xf32> to vector<16x32xf32>
    %149 = arith.subf %134, %148 : vector<16x32xf32>
    %cst_53 = arith.constant 9.99999974E-6 : f32
    %150 = vector.broadcast %cst_53 : f32 to vector<16x1xf32>
    %151 = arith.addf %147, %150 : vector<16x1xf32>
    %152 = math.rsqrt %151 : vector<16x1xf32>
    %153 = vector.broadcast %152 : vector<16x1xf32> to vector<16x32xf32>
    %154 = arith.mulf %149, %153 : vector<16x32xf32>
    %155 = vector.broadcast %135 : vector<1x32xf32> to vector<16x32xf32>
    %156 = arith.mulf %154, %155 : vector<16x32xf32>
    %157 = vector.broadcast %136 : vector<1x32xf32> to vector<16x32xf32>
    %158 = arith.addf %156, %157 : vector<16x32xf32>
    %c0_54 = arith.constant 0 : index
    %c0_55 = arith.constant 0 : index
    %159 = vector.load %arg10[%c0_54, %c0_55] : memref<32x96xf32, #tpu.memory_space<vmem>>, vector<32x96xf32>
    %c0_56 = arith.constant 0 : index
    %c0_57 = arith.constant 0 : index
    %160 = vector.load %arg11[%c0_56, %c0_57] : memref<1x96xf32, #tpu.memory_space<vmem>>, vector<1x96xf32>
    %c0_58 = arith.constant 0 : index
    %c0_59 = arith.constant 0 : index
    %161 = vector.load %arg12[%c0_58, %c0_59] : memref<32x32xf32, #tpu.memory_space<vmem>>, vector<32x32xf32>
    %c0_60 = arith.constant 0 : index
    %c0_61 = arith.constant 0 : index
    %162 = vector.load %arg13[%c0_60, %c0_61] : memref<1x32xf32, #tpu.memory_space<vmem>>, vector<1x32xf32>
    %cst_62 = arith.constant dense<0.000000e+00> : vector<16x96xf32>
    %163 = tpu.matmul %158, %159, %cst_62 {dimension_numbers = #tpu.dot_dimension_numbers<[1], [0], [0], [1], [0, 0, 1, 1], [], []>} : vector<16x32xf32>, vector<32x96xf32>, vector<16x96xf32> -> vector<16x96xf32>
    %164 = vector.broadcast %160 : vector<1x96xf32> to vector<16x96xf32>
    %165 = arith.addf %163, %164 : vector<16x96xf32>
    %166 = vector.shape_cast %165 : vector<16x96xf32> to vector<2x8x96xf32>
    %cst_63 = arith.constant 0.000000e+00 : f32
    %167 = vector.broadcast %cst_63 : f32 to vector<16x32xf32>
    %168 = vector.extract_strided_slice %166 {offsets = [0, 0, 0], sizes = [2, 8, 8], strides = [1, 1, 1]} : vector<2x8x96xf32> to vector<2x8x8xf32>
    %cst_64 = arith.constant 0.353553385 : f32
    %169 = vector.broadcast %cst_64 : f32 to vector<2x8x8xf32>
    %170 = arith.mulf %168, %169 : vector<2x8x8xf32>
    %171 = vector.extract_strided_slice %166 {offsets = [0, 0, 32], sizes = [2, 8, 8], strides = [1, 1, 1]} : vector<2x8x96xf32> to vector<2x8x8xf32>
    %172 = vector.extract_strided_slice %166 {offsets = [0, 0, 64], sizes = [2, 8, 8], strides = [1, 1, 1]} : vector<2x8x96xf32> to vector<2x8x8xf32>
    "tpu.trace_start"() <{level = 10 : i32, message = "bqd,bkd->bqk"}> : () -> ()
    %cst_65 = arith.constant dense<0.000000e+00> : vector<2x8x8xf32>
    %173 = tpu.matmul %170, %171, %cst_65 {dimension_numbers = #tpu.dot_dimension_numbers<[2], [2], [1], [1], [0, 0, 0, 1, 1, 1], [0], [0]>} : vector<2x8x8xf32>, vector<2x8x8xf32>, vector<2x8x8xf32> -> vector<2x8x8xf32>
    "tpu.trace_stop"() : () -> ()
    %174 = vector.broadcast %6 : vector<1x8x8xf32> to vector<2x8x8xf32>
    %175 = arith.addf %173, %174 : vector<2x8x8xf32>
    %cst_66 = arith.constant dense<0xFF800000> : vector<2x8xf32>
    %176 = vector.multi_reduction <maximumf>, %175, %cst_66 [2] : vector<2x8x8xf32> to vector<2x8xf32>
    %177 = vector.shape_cast %176 : vector<2x8xf32> to vector<2x8x1xf32>
    %178 = vector.broadcast %177 : vector<2x8x1xf32> to vector<2x8x8xf32>
    %179 = arith.subf %175, %178 : vector<2x8x8xf32>
    %180 = math.exp %179 : vector<2x8x8xf32>
    %cst_67 = arith.constant dense<0.000000e+00> : vector<2x8xf32>
    %181 = vector.multi_reduction <add>, %180, %cst_67 [2] : vector<2x8x8xf32> to vector<2x8xf32>
    %182 = vector.shape_cast %181 : vector<2x8xf32> to vector<2x8x1xf32>
    %183 = tpu.reciprocal %182 {approx = true} : vector<2x8x1xf32> -> vector<2x8x1xf32>
    %184 = vector.broadcast %183 : vector<2x8x1xf32> to vector<2x8x8xf32>
    %185 = arith.mulf %180, %184 : vector<2x8x8xf32>
    "tpu.trace_start"() <{level = 10 : i32, message = "bqk,bkd->bqd"}> : () -> ()
    %cst_68 = arith.constant dense<0.000000e+00> : vector<2x8x8xf32>
    %186 = tpu.matmul %185, %172, %cst_68 {dimension_numbers = #tpu.dot_dimension_numbers<[2], [1], [1], [2], [0, 0, 0, 1, 1, 2], [0], [0]>} : vector<2x8x8xf32>, vector<2x8x8xf32>, vector<2x8x8xf32> -> vector<2x8x8xf32>
    "tpu.trace_stop"() : () -> ()
    %187 = vector.shape_cast %186 : vector<2x8x8xf32> to vector<16x8xf32>
    %188 = vector.extract_strided_slice %161 {offsets = [0, 0], sizes = [8, 32], strides = [1, 1]} : vector<32x32xf32> to vector<8x32xf32>
    %cst_69 = arith.constant dense<0.000000e+00> : vector<16x32xf32>
    %189 = tpu.matmul %187, %188, %cst_69 {dimension_numbers = #tpu.dot_dimension_numbers<[1], [0], [0], [1], [0, 0, 1, 1], [], []>} : vector<16x8xf32>, vector<8x32xf32>, vector<16x32xf32> -> vector<16x32xf32>
    %190 = arith.addf %167, %189 : vector<16x32xf32>
    %191 = vector.extract_strided_slice %166 {offsets = [0, 0, 8], sizes = [2, 8, 8], strides = [1, 1, 1]} : vector<2x8x96xf32> to vector<2x8x8xf32>
    %cst_70 = arith.constant 0.353553385 : f32
    %192 = vector.broadcast %cst_70 : f32 to vector<2x8x8xf32>
    %193 = arith.mulf %191, %192 : vector<2x8x8xf32>
    %194 = vector.extract_strided_slice %166 {offsets = [0, 0, 40], sizes = [2, 8, 8], strides = [1, 1, 1]} : vector<2x8x96xf32> to vector<2x8x8xf32>
    %195 = vector.extract_strided_slice %166 {offsets = [0, 0, 72], sizes = [2, 8, 8], strides = [1, 1, 1]} : vector<2x8x96xf32> to vector<2x8x8xf32>
    "tpu.trace_start"() <{level = 10 : i32, message = "bqd,bkd->bqk"}> : () -> ()
    %cst_71 = arith.constant dense<0.000000e+00> : vector<2x8x8xf32>
    %196 = tpu.matmul %193, %194, %cst_71 {dimension_numbers = #tpu.dot_dimension_numbers<[2], [2], [1], [1], [0, 0, 0, 1, 1, 1], [0], [0]>} : vector<2x8x8xf32>, vector<2x8x8xf32>, vector<2x8x8xf32> -> vector<2x8x8xf32>
    "tpu.trace_stop"() : () -> ()
    %197 = vector.broadcast %6 : vector<1x8x8xf32> to vector<2x8x8xf32>
    %198 = arith.addf %196, %197 : vector<2x8x8xf32>
    %cst_72 = arith.constant dense<0xFF800000> : vector<2x8xf32>
    %199 = vector.multi_reduction <maximumf>, %198, %cst_72 [2] : vector<2x8x8xf32> to vector<2x8xf32>
    %200 = vector.shape_cast %199 : vector<2x8xf32> to vector<2x8x1xf32>
    %201 = vector.broadcast %200 : vector<2x8x1xf32> to vector<2x8x8xf32>
    %202 = arith.subf %198, %201 : vector<2x8x8xf32>
    %203 = math.exp %202 : vector<2x8x8xf32>
    %cst_73 = arith.constant dense<0.000000e+00> : vector<2x8xf32>
    %204 = vector.multi_reduction <add>, %203, %cst_73 [2] : vector<2x8x8xf32> to vector<2x8xf32>
    %205 = vector.shape_cast %204 : vector<2x8xf32> to vector<2x8x1xf32>
    %206 = tpu.reciprocal %205 {approx = true} : vector<2x8x1xf32> -> vector<2x8x1xf32>
    %207 = vector.broadcast %206 : vector<2x8x1xf32> to vector<2x8x8xf32>
    %208 = arith.mulf %203, %207 : vector<2x8x8xf32>
    "tpu.trace_start"() <{level = 10 : i32, message = "bqk,bkd->bqd"}> : () -> ()
    %cst_74 = arith.constant dense<0.000000e+00> : vector<2x8x8xf32>
    %209 = tpu.matmul %208, %195, %cst_74 {dimension_numbers = #tpu.dot_dimension_numbers<[2], [1], [1], [2], [0, 0, 0, 1, 1, 2], [0], [0]>} : vector<2x8x8xf32>, vector<2x8x8xf32>, vector<2x8x8xf32> -> vector<2x8x8xf32>
    "tpu.trace_stop"() : () -> ()
    %210 = vector.shape_cast %209 : vector<2x8x8xf32> to vector<16x8xf32>
    %211 = vector.extract_strided_slice %161 {offsets = [8, 0], sizes = [8, 32], strides = [1, 1]} : vector<32x32xf32> to vector<8x32xf32>
    %cst_75 = arith.constant dense<0.000000e+00> : vector<16x32xf32>
    %212 = tpu.matmul %210, %211, %cst_75 {dimension_numbers = #tpu.dot_dimension_numbers<[1], [0], [0], [1], [0, 0, 1, 1], [], []>} : vector<16x8xf32>, vector<8x32xf32>, vector<16x32xf32> -> vector<16x32xf32>
    %213 = arith.addf %190, %212 : vector<16x32xf32>
    %214 = vector.extract_strided_slice %166 {offsets = [0, 0, 16], sizes = [2, 8, 8], strides = [1, 1, 1]} : vector<2x8x96xf32> to vector<2x8x8xf32>
    %cst_76 = arith.constant 0.353553385 : f32
    %215 = vector.broadcast %cst_76 : f32 to vector<2x8x8xf32>
    %216 = arith.mulf %214, %215 : vector<2x8x8xf32>
    %217 = vector.extract_strided_slice %166 {offsets = [0, 0, 48], sizes = [2, 8, 8], strides = [1, 1, 1]} : vector<2x8x96xf32> to vector<2x8x8xf32>
    %218 = vector.extract_strided_slice %166 {offsets = [0, 0, 80], sizes = [2, 8, 8], strides = [1, 1, 1]} : vector<2x8x96xf32> to vector<2x8x8xf32>
    "tpu.trace_start"() <{level = 10 : i32, message = "bqd,bkd->bqk"}> : () -> ()
    %cst_77 = arith.constant dense<0.000000e+00> : vector<2x8x8xf32>
    %219 = tpu.matmul %216, %217, %cst_77 {dimension_numbers = #tpu.dot_dimension_numbers<[2], [2], [1], [1], [0, 0, 0, 1, 1, 1], [0], [0]>} : vector<2x8x8xf32>, vector<2x8x8xf32>, vector<2x8x8xf32> -> vector<2x8x8xf32>
    "tpu.trace_stop"() : () -> ()
    %220 = vector.broadcast %6 : vector<1x8x8xf32> to vector<2x8x8xf32>
    %221 = arith.addf %219, %220 : vector<2x8x8xf32>
    %cst_78 = arith.constant dense<0xFF800000> : vector<2x8xf32>
    %222 = vector.multi_reduction <maximumf>, %221, %cst_78 [2] : vector<2x8x8xf32> to vector<2x8xf32>
    %223 = vector.shape_cast %222 : vector<2x8xf32> to vector<2x8x1xf32>
    %224 = vector.broadcast %223 : vector<2x8x1xf32> to vector<2x8x8xf32>
    %225 = arith.subf %221, %224 : vector<2x8x8xf32>
    %226 = math.exp %225 : vector<2x8x8xf32>
    %cst_79 = arith.constant dense<0.000000e+00> : vector<2x8xf32>
    %227 = vector.multi_reduction <add>, %226, %cst_79 [2] : vector<2x8x8xf32> to vector<2x8xf32>
    %228 = vector.shape_cast %227 : vector<2x8xf32> to vector<2x8x1xf32>
    %229 = tpu.reciprocal %228 {approx = true} : vector<2x8x1xf32> -> vector<2x8x1xf32>
    %230 = vector.broadcast %229 : vector<2x8x1xf32> to vector<2x8x8xf32>
    %231 = arith.mulf %226, %230 : vector<2x8x8xf32>
    "tpu.trace_start"() <{level = 10 : i32, message = "bqk,bkd->bqd"}> : () -> ()
    %cst_80 = arith.constant dense<0.000000e+00> : vector<2x8x8xf32>
    %232 = tpu.matmul %231, %218, %cst_80 {dimension_numbers = #tpu.dot_dimension_numbers<[2], [1], [1], [2], [0, 0, 0, 1, 1, 2], [0], [0]>} : vector<2x8x8xf32>, vector<2x8x8xf32>, vector<2x8x8xf32> -> vector<2x8x8xf32>
    "tpu.trace_stop"() : () -> ()
    %233 = vector.shape_cast %232 : vector<2x8x8xf32> to vector<16x8xf32>
    %234 = vector.extract_strided_slice %161 {offsets = [16, 0], sizes = [8, 32], strides = [1, 1]} : vector<32x32xf32> to vector<8x32xf32>
    %cst_81 = arith.constant dense<0.000000e+00> : vector<16x32xf32>
    %235 = tpu.matmul %233, %234, %cst_81 {dimension_numbers = #tpu.dot_dimension_numbers<[1], [0], [0], [1], [0, 0, 1, 1], [], []>} : vector<16x8xf32>, vector<8x32xf32>, vector<16x32xf32> -> vector<16x32xf32>
    %236 = arith.addf %213, %235 : vector<16x32xf32>
    %237 = vector.extract_strided_slice %166 {offsets = [0, 0, 24], sizes = [2, 8, 8], strides = [1, 1, 1]} : vector<2x8x96xf32> to vector<2x8x8xf32>
    %cst_82 = arith.constant 0.353553385 : f32
    %238 = vector.broadcast %cst_82 : f32 to vector<2x8x8xf32>
    %239 = arith.mulf %237, %238 : vector<2x8x8xf32>
    %240 = vector.extract_strided_slice %166 {offsets = [0, 0, 56], sizes = [2, 8, 8], strides = [1, 1, 1]} : vector<2x8x96xf32> to vector<2x8x8xf32>
    %241 = vector.extract_strided_slice %166 {offsets = [0, 0, 88], sizes = [2, 8, 8], strides = [1, 1, 1]} : vector<2x8x96xf32> to vector<2x8x8xf32>
    "tpu.trace_start"() <{level = 10 : i32, message = "bqd,bkd->bqk"}> : () -> ()
    %cst_83 = arith.constant dense<0.000000e+00> : vector<2x8x8xf32>
    %242 = tpu.matmul %239, %240, %cst_83 {dimension_numbers = #tpu.dot_dimension_numbers<[2], [2], [1], [1], [0, 0, 0, 1, 1, 1], [0], [0]>} : vector<2x8x8xf32>, vector<2x8x8xf32>, vector<2x8x8xf32> -> vector<2x8x8xf32>
    "tpu.trace_stop"() : () -> ()
    %243 = vector.broadcast %6 : vector<1x8x8xf32> to vector<2x8x8xf32>
    %244 = arith.addf %242, %243 : vector<2x8x8xf32>
    %cst_84 = arith.constant dense<0xFF800000> : vector<2x8xf32>
    %245 = vector.multi_reduction <maximumf>, %244, %cst_84 [2] : vector<2x8x8xf32> to vector<2x8xf32>
    %246 = vector.shape_cast %245 : vector<2x8xf32> to vector<2x8x1xf32>
    %247 = vector.broadcast %246 : vector<2x8x1xf32> to vector<2x8x8xf32>
    %248 = arith.subf %244, %247 : vector<2x8x8xf32>
    %249 = math.exp %248 : vector<2x8x8xf32>
    %cst_85 = arith.constant dense<0.000000e+00> : vector<2x8xf32>
    %250 = vector.multi_reduction <add>, %249, %cst_85 [2] : vector<2x8x8xf32> to vector<2x8xf32>
    %251 = vector.shape_cast %250 : vector<2x8xf32> to vector<2x8x1xf32>
    %252 = tpu.reciprocal %251 {approx = true} : vector<2x8x1xf32> -> vector<2x8x1xf32>
    %253 = vector.broadcast %252 : vector<2x8x1xf32> to vector<2x8x8xf32>
    %254 = arith.mulf %249, %253 : vector<2x8x8xf32>
    "tpu.trace_start"() <{level = 10 : i32, message = "bqk,bkd->bqd"}> : () -> ()
    %cst_86 = arith.constant dense<0.000000e+00> : vector<2x8x8xf32>
    %255 = tpu.matmul %254, %241, %cst_86 {dimension_numbers = #tpu.dot_dimension_numbers<[2], [1], [1], [2], [0, 0, 0, 1, 1, 2], [0], [0]>} : vector<2x8x8xf32>, vector<2x8x8xf32>, vector<2x8x8xf32> -> vector<2x8x8xf32>
    "tpu.trace_stop"() : () -> ()
    %256 = vector.shape_cast %255 : vector<2x8x8xf32> to vector<16x8xf32>
    %257 = vector.extract_strided_slice %161 {offsets = [24, 0], sizes = [8, 32], strides = [1, 1]} : vector<32x32xf32> to vector<8x32xf32>
    %cst_87 = arith.constant dense<0.000000e+00> : vector<16x32xf32>
    %258 = tpu.matmul %256, %257, %cst_87 {dimension_numbers = #tpu.dot_dimension_numbers<[1], [0], [0], [1], [0, 0, 1, 1], [], []>} : vector<16x8xf32>, vector<8x32xf32>, vector<16x32xf32> -> vector<16x32xf32>
    %259 = arith.addf %236, %258 : vector<16x32xf32>
    %260 = vector.broadcast %162 : vector<1x32xf32> to vector<16x32xf32>
    %261 = arith.addf %259, %260 : vector<16x32xf32>
    %262 = arith.addf %134, %261 : vector<16x32xf32>
    %c0_88 = arith.constant 0 : index
    %c0_89 = arith.constant 0 : index
    %263 = vector.load %arg14[%c0_88, %c0_89] : memref<1x32xf32, #tpu.memory_space<vmem>>, vector<1x32xf32>
    %c0_90 = arith.constant 0 : index
    %c0_91 = arith.constant 0 : index
    %264 = vector.load %arg15[%c0_90, %c0_91] : memref<1x32xf32, #tpu.memory_space<vmem>>, vector<1x32xf32>
    %cst_92 = arith.constant dense<0.000000e+00> : vector<16xf32>
    %265 = vector.multi_reduction <add>, %262, %cst_92 [1] : vector<16x32xf32> to vector<16xf32>
    %266 = vector.shape_cast %265 : vector<16xf32> to vector<16x1xf32>
    %cst_93 = arith.constant 3.200000e+01 : f32
    %267 = vector.broadcast %cst_93 : f32 to vector<16x1xf32>
    %268 = arith.divf %266, %267 : vector<16x1xf32>
    %269 = vector.broadcast %268 : vector<16x1xf32> to vector<16x32xf32>
    %270 = arith.subf %262, %269 : vector<16x32xf32>
    %271 = arith.mulf %270, %270 : vector<16x32xf32>
    %cst_94 = arith.constant dense<0.000000e+00> : vector<16xf32>
    %272 = vector.multi_reduction <add>, %271, %cst_94 [1] : vector<16x32xf32> to vector<16xf32>
    %273 = vector.shape_cast %272 : vector<16xf32> to vector<16x1xf32>
    %cst_95 = arith.constant 3.200000e+01 : f32
    %274 = vector.broadcast %cst_95 : f32 to vector<16x1xf32>
    %275 = arith.divf %273, %274 : vector<16x1xf32>
    %276 = vector.broadcast %268 : vector<16x1xf32> to vector<16x32xf32>
    %277 = arith.subf %262, %276 : vector<16x32xf32>
    %cst_96 = arith.constant 9.99999974E-6 : f32
    %278 = vector.broadcast %cst_96 : f32 to vector<16x1xf32>
    %279 = arith.addf %275, %278 : vector<16x1xf32>
    %280 = math.rsqrt %279 : vector<16x1xf32>
    %281 = vector.broadcast %280 : vector<16x1xf32> to vector<16x32xf32>
    %282 = arith.mulf %277, %281 : vector<16x32xf32>
    %283 = vector.broadcast %263 : vector<1x32xf32> to vector<16x32xf32>
    %284 = arith.mulf %282, %283 : vector<16x32xf32>
    %285 = vector.broadcast %264 : vector<1x32xf32> to vector<16x32xf32>
    %286 = arith.addf %284, %285 : vector<16x32xf32>
    %c0_97 = arith.constant 0 : index
    %c0_98 = arith.constant 0 : index
    %287 = vector.load %arg16[%c0_97, %c0_98] : memref<32x64xf32, #tpu.memory_space<vmem>>, vector<32x64xf32>
    %cst_99 = arith.constant dense<0.000000e+00> : vector<16x64xf32>
    %288 = tpu.matmul %286, %287, %cst_99 {dimension_numbers = #tpu.dot_dimension_numbers<[1], [0], [0], [1], [0, 0, 1, 1], [], []>} : vector<16x32xf32>, vector<32x64xf32>, vector<16x64xf32> -> vector<16x64xf32>
    %c0_100 = arith.constant 0 : index
    %c0_101 = arith.constant 0 : index
    %289 = vector.load %arg17[%c0_100, %c0_101] : memref<1x64xf32, #tpu.memory_space<vmem>>, vector<1x64xf32>
    %290 = vector.broadcast %289 : vector<1x64xf32> to vector<16x64xf32>
    %291 = arith.addf %288, %290 : vector<16x64xf32>
    %cst_102 = arith.constant 5.000000e-01 : f32
    %292 = vector.broadcast %cst_102 : f32 to vector<16x64xf32>
    %293 = arith.mulf %292, %291 : vector<16x64xf32>
    %cst_103 = arith.constant 2.000000e+00 : f32
    %294 = math.sqrt %cst_103 : f32
    %295 = vector.broadcast %294 : f32 to vector<16x64xf32>
    %296 = arith.divf %291, %295 : vector<16x64xf32>
    %297 = math.erf %296 : vector<16x64xf32>
    %cst_104 = arith.constant 1.000000e+00 : f32
    %298 = vector.broadcast %cst_104 : f32 to vector<16x64xf32>
    %299 = arith.addf %298, %297 : vector<16x64xf32>
    %300 = arith.mulf %293, %299 : vector<16x64xf32>
    %c0_105 = arith.constant 0 : index
    %c0_106 = arith.constant 0 : index
    %301 = vector.load %arg18[%c0_105, %c0_106] : memref<64x32xf32, #tpu.memory_space<vmem>>, vector<64x32xf32>
    %cst_107 = arith.constant dense<0.000000e+00> : vector<16x32xf32>
    %302 = tpu.matmul %300, %301, %cst_107 {dimension_numbers = #tpu.dot_dimension_numbers<[1], [0], [0], [1], [0, 0, 1, 1], [], []>} : vector<16x64xf32>, vector<64x32xf32>, vector<16x32xf32> -> vector<16x32xf32>
    %c0_108 = arith.constant 0 : index
    %c0_109 = arith.constant 0 : index
    %303 = vector.load %arg19[%c0_108, %c0_109] : memref<1x32xf32, #tpu.memory_space<vmem>>, vector<1x32xf32>
    %304 = vector.broadcast %303 : vector<1x32xf32> to vector<16x32xf32>
    %305 = arith.addf %302, %304 : vector<16x32xf32>
    %306 = arith.addf %262, %305 : vector<16x32xf32>
    %c0_110 = arith.constant 0 : index
    %c0_111 = arith.constant 0 : index
    %307 = vector.load %arg20[%c0_110, %c0_111] : memref<16x32xf32, #tpu.memory_space<vmem>>, vector<16x32xf32>
    tpu.vector_store %arg20[%c0_110, %c0_111], %306 {strides = array<i32>} : memref<16x32xf32, #tpu.memory_space<vmem>>, vector<16x32xf32>,
    return
  }
  func.func @transform_0(%arg0: i32) -> (i32, i32) {
    %c0_i32 = arith.constant 0 : i32
    %c0_i32_0 = arith.constant 0 : i32
    %c0_i32_1 = arith.constant 0 : i32
    return %c0_i32, %c0_i32_0 : i32, i32
  }
  func.func @transform_1(%arg0: i32) -> (i32, i32) {
    %c0_i32 = arith.constant 0 : i32
    %c0_i32_0 = arith.constant 0 : i32
    %c0_i32_1 = arith.constant 0 : i32
    return %c0_i32, %c0_i32_0 : i32, i32
  }
  func.func @transform_2(%arg0: i32) -> (i32, i32) {
    %c0_i32 = arith.constant 0 : i32
    %c0_i32_0 = arith.constant 0 : i32
    %c0_i32_1 = arith.constant 0 : i32
    return %c0_i32, %c0_i32_0 : i32, i32
  }
  func.func @transform_3(%arg0: i32) -> (i32, i32) {
    %c0_i32 = arith.constant 0 : i32
    %c0_i32_0 = arith.constant 0 : i32
    %c0_i32_1 = arith.constant 0 : i32
    return %c0_i32, %c0_i32_0 : i32, i32
  }
  func.func @transform_4(%arg0: i32) -> (i32, i32) {
    %c0_i32 = arith.constant 0 : i32
    %c0_i32_0 = arith.constant 0 : i32
    %c0_i32_1 = arith.constant 0 : i32
    return %c0_i32, %c0_i32_0 : i32, i32
  }
  func.func @transform_5(%arg0: i32) -> (i32, i32) {
    %c0_i32 = arith.constant 0 : i32
    %c0_i32_0 = arith.constant 0 : i32
    %c0_i32_1 = arith.constant 0 : i32
    return %c0_i32, %c0_i32_0 : i32, i32
  }
  func.func @transform_6(%arg0: i32) -> (i32, i32) {
    %c0_i32 = arith.constant 0 : i32
    %c0_i32_0 = arith.constant 0 : i32
    %c0_i32_1 = arith.constant 0 : i32
    return %c0_i32, %c0_i32_0 : i32, i32
  }
  func.func @transform_7(%arg0: i32) -> (i32, i32) {
    %c0_i32 = arith.constant 0 : i32
    %c0_i32_0 = arith.constant 0 : i32
    %c0_i32_1 = arith.constant 0 : i32
    return %c0_i32, %c0_i32_0 : i32, i32
  }
  func.func @transform_8(%arg0: i32) -> (i32, i32) {
    %c0_i32 = arith.constant 0 : i32
    %c0_i32_0 = arith.constant 0 : i32
    %c0_i32_1 = arith.constant 0 : i32
    return %c0_i32, %c0_i32_0 : i32, i32
  }
  func.func @transform_9(%arg0: i32) -> (i32, i32) {
    %c0_i32 = arith.constant 0 : i32
    %c0_i32_0 = arith.constant 0 : i32
    %c0_i32_1 = arith.constant 0 : i32
    return %c0_i32, %c0_i32_0 : i32, i32
  }
  func.func @transform_10(%arg0: i32) -> (i32, i32) {
    %c0_i32 = arith.constant 0 : i32
    %c0_i32_0 = arith.constant 0 : i32
    %c0_i32_1 = arith.constant 0 : i32
    return %c0_i32, %c0_i32_0 : i32, i32
  }
  func.func @transform_11(%arg0: i32) -> (i32, i32) {
    %c0_i32 = arith.constant 0 : i32
    %c0_i32_0 = arith.constant 0 : i32
    %c0_i32_1 = arith.constant 0 : i32
    return %c0_i32, %c0_i32_0 : i32, i32
  }
  func.func @transform_12(%arg0: i32) -> (i32, i32) {
    %c0_i32 = arith.constant 0 : i32
    %c0_i32_0 = arith.constant 0 : i32
    %c0_i32_1 = arith.constant 0 : i32
    return %c0_i32, %c0_i32_0 : i32, i32
  }
  func.func @transform_13(%arg0: i32) -> (i32, i32) {
    %c0_i32 = arith.constant 0 : i32
    %c0_i32_0 = arith.constant 0 : i32
    %c0_i32_1 = arith.constant 0 : i32
    return %c0_i32, %c0_i32_0 : i32, i32
  }
  func.func @transform_14(%arg0: i32) -> (i32, i32) {
    %c0_i32 = arith.constant 0 : i32
    %c0_i32_0 = arith.constant 0 : i32
    %c0_i32_1 = arith.constant 0 : i32
    return %c0_i32, %c0_i32_0 : i32, i32
  }
  func.func @transform_15(%arg0: i32) -> (i32, i32) {
    %c0_i32 = arith.constant 0 : i32
    %c0_i32_0 = arith.constant 0 : i32
    %c0_i32_1 = arith.constant 0 : i32
    return %c0_i32, %c0_i32_0 : i32, i32
  }
  func.func @transform_16(%arg0: i32) -> (i32, i32) {
    %c0_i32 = arith.constant 0 : i32
    %c0_i32_0 = arith.constant 0 : i32
    %c0_i32_1 = arith.constant 0 : i32
    return %c0_i32, %c0_i32_0 : i32, i32
  }
  func.func @transform_17(%arg0: i32) -> (i32, i32) {
    %c0_i32 = arith.constant 0 : i32
    %c0_i32_0 = arith.constant 0 : i32
    %c0_i32_1 = arith.constant 0 : i32
    return %c0_i32, %c0_i32_0 : i32, i32
  }
  func.func @transform_18(%arg0: i32) -> (i32, i32) {
    %c0_i32 = arith.constant 0 : i32
    %c0_i32_0 = arith.constant 0 : i32
    %c0_i32_1 = arith.constant 0 : i32
    return %c0_i32, %c0_i32_0 : i32, i32
  }
  func.func @transform_19(%arg0: i32) -> (i32, i32) {
    %c0_i32 = arith.constant 0 : i32
    %c0_i32_0 = arith.constant 0 : i32
    %c0_i32_1 = arith.constant 0 : i32
    return %c0_i32, %c0_i32_0 : i32, i32
  }
}

</mosaic_0001>

<llo_original>
// kernel: tpu_custom_call.1
$region0: #{tpu_custom_call.1}
  #allocation0 [shape = 'u32[]', space=smem, size = 0x4, offset = 0x4, fixed_abs, tag = 'smem constant byte address 0x4 - core index']
  #allocation1 [shape = 'u32[144,128]{1,0:T(1,128)}', space=vmem, size = 0x12000, scoped, tag = 'internal scratch']
  %s0 = inlined_call_operand.hbm [shape: f32[16,32], index: 0, kind: input, shape index: {}]
  %s1 = inlined_call_operand.vmem [shape: f32[1,32], index: 1, kind: input, shape index: {}]
  %s2 = inlined_call_operand.vmem [shape: f32[1,32], index: 2, kind: input, shape index: {}]
  %s3 = inlined_call_operand.vmem [shape: f32[32,96], index: 3, kind: input, shape index: {}]
  %s4 = inlined_call_operand.vmem [shape: f32[1,96], index: 4, kind: input, shape index: {}]
  %s5 = inlined_call_operand.vmem [shape: f32[32,32], index: 5, kind: input, shape index: {}]
  %s6 = inlined_call_operand.vmem [shape: f32[1,32], index: 6, kind: input, shape index: {}]
  %s7 = inlined_call_operand.vmem [shape: f32[1,32], index: 7, kind: input, shape index: {}]
  %s8 = inlined_call_operand.vmem [shape: f32[1,32], index: 8, kind: input, shape index: {}]
  %s9 = inlined_call_operand.vmem [shape: f32[32,96], index: 9, kind: input, shape index: {}]
  %s10 = inlined_call_operand.vmem [shape: f32[1,96], index: 10, kind: input, shape index: {}]
  %s11 = inlined_call_operand.hbm [shape: f32[32,32], index: 11, kind: input, shape index: {}]
  %s12 = inlined_call_operand.vmem [shape: f32[1,32], index: 12, kind: input, shape index: {}]
  %s13 = inlined_call_operand.vmem [shape: f32[1,32], index: 13, kind: input, shape index: {}]
  %s14 = inlined_call_operand.vmem [shape: f32[1,32], index: 14, kind: input, shape index: {}]
  %s15 = inlined_call_operand.hbm [shape: f32[32,64], index: 15, kind: input, shape index: {}]
  %s16 = inlined_call_operand.vmem [shape: f32[1,64], index: 16, kind: input, shape index: {}]
  %s17 = inlined_call_operand.vmem [shape: f32[64,32], index: 17, kind: input, shape index: {}]
  %s18 = inlined_call_operand.vmem [shape: f32[1,32], index: 18, kind: input, shape index: {}]
  %s19 = inlined_call_operand.hbm [shape: f32[16,32], index: 19, kind: output, shape index: {}]
  %s20 = sld [smem:[#allocation0]]
  $region98: #{tpu_custom_call.1} parent=0
    _
  %s22 = ssub.s32 1, %s20
  %s23 = scalar_select 0, %s22, %s20
  $region1: #{tpu_custom_call.1} parent=0
    #allocation2 [shape = 'u8[8192]{0}', space=vmem, size = 0x2000, scoped, tag = 'input window, operand 0, single buffered']
    #allocation3 [shape = 's32[1]{0}', space=sflag, size = 0x4, scoped, tag = 'scoped memory for tpu_custom_call.1']
    #allocation4 [shape = 's32[1]{0}', space=sflag, size = 0x4, scoped, tag = 'scoped memory for tpu_custom_call.1']
    #allocation5 [shape = 'u8[16384]{0}', space=vmem, size = 0x4000, scoped, tag = 'input window, operand 11, single buffered']
    #allocation6 [shape = 's32[1]{0}', space=sflag, size = 0x4, scoped, tag = 'scoped memory for tpu_custom_call.1']
    #allocation7 [shape = 'u8[16384]{0}', space=vmem, size = 0x4000, scoped, tag = 'input window, operand 15, single buffered']
    #allocation8 [shape = 'u8[8192]{0}', space=vmem, size = 0x2000, scoped, tag = 'output window, operand 0, single buffered']
    %24 = vsyncpa [#allocation3], 0
    %25 = vsyncpa [#allocation6], 0
    %26 = vsyncpa [#allocation4], 0
    // Predicated region
    $region2: #{tpu_custom_call.1} parent=1 // pred_check
      _
    $region3: #{tpu_custom_call.1} parent=1 // pred_check_branch
      %28 = sbr.rel (0) target = $region5
    $region4: #{tpu_custom_call.1} parent=1 // pred_region
      %s30 = ssub.s32 256, 256
      %31 = vsyncadd [#allocation3], %s30
      %s32 = sshll.u32 [#allocation2], 4
      %s33 = int_to_ptr.vmem [resolvable:$true] %s32
      %38 = dma.hbm_to_vmem [thread:$0]  %s0, 256, %s33, [#allocation3], 128, 128, 8
    $region5: #{tpu_custom_call.1} parent=1 // pred_fallthru
      _
    // Predicated region
    $region6: #{tpu_custom_call.1} parent=1 // pred_check
      _
    $region7: #{tpu_custom_call.1} parent=1 // pred_check_branch
      %40 = sbr.rel (0) target = $region9
    $region8: #{tpu_custom_call.1} parent=1 // pred_region
      _
    $region9: #{tpu_custom_call.1} parent=1 // pred_fallthru
      _
    // Predicated region
    $region10: #{tpu_custom_call.1} parent=1 // pred_check
      _
    $region11: #{tpu_custom_call.1} parent=1 // pred_check_branch
      %42 = sbr.rel (0) target = $region13
    $region12: #{tpu_custom_call.1} parent=1 // pred_region
      _
    $region13: #{tpu_custom_call.1} parent=1 // pred_fallthru
      _
    // Predicated region
    $region14: #{tpu_custom_call.1} parent=1 // pred_check
      _
    $region15: #{tpu_custom_call.1} parent=1 // pred_check_branch
      %44 = sbr.rel (0) target = $region17
    $region16: #{tpu_custom_call.1} parent=1 // pred_region
      _
    $region17: #{tpu_custom_call.1} parent=1 // pred_fallthru
      _
    // Predicated region
    $region18: #{tpu_custom_call.1} parent=1 // pred_check
      _
    $region19: #{tpu_custom_call.1} parent=1 // pred_check_branch
      %46 = sbr.rel (0) target = $region21
    $region20: #{tpu_custom_call.1} parent=1 // pred_region
      _
    $region21: #{tpu_custom_call.1} parent=1 // pred_fallthru
      _
    // Predicated region
    $region22: #{tpu_custom_call.1} parent=1 // pred_check
      _
    $region23: #{tpu_custom_call.1} parent=1 // pred_check_branch
      %48 = sbr.rel (0) target = $region25
    $region24: #{tpu_custom_call.1} parent=1 // pred_region
      _
    $region25: #{tpu_custom_call.1} parent=1 // pred_fallthru
      _
    // Predicated region
    $region26: #{tpu_custom_call.1} parent=1 // pred_check
      _
    $region27: #{tpu_custom_call.1} parent=1 // pred_check_branch
      %50 = sbr.rel (0) target = $region29
    $region28: #{tpu_custom_call.1} parent=1 // pred_region
      _
    $region29: #{tpu_custom_call.1} parent=1 // pred_fallthru
      _
    // Predicated region
    $region30: #{tpu_custom_call.1} parent=1 // pred_check
      _
    $region31: #{tpu_custom_call.1} parent=1 // pred_check_branch
      %52 = sbr.rel (0) target = $region33
    $region32: #{tpu_custom_call.1} parent=1 // pred_region
      _
    $region33: #{tpu_custom_call.1} parent=1 // pred_fallthru
      _
    // Predicated region
    $region34: #{tpu_custom_call.1} parent=1 // pred_check
      _
    $region35: #{tpu_custom_call.1} parent=1 // pred_check_branch
      %54 = sbr.rel (0) target = $region37
    $region36: #{tpu_custom_call.1} parent=1 // pred_region
      _
    $region37: #{tpu_custom_call.1} parent=1 // pred_fallthru
      _
    // Predicated region
    $region38: #{tpu_custom_call.1} parent=1 // pred_check
      _
    $region39: #{tpu_custom_call.1} parent=1 // pred_check_branch
      %56 = sbr.rel (0) target = $region41
    $region40: #{tpu_custom_call.1} parent=1 // pred_region
      _
    $region41: #{tpu_custom_call.1} parent=1 // pred_fallthru
      _
    // Predicated region
    $region42: #{tpu_custom_call.1} parent=1 // pred_check
      _
    $region43: #{tpu_custom_call.1} parent=1 // pred_check_branch
      %58 = sbr.rel (0) target = $region45
    $region44: #{tpu_custom_call.1} parent=1 // pred_region
      _
    $region45: #{tpu_custom_call.1} parent=1 // pred_fallthru
      _
    // Predicated region
    $region46: #{tpu_custom_call.1} parent=1 // pred_check
      _
    $region47: #{tpu_custom_call.1} parent=1 // pred_check_branch
      %60 = sbr.rel (0) target = $region49
    $region48: #{tpu_custom_call.1} parent=1 // pred_region
      %s62 = ssub.s32 512, 512
      %63 = vsyncadd [#allocation6], %s62
      %s64 = sshll.u32 [#allocation5], 4
      %s65 = int_to_ptr.vmem [resolvable:$true] %s64
      %70 = dma.hbm_to_vmem [thread:$0]  %s11, 512, %s65, [#allocation6], 128, 128, 8
    $region49: #{tpu_custom_call.1} parent=1 // pred_fallthru
      _
    // Predicated region
    $region50: #{tpu_custom_call.1} parent=1 // pred_check
      _
    $region51: #{tpu_custom_call.1} parent=1 // pred_check_branch
      %72 = sbr.rel (0) target = $region53
    $region52: #{tpu_custom_call.1} parent=1 // pred_region
      _
    $region53: #{tpu_custom_call.1} parent=1 // pred_fallthru
      _
    // Predicated region
    $region54: #{tpu_custom_call.1} parent=1 // pred_check
      _
    $region55: #{tpu_custom_call.1} parent=1 // pred_check_branch
      %74 = sbr.rel (0) target = $region57
    $region56: #{tpu_custom_call.1} parent=1 // pred_region
      _
    $region57: #{tpu_custom_call.1} parent=1 // pred_fallthru
      _
    // Predicated region
    $region58: #{tpu_custom_call.1} parent=1 // pred_check
      _
    $region59: #{tpu_custom_call.1} parent=1 // pred_check_branch
      %76 = sbr.rel (0) target = $region61
    $region60: #{tpu_custom_call.1} parent=1 // pred_region
      _
    $region61: #{tpu_custom_call.1} parent=1 // pred_fallthru
      _
    // Predicated region
    $region62: #{tpu_custom_call.1} parent=1 // pred_check
      _
    $region63: #{tpu_custom_call.1} parent=1 // pred_check_branch
      %78 = sbr.rel (0) target = $region65
    $region64: #{tpu_custom_call.1} parent=1 // pred_region
      %s80 = ssub.s32 512, 512
      %81 = vsyncadd [#allocation6], %s80
      %s82 = sshll.u32 [#allocation7], 4
      %s83 = int_to_ptr.vmem [resolvable:$true] %s82
      %88 = dma.hbm_to_vmem [thread:$0]  %s15, 512, %s83, [#allocation6], 128, 128, 8
    $region65: #{tpu_custom_call.1} parent=1 // pred_fallthru
      _
    // Predicated region
    $region66: #{tpu_custom_call.1} parent=1 // pred_check
      _
    $region67: #{tpu_custom_call.1} parent=1 // pred_check_branch
      %90 = sbr.rel (0) target = $region69
    $region68: #{tpu_custom_call.1} parent=1 // pred_region
      _
    $region69: #{tpu_custom_call.1} parent=1 // pred_fallthru
      _
    // Predicated region
    $region70: #{tpu_custom_call.1} parent=1 // pred_check
      _
    $region71: #{tpu_custom_call.1} parent=1 // pred_check_branch
      %92 = sbr.rel (0) target = $region73
    $region72: #{tpu_custom_call.1} parent=1 // pred_region
      _
    $region73: #{tpu_custom_call.1} parent=1 // pred_fallthru
      _
    // Predicated region
    $region74: #{tpu_custom_call.1} parent=1 // pred_check
      _
    $region75: #{tpu_custom_call.1} parent=1 // pred_check_branch
      %94 = sbr.rel (0) target = $region77
    $region76: #{tpu_custom_call.1} parent=1 // pred_region
      _
    $region77: #{tpu_custom_call.1} parent=1 // pred_fallthru
      _
    // Predicated region
    $region78: #{tpu_custom_call.1} parent=1 // pred_check
      _
    $region79: #{tpu_custom_call.1} parent=1 // pred_check_branch
      %96 = sbr.rel (0) target = $region81
    $region80: #{tpu_custom_call.1} parent=1 // pred_region
      %97 = dma.done [#allocation3], 256
    $region81: #{tpu_custom_call.1} parent=1 // pred_fallthru
      _
    // Predicated region
    $region82: #{tpu_custom_call.1} parent=1 // pred_check
      _
    $region83: #{tpu_custom_call.1} parent=1 // pred_check_branch
      %99 = sbr.rel (0) target = $region85
    $region84: #{tpu_custom_call.1} parent=1 // pred_region
      %100 = dma.done [#allocation6], 512
    $region85: #{tpu_custom_call.1} parent=1 // pred_fallthru
      _
    // Predicated region
    $region86: #{tpu_custom_call.1} parent=1 // pred_check
      _
    $region87: #{tpu_custom_call.1} parent=1 // pred_check_branch
      %102 = sbr.rel (0) target = $region89
    $region88: #{tpu_custom_call.1} parent=1 // pred_region
      %103 = dma.done [#allocation6], 512
    $region89: #{tpu_custom_call.1} parent=1 // pred_fallthru
      _
    %v104 = vld [vmem:[#allocation2] sm:$0xff]
    %v105 = vld [vmem:[#allocation2 + $0x8] sm:$0xff]
    %v106 = vlaneseq
    %v107 = vshrl.u32 %v106, 7
    %v108 = vlaneseq
    %v109 = vand.u32 %v108, 127
    %vm110 = vcmp.ge.s32.totalorder %v107, %v109
    %v111 = vsel %vm110, 0.0, -1e+30
    %v112 = vld [vmem:[%s1] sm:$0x1]
    %v113 = vld [vmem:[%s2] sm:$0x1]
    %vm114 = vcmask 261120
    %v115 = vsel %vm114, %v104, 0.0
    %116 = vadd.xlane.f32.xlu0 %v115
    %v117 = vpop.xlane.xlu0 %116
    %v118 = vsel %vm114, %v105, 0.0
    %119 = vadd.xlane.f32.xlu0 %v118
    %v120 = vpop.xlane.xlu0 %119
    %v121 = vrcp.pop 32.0
    %v122 = vmul.f32 %v117, %v121
    %v123 = vmul.f32 %v120, %v121
    %v124 = vsub.f32 %v104, %v122
    %v125 = vsub.f32 %v105, %v123
    %v126 = vmul.f32 %v124, %v124
    %v127 = vmul.f32 %v125, %v125
    %v128 = vsel %vm114, %v126, 0.0
    %129 = vadd.xlane.f32.xlu0 %v128
    %v130 = vpop.xlane.xlu0 %129
    %v131 = vsel %vm114, %v127, 0.0
    %132 = vadd.xlane.f32.xlu0 %v131
    %v133 = vpop.xlane.xlu0 %132
    %v134 = vmul.f32 %v130, %v121
    %v135 = vmul.f32 %v133, %v121
    %v136 = vadd.f32 %v134, 1e-05
    %v137 = vadd.f32 %v135, 1e-05
    %v138 = vrsqrt.pop %v136
    %v139 = vrsqrt.pop %v137
    %v140 = vmul.f32 %v124, %v138
    %v141 = vmul.f32 %v125, %v139
    %v143 = vlaneseq
    %v144 = vshrl.u32 %v143, 7
    %v145 = vsub.s32 0, %v144
    %v146 = vrot.slane %v112, %v145
    %v148 = vmul.f32 %v140, %v146
    %v149 = vmul.f32 %v141, %v146
    %v151 = vlaneseq
    %v152 = vshrl.u32 %v151, 7
    %v153 = vsub.s32 0, %v152
    %v154 = vrot.slane %v113, %v153
    %v156 = vadd.f32 %v148, %v154
    %v157 = vadd.f32 %v149, %v154
    %v158 = vld [vmem:[%s3] sm:$0xff]
    %v159 = vld [vmem:[%s3 + $0x8] sm:$0xff]
    %v160 = vld [vmem:[%s3 + $0x10] sm:$0xff]
    %v161 = vld [vmem:[%s3 + $0x18] sm:$0xff]
    %v162 = vld [vmem:[%s4] sm:$0x1]
    %v163 = vld [vmem:[%s5] sm:$0xff]
    %v164 = vld [vmem:[%s5 + $0x8] sm:$0xff]
    %v165 = vld [vmem:[%s5 + $0x10] sm:$0xff]
    %v166 = vld [vmem:[%s5 + $0x18] sm:$0xff]
    %v167 = vld [vmem:[%s6] sm:$0x1]
    %v169 = vlaneseq
    %v170 = vshrl.u32 %v169, 7
    %v171 = vsub.s32 0, %v170
    %v172 = vrot.slane %v162, %v171
    %v175 = vsel %vm114, %v156, 0
    %v178 = vsel %vm114, %v157, 0
    %180 = vmatprep.subr.mxu0 0.0
    %181 = vmatpush1.msra.mxu0 0.0
    %182 = vmatprep.subr.mxu0 0.0
    %183 = vmatpush1.msra.mxu0 0.0
    %184 = vmatprep.subr.mxu0 0.0
    %185 = vmatpush1.msra.mxu0 0.0
    %186 = vmatprep.subr.mxu0 0.0
    %187 = vmatpush1.msra.mxu0 0.0
    %188 = vmatprep.subr.mxu0 0.0
    %189 = vmatpush1.msra.mxu0 0.0
    %190 = vmatprep.subr.mxu0 0.0
    %191 = vmatpush1.msra.mxu0 0.0
    %192 = vmatprep.subr.mxu0 0.0
    %193 = vmatpush1.msra.mxu0 0.0
    %194 = vmatprep.subr.mxu0 0.0
    %195 = vmatpush1.msra.mxu0 0.0
    %196 = vmatprep.subr.mxu0 0.0
    %197 = vmatpush1.msra.mxu0 0.0
    %198 = vmatprep.subr.mxu0 0.0
    %199 = vmatpush1.msra.mxu0 0.0
    %200 = vmatprep.subr.mxu0 0.0
    %201 = vmatpush1.msra.mxu0 0.0
    %202 = vmatprep.subr.mxu0 0.0
    %203 = vmatpush1.msra.mxu0 0.0
    %204 = vmatprep.subr.mxu0 0.0
    %205 = vmatpush1.msra.mxu0 %v161
    %206 = vmatprep.subr.mxu0 0.0
    %207 = vmatpush1.msra.mxu0 %v160
    %208 = vmatprep.subr.mxu0 0.0
    %209 = vmatpush1.msra.mxu0 %v159
    %210 = vmatprep.subr.mxu0 0.0
    %211 = vmatpush1.msra.mxu0 %v158
    %212 = vmatprep.subr.mxu0 0.0
    %213 = vmatpush2.msra.mxu0 0.0
    %214 = vmatprep.subr.mxu0 0.0
    %215 = vmatpush2.msra.mxu0 0.0
    %216 = vmatprep.subr.mxu0 0.0
    %217 = vmatpush2.msra.mxu0 0.0
    %218 = vmatprep.subr.mxu0 0.0
    %219 = vmatpush2.msra.mxu0 0.0
    %220 = vmatprep.subr.mxu0 0.0
    %221 = vmatpush2.msra.mxu0 0.0
    %222 = vmatprep.subr.mxu0 0.0
    %223 = vmatpush2.msra.mxu0 0.0
    %224 = vmatprep.subr.mxu0 0.0
    %225 = vmatpush2.msra.mxu0 0.0
    %226 = vmatprep.subr.mxu0 0.0
    %227 = vmatpush2.msra.mxu0 0.0
    %228 = vmatprep.subr.mxu0 0.0
    %229 = vmatpush2.msra.mxu0 0.0
    %230 = vmatprep.subr.mxu0 0.0
    %231 = vmatpush2.msra.mxu0 0.0
    %232 = vmatprep.subr.mxu0 0.0
    %233 = vmatpush2.msra.mxu0 0.0
    %234 = vmatprep.subr.mxu0 0.0
    %235 = vmatpush2.msra.mxu0 0.0
    %236 = vmatprep.subr.mxu0 0.0
    %237 = vmatpush2.msra.mxu0 0.0
    %238 = vmatprep.subr.mxu0 0.0
    %239 = vmatpush2.msra.mxu0 0.0
    %240 = vmatprep.subr.mxu0 0.0
    %241 = vmatpush2.msra.mxu0 0.0
    %242 = vmatprep.subr.mxu0 0.0
    %243 = vmatpush2.msra.mxu0 0.0
    %244 = vmatprep.mubr.f32.mxu0 0.0
    %245 = vmatmul.mubr.f32.gmra.mxu0 %v175
    %v246 = vpop.f32.mrf.mxu0
    %v247 = vadd.f32 %v172, %v246
    %v248 = vpop.f32.mrf.mxu0
    %249 = vmatprep.mubr.f32.mxu0 0.0
    %250 = vmatmul.mubr.f32.gmra.mxu0 %v178
    %v251 = vpop.f32.mrf.mxu0
    %v252 = vadd.f32 %v172, %v251
    %v253 = vpop.f32.mrf.mxu0
    %254 = vdwg.mxu0
    %v255 = vmul.f32 %v247, 0.35355338
    %v256 = vmul.f32 %v252, 0.35355338
    %258 = vrot.lane.b32.xlu0 %v247, 96
    %v259 = vpop.permute.xlu0 %258
    %vm260 = vcmask 64512
    %v262 = vsel %vm260, %v255, 0
    %v264 = vsel %vm260, %v259, 0
    %266 = vmatprep.subr.mxu0 0.0
    %267 = vmatpush1.xpose.msra.mxu0 0.0
    %268 = vmatprep.subr.mxu0 0.0
    %269 = vmatpush1.xpose.msra.mxu0 0.0
    %270 = vmatprep.subr.mxu0 0.0
    %271 = vmatpush1.xpose.msra.mxu0 0.0
    %272 = vmatprep.subr.mxu0 0.0
    %273 = vmatpush1.xpose.msra.mxu0 0.0
    %274 = vmatprep.subr.mxu0 0.0
    %275 = vmatpush1.xpose.msra.mxu0 0.0
    %276 = vmatprep.subr.mxu0 0.0
    %277 = vmatpush1.xpose.msra.mxu0 0.0
    %278 = vmatprep.subr.mxu0 0.0
    %279 = vmatpush1.xpose.msra.mxu0 0.0
    %280 = vmatprep.subr.mxu0 0.0
    %281 = vmatpush1.xpose.msra.mxu0 0.0
    %282 = vmatprep.subr.mxu0 0.0
    %283 = vmatpush1.xpose.msra.mxu0 0.0
    %284 = vmatprep.subr.mxu0 0.0
    %285 = vmatpush1.xpose.msra.mxu0 0.0
    %286 = vmatprep.subr.mxu0 0.0
    %287 = vmatpush1.xpose.msra.mxu0 0.0
    %288 = vmatprep.subr.mxu0 0.0
    %289 = vmatpush1.xpose.msra.mxu0 0.0
    %290 = vmatprep.subr.mxu0 0.0
    %291 = vmatpush1.xpose.msra.mxu0 0.0
    %292 = vmatprep.subr.mxu0 0.0
    %293 = vmatpush1.xpose.msra.mxu0 0.0
    %294 = vmatprep.subr.mxu0 0.0
    %295 = vmatpush1.xpose.msra.mxu0 0.0
    %296 = vmatprep.subr.mxu0 0.0
    %297 = vmatpush1.xpose.msra.mxu0 %v264
    %298 = vmatprep.subr.mxu0 0.0
    %299 = vmatpush2.xpose.msra.mxu0 0.0
    %300 = vmatprep.subr.mxu0 0.0
    %301 = vmatpush2.xpose.msra.mxu0 0.0
    %302 = vmatprep.subr.mxu0 0.0
    %303 = vmatpush2.xpose.msra.mxu0 0.0
    %304 = vmatprep.subr.mxu0 0.0
    %305 = vmatpush2.xpose.msra.mxu0 0.0
    %306 = vmatprep.subr.mxu0 0.0
    %307 = vmatpush2.xpose.msra.mxu0 0.0
    %308 = vmatprep.subr.mxu0 0.0
    %309 = vmatpush2.xpose.msra.mxu0 0.0
    %310 = vmatprep.subr.mxu0 0.0
    %311 = vmatpush2.xpose.msra.mxu0 0.0
    %312 = vmatprep.subr.mxu0 0.0
    %313 = vmatpush2.xpose.msra.mxu0 0.0
    %314 = vmatprep.subr.mxu0 0.0
    %315 = vmatpush2.xpose.msra.mxu0 0.0
    %316 = vmatprep.subr.mxu0 0.0
    %317 = vmatpush2.xpose.msra.mxu0 0.0
    %318 = vmatprep.subr.mxu0 0.0
    %319 = vmatpush2.xpose.msra.mxu0 0.0
    %320 = vmatprep.subr.mxu0 0.0
    %321 = vmatpush2.xpose.msra.mxu0 0.0
    %322 = vmatprep.subr.mxu0 0.0
    %323 = vmatpush2.xpose.msra.mxu0 0.0
    %324 = vmatprep.subr.mxu0 0.0
    %325 = vmatpush2.xpose.msra.mxu0 0.0
    %326 = vmatprep.subr.mxu0 0.0
    %327 = vmatpush2.xpose.msra.mxu0 0.0
    %328 = vmatprep.subr.mxu0 0.0
    %329 = vmatpush2.xpose.msra.mxu0 0.0
    %330 = vmatprep.mubr.f32.mxu0 0.0
    %331 = vmatmul.mubr.f32.gmra.mxu0 %v262
    %v332 = vpop.f32.mrf.mxu0
    %v333 = vadd.f32 %v111, %v332
    %v334 = vpop.f32.mrf.mxu0
    %335 = vdwg.mxu0
    %337 = vrot.lane.b32.xlu0 %v252, 96
    %v338 = vpop.permute.xlu0 %337
    %v340 = vsel %vm260, %v256, 0
    %v342 = vsel %vm260, %v338, 0
    %344 = vmatprep.subr.mxu0 0.0
    %345 = vmatpush1.xpose.msra.mxu0 0.0
    %346 = vmatprep.subr.mxu0 0.0
    %347 = vmatpush1.xpose.msra.mxu0 0.0
    %348 = vmatprep.subr.mxu0 0.0
    %349 = vmatpush1.xpose.msra.mxu0 0.0
    %350 = vmatprep.subr.mxu0 0.0
    %351 = vmatpush1.xpose.msra.mxu0 0.0
    %352 = vmatprep.subr.mxu0 0.0
    %353 = vmatpush1.xpose.msra.mxu0 0.0
    %354 = vmatprep.subr.mxu0 0.0
    %355 = vmatpush1.xpose.msra.mxu0 0.0
    %356 = vmatprep.subr.mxu0 0.0
    %357 = vmatpush1.xpose.msra.mxu0 0.0
    %358 = vmatprep.subr.mxu0 0.0
    %359 = vmatpush1.xpose.msra.mxu0 0.0
    %360 = vmatprep.subr.mxu0 0.0
    %361 = vmatpush1.xpose.msra.mxu0 0.0
    %362 = vmatprep.subr.mxu0 0.0
    %363 = vmatpush1.xpose.msra.mxu0 0.0
    %364 = vmatprep.subr.mxu0 0.0
    %365 = vmatpush1.xpose.msra.mxu0 0.0
    %366 = vmatprep.subr.mxu0 0.0
    %367 = vmatpush1.xpose.msra.mxu0 0.0
    %368 = vmatprep.subr.mxu0 0.0
    %369 = vmatpush1.xpose.msra.mxu0 0.0
    %370 = vmatprep.subr.mxu0 0.0
    %371 = vmatpush1.xpose.msra.mxu0 0.0
    %372 = vmatprep.subr.mxu0 0.0
    %373 = vmatpush1.xpose.msra.mxu0 0.0
    %374 = vmatprep.subr.mxu0 0.0
    %375 = vmatpush1.xpose.msra.mxu0 %v342
    %376 = vmatprep.subr.mxu0 0.0
    %377 = vmatpush2.xpose.msra.mxu0 0.0
    %378 = vmatprep.subr.mxu0 0.0
    %379 = vmatpush2.xpose.msra.mxu0 0.0
    %380 = vmatprep.subr.mxu0 0.0
    %381 = vmatpush2.xpose.msra.mxu0 0.0
    %382 = vmatprep.subr.mxu0 0.0
    %383 = vmatpush2.xpose.msra.mxu0 0.0
    %384 = vmatprep.subr.mxu0 0.0
    %385 = vmatpush2.xpose.msra.mxu0 0.0
    %386 = vmatprep.subr.mxu0 0.0
    %387 = vmatpush2.xpose.msra.mxu0 0.0
    %388 = vmatprep.subr.mxu0 0.0
    %389 = vmatpush2.xpose.msra.mxu0 0.0
    %390 = vmatprep.subr.mxu0 0.0
    %391 = vmatpush2.xpose.msra.mxu0 0.0
    %392 = vmatprep.subr.mxu0 0.0
    %393 = vmatpush2.xpose.msra.mxu0 0.0
    %394 = vmatprep.subr.mxu0 0.0
    %395 = vmatpush2.xpose.msra.mxu0 0.0
    %396 = vmatprep.subr.mxu0 0.0
    %397 = vmatpush2.xpose.msra.mxu0 0.0
    %398 = vmatprep.subr.mxu0 0.0
    %399 = vmatpush2.xpose.msra.mxu0 0.0
    %400 = vmatprep.subr.mxu0 0.0
    %401 = vmatpush2.xpose.msra.mxu0 0.0
    %402 = vmatprep.subr.mxu0 0.0
    %403 = vmatpush2.xpose.msra.mxu0 0.0
    %404 = vmatprep.subr.mxu0 0.0
    %405 = vmatpush2.xpose.msra.mxu0 0.0
    %406 = vmatprep.subr.mxu0 0.0
    %407 = vmatpush2.xpose.msra.mxu0 0.0
    %408 = vmatprep.mubr.f32.mxu0 0.0
    %409 = vmatmul.mubr.f32.gmra.mxu0 %v340
    %v410 = vpop.f32.mrf.mxu0
    %v411 = vadd.f32 %v111, %v410
    %v412 = vpop.f32.mrf.mxu0
    %413 = vdwg.mxu0
    %v414 = vsel %vm260, %v333, -inf
    %415 = vmax.xlane.f32.xlu0 %v414
    %v416 = vpop.xlane.xlu0 %415
    %v417 = vsel %vm260, %v411, -inf
    %418 = vmax.xlane.f32.xlu0 %v417
    %v419 = vpop.xlane.xlu0 %418
    %v420 = vsub.f32 %v333, %v416
    %v421 = vsub.f32 %v411, %v419
    %v422 = vmul.f32 %v420, 1.442695
    %v423 = vpow.pop %v422
    %v424 = vmul.f32 %v421, 1.442695
    %v425 = vpow.pop %v424
    %v426 = vsel %vm260, %v423, 0.0
    %427 = vadd.xlane.f32.xlu0 %v426
    %v428 = vpop.xlane.xlu0 %427
    %v429 = vsel %vm260, %v425, 0.0
    %430 = vadd.xlane.f32.xlu0 %v429
    %v431 = vpop.xlane.xlu0 %430
    %v432 = vrcp.pop %v428
    %v433 = vrcp.pop %v431
    %v434 = vmul.f32 %v423, %v432
    %v435 = vmul.f32 %v425, %v433
    %436 = vrot.lane.b32.xlu0 %v247, 64
    %v437 = vpop.permute.xlu0 %436
    %v440 = vsel %vm260, %v434, 0
    %442 = vmatprep.subr.mxu0 0.0
    %443 = vmatpush1.msra.mxu0 0.0
    %444 = vmatprep.subr.mxu0 0.0
    %445 = vmatpush1.msra.mxu0 0.0
    %446 = vmatprep.subr.mxu0 0.0
    %447 = vmatpush1.msra.mxu0 0.0
    %448 = vmatprep.subr.mxu0 0.0
    %449 = vmatpush1.msra.mxu0 0.0
    %450 = vmatprep.subr.mxu0 0.0
    %451 = vmatpush1.msra.mxu0 0.0
    %452 = vmatprep.subr.mxu0 0.0
    %453 = vmatpush1.msra.mxu0 0.0
    %454 = vmatprep.subr.mxu0 0.0
    %455 = vmatpush1.msra.mxu0 0.0
    %456 = vmatprep.subr.mxu0 0.0
    %457 = vmatpush1.msra.mxu0 0.0
    %458 = vmatprep.subr.mxu0 0.0
    %459 = vmatpush1.msra.mxu0 0.0
    %460 = vmatprep.subr.mxu0 0.0
    %461 = vmatpush1.msra.mxu0 0.0
    %462 = vmatprep.subr.mxu0 0.0
    %463 = vmatpush1.msra.mxu0 0.0
    %464 = vmatprep.subr.mxu0 0.0
    %465 = vmatpush1.msra.mxu0 0.0
    %466 = vmatprep.subr.mxu0 0.0
    %467 = vmatpush1.msra.mxu0 0.0
    %468 = vmatprep.subr.mxu0 0.0
    %469 = vmatpush1.msra.mxu0 0.0
    %470 = vmatprep.subr.mxu0 0.0
    %471 = vmatpush1.msra.mxu0 0.0
    %472 = vmatprep.subr.mxu0 0.0
    %473 = vmatpush1.msra.mxu0 %v437
    %474 = vmatprep.subr.mxu0 0.0
    %475 = vmatpush2.msra.mxu0 0.0
    %476 = vmatprep.subr.mxu0 0.0
    %477 = vmatpush2.msra.mxu0 0.0
    %478 = vmatprep.subr.mxu0 0.0
    %479 = vmatpush2.msra.mxu0 0.0
    %480 = vmatprep.subr.mxu0 0.0
    %481 = vmatpush2.msra.mxu0 0.0
    %482 = vmatprep.subr.mxu0 0.0
    %483 = vmatpush2.msra.mxu0 0.0
    %484 = vmatprep.subr.mxu0 0.0
    %485 = vmatpush2.msra.mxu0 0.0
    %486 = vmatprep.subr.mxu0 0.0
    %487 = vmatpush2.msra.mxu0 0.0
    %488 = vmatprep.subr.mxu0 0.0
    %489 = vmatpush2.msra.mxu0 0.0
    %490 = vmatprep.subr.mxu0 0.0
    %491 = vmatpush2.msra.mxu0 0.0
    %492 = vmatprep.subr.mxu0 0.0
    %493 = vmatpush2.msra.mxu0 0.0
    %494 = vmatprep.subr.mxu0 0.0
    %495 = vmatpush2.msra.mxu0 0.0
    %496 = vmatprep.subr.mxu0 0.0
    %497 = vmatpush2.msra.mxu0 0.0
    %498 = vmatprep.subr.mxu0 0.0
    %499 = vmatpush2.msra.mxu0 0.0
    %500 = vmatprep.subr.mxu0 0.0
    %501 = vmatpush2.msra.mxu0 0.0
    %502 = vmatprep.subr.mxu0 0.0
    %503 = vmatpush2.msra.mxu0 0.0
    %504 = vmatprep.subr.mxu0 0.0
    %505 = vmatpush2.msra.mxu0 0.0
    %506 = vmatprep.mubr.f32.mxu0 0.0
    %507 = vmatmul.mubr.f32.gmra.mxu0 %v440
    %v508 = vpop.f32.mrf.mxu0
    %v509 = vadd.f32 0.0, %v508
    %v510 = vpop.f32.mrf.mxu0
    %511 = vdwg.mxu0
    %512 = vrot.lane.b32.xlu0 %v252, 64
    %v513 = vpop.permute.xlu0 %512
    %v516 = vsel %vm260, %v435, 0
    %518 = vmatprep.subr.mxu0 0.0
    %519 = vmatpush1.msra.mxu0 0.0
    %520 = vmatprep.subr.mxu0 0.0
    %521 = vmatpush1.msra.mxu0 0.0
    %522 = vmatprep.subr.mxu0 0.0
    %523 = vmatpush1.msra.mxu0 0.0
    %524 = vmatprep.subr.mxu0 0.0
    %525 = vmatpush1.msra.mxu0 0.0
    %526 = vmatprep.subr.mxu0 0.0
    %527 = vmatpush1.msra.mxu0 0.0
    %528 = vmatprep.subr.mxu0 0.0
    %529 = vmatpush1.msra.mxu0 0.0
    %530 = vmatprep.subr.mxu0 0.0
    %531 = vmatpush1.msra.mxu0 0.0
    %532 = vmatprep.subr.mxu0 0.0
    %533 = vmatpush1.msra.mxu0 0.0
    %534 = vmatprep.subr.mxu0 0.0
    %535 = vmatpush1.msra.mxu0 0.0
    %536 = vmatprep.subr.mxu0 0.0
    %537 = vmatpush1.msra.mxu0 0.0
    %538 = vmatprep.subr.mxu0 0.0
    %539 = vmatpush1.msra.mxu0 0.0
    %540 = vmatprep.subr.mxu0 0.0
    %541 = vmatpush1.msra.mxu0 0.0
    %542 = vmatprep.subr.mxu0 0.0
    %543 = vmatpush1.msra.mxu0 0.0
    %544 = vmatprep.subr.mxu0 0.0
    %545 = vmatpush1.msra.mxu0 0.0
    %546 = vmatprep.subr.mxu0 0.0
    %547 = vmatpush1.msra.mxu0 0.0
    %548 = vmatprep.subr.mxu0 0.0
    %549 = vmatpush1.msra.mxu0 %v513
    %550 = vmatprep.subr.mxu0 0.0
    %551 = vmatpush2.msra.mxu0 0.0
    %552 = vmatprep.subr.mxu0 0.0
    %553 = vmatpush2.msra.mxu0 0.0
    %554 = vmatprep.subr.mxu0 0.0
    %555 = vmatpush2.msra.mxu0 0.0
    %556 = vmatprep.subr.mxu0 0.0
    %557 = vmatpush2.msra.mxu0 0.0
    %558 = vmatprep.subr.mxu0 0.0
    %559 = vmatpush2.msra.mxu0 0.0
    %560 = vmatprep.subr.mxu0 0.0
    %561 = vmatpush2.msra.mxu0 0.0
    %562 = vmatprep.subr.mxu0 0.0
    %563 = vmatpush2.msra.mxu0 0.0
    %564 = vmatprep.subr.mxu0 0.0
    %565 = vmatpush2.msra.mxu0 0.0
    %566 = vmatprep.subr.mxu0 0.0
    %567 = vmatpush2.msra.mxu0 0.0
    %568 = vmatprep.subr.mxu0 0.0
    %569 = vmatpush2.msra.mxu0 0.0
    %570 = vmatprep.subr.mxu0 0.0
    %571 = vmatpush2.msra.mxu0 0.0
    %572 = vmatprep.subr.mxu0 0.0
    %573 = vmatpush2.msra.mxu0 0.0
    %574 = vmatprep.subr.mxu0 0.0
    %575 = vmatpush2.msra.mxu0 0.0
    %576 = vmatprep.subr.mxu0 0.0
    %577 = vmatpush2.msra.mxu0 0.0
    %578 = vmatprep.subr.mxu0 0.0
    %579 = vmatpush2.msra.mxu0 0.0
    %580 = vmatprep.subr.mxu0 0.0
    %581 = vmatpush2.msra.mxu0 0.0
    %582 = vmatprep.mubr.f32.mxu0 0.0
    %583 = vmatmul.mubr.f32.gmra.mxu0 %v516
    %v584 = vpop.f32.mrf.mxu0
    %v585 = vadd.f32 0.0, %v584
    %v586 = vpop.f32.mrf.mxu0
    %587 = vdwg.mxu0
    %588 = vrot.lane.b32.xlu0 %v255, 120
    %v589 = vpop.permute.xlu0 %588
    %590 = vrot.lane.b32.xlu0 %v247, 88
    %v591 = vpop.permute.xlu0 %590
    %v592 = vsel %vm260, %v589, 0
    %v594 = vsel %vm260, %v591, 0
    %596 = vmatprep.subr.mxu0 0.0
    %597 = vmatpush1.xpose.msra.mxu0 0.0
    %598 = vmatprep.subr.mxu0 0.0
    %599 = vmatpush1.xpose.msra.mxu0 0.0
    %600 = vmatprep.subr.mxu0 0.0
    %601 = vmatpush1.xpose.msra.mxu0 0.0
    %602 = vmatprep.subr.mxu0 0.0
    %603 = vmatpush1.xpose.msra.mxu0 0.0
    %604 = vmatprep.subr.mxu0 0.0
    %605 = vmatpush1.xpose.msra.mxu0 0.0
    %606 = vmatprep.subr.mxu0 0.0
    %607 = vmatpush1.xpose.msra.mxu0 0.0
    %608 = vmatprep.subr.mxu0 0.0
    %609 = vmatpush1.xpose.msra.mxu0 0.0
    %610 = vmatprep.subr.mxu0 0.0
    %611 = vmatpush1.xpose.msra.mxu0 0.0
    %612 = vmatprep.subr.mxu0 0.0
    %613 = vmatpush1.xpose.msra.mxu0 0.0
    %614 = vmatprep.subr.mxu0 0.0
    %615 = vmatpush1.xpose.msra.mxu0 0.0
    %616 = vmatprep.subr.mxu0 0.0
    %617 = vmatpush1.xpose.msra.mxu0 0.0
    %618 = vmatprep.subr.mxu0 0.0
    %619 = vmatpush1.xpose.msra.mxu0 0.0
    %620 = vmatprep.subr.mxu0 0.0
    %621 = vmatpush1.xpose.msra.mxu0 0.0
    %622 = vmatprep.subr.mxu0 0.0
    %623 = vmatpush1.xpose.msra.mxu0 0.0
    %624 = vmatprep.subr.mxu0 0.0
    %625 = vmatpush1.xpose.msra.mxu0 0.0
    %626 = vmatprep.subr.mxu0 0.0
    %627 = vmatpush1.xpose.msra.mxu0 %v594
    %628 = vmatprep.subr.mxu0 0.0
    %629 = vmatpush2.xpose.msra.mxu0 0.0
    %630 = vmatprep.subr.mxu0 0.0
    %631 = vmatpush2.xpose.msra.mxu0 0.0
    %632 = vmatprep.subr.mxu0 0.0
    %633 = vmatpush2.xpose.msra.mxu0 0.0
    %634 = vmatprep.subr.mxu0 0.0
    %635 = vmatpush2.xpose.msra.mxu0 0.0
    %636 = vmatprep.subr.mxu0 0.0
    %637 = vmatpush2.xpose.msra.mxu0 0.0
    %638 = vmatprep.subr.mxu0 0.0
    %639 = vmatpush2.xpose.msra.mxu0 0.0
    %640 = vmatprep.subr.mxu0 0.0
    %641 = vmatpush2.xpose.msra.mxu0 0.0
    %642 = vmatprep.subr.mxu0 0.0
    %643 = vmatpush2.xpose.msra.mxu0 0.0
    %644 = vmatprep.subr.mxu0 0.0
    %645 = vmatpush2.xpose.msra.mxu0 0.0
    %646 = vmatprep.subr.mxu0 0.0
    %647 = vmatpush2.xpose.msra.mxu0 0.0
    %648 = vmatprep.subr.mxu0 0.0
    %649 = vmatpush2.xpose.msra.mxu0 0.0
    %650 = vmatprep.subr.mxu0 0.0
    %651 = vmatpush2.xpose.msra.mxu0 0.0
    %652 = vmatprep.subr.mxu0 0.0
    %653 = vmatpush2.xpose.msra.mxu0 0.0
    %654 = vmatprep.subr.mxu0 0.0
    %655 = vmatpush2.xpose.msra.mxu0 0.0
    %656 = vmatprep.subr.mxu0 0.0
    %657 = vmatpush2.xpose.msra.mxu0 0.0
    %658 = vmatprep.subr.mxu0 0.0
    %659 = vmatpush2.xpose.msra.mxu0 0.0
    %660 = vmatprep.mubr.f32.mxu0 0.0
    %661 = vmatmul.mubr.f32.gmra.mxu0 %v592
    %v662 = vpop.f32.mrf.mxu0
    %v663 = vadd.f32 %v111, %v662
    %v664 = vpop.f32.mrf.mxu0
    %665 = vdwg.mxu0
    %666 = vrot.lane.b32.xlu0 %v256, 120
    %v667 = vpop.permute.xlu0 %666
    %668 = vrot.lane.b32.xlu0 %v252, 88
    %v669 = vpop.permute.xlu0 %668
    %v670 = vsel %vm260, %v667, 0
    %v672 = vsel %vm260, %v669, 0
    %674 = vmatprep.subr.mxu0 0.0
    %675 = vmatpush1.xpose.msra.mxu0 0.0
    %676 = vmatprep.subr.mxu0 0.0
    %677 = vmatpush1.xpose.msra.mxu0 0.0
    %678 = vmatprep.subr.mxu0 0.0
    %679 = vmatpush1.xpose.msra.mxu0 0.0
    %680 = vmatprep.subr.mxu0 0.0
    %681 = vmatpush1.xpose.msra.mxu0 0.0
    %682 = vmatprep.subr.mxu0 0.0
    %683 = vmatpush1.xpose.msra.mxu0 0.0
    %684 = vmatprep.subr.mxu0 0.0
    %685 = vmatpush1.xpose.msra.mxu0 0.0
    %686 = vmatprep.subr.mxu0 0.0
    %687 = vmatpush1.xpose.msra.mxu0 0.0
    %688 = vmatprep.subr.mxu0 0.0
    %689 = vmatpush1.xpose.msra.mxu0 0.0
    %690 = vmatprep.subr.mxu0 0.0
    %691 = vmatpush1.xpose.msra.mxu0 0.0
    %692 = vmatprep.subr.mxu0 0.0
    %693 = vmatpush1.xpose.msra.mxu0 0.0
    %694 = vmatprep.subr.mxu0 0.0
    %695 = vmatpush1.xpose.msra.mxu0 0.0
    %696 = vmatprep.subr.mxu0 0.0
    %697 = vmatpush1.xpose.msra.mxu0 0.0
    %698 = vmatprep.subr.mxu0 0.0
    %699 = vmatpush1.xpose.msra.mxu0 0.0
    %700 = vmatprep.subr.mxu0 0.0
    %701 = vmatpush1.xpose.msra.mxu0 0.0
    %702 = vmatprep.subr.mxu0 0.0
    %703 = vmatpush1.xpose.msra.mxu0 0.0
    %704 = vmatprep.subr.mxu0 0.0
    %705 = vmatpush1.xpose.msra.mxu0 %v672
    %706 = vmatprep.subr.mxu0 0.0
    %707 = vmatpush2.xpose.msra.mxu0 0.0
    %708 = vmatprep.subr.mxu0 0.0
    %709 = vmatpush2.xpose.msra.mxu0 0.0
    %710 = vmatprep.subr.mxu0 0.0
    %711 = vmatpush2.xpose.msra.mxu0 0.0
    %712 = vmatprep.subr.mxu0 0.0
    %713 = vmatpush2.xpose.msra.mxu0 0.0
    %714 = vmatprep.subr.mxu0 0.0
    %715 = vmatpush2.xpose.msra.mxu0 0.0
    %716 = vmatprep.subr.mxu0 0.0
    %717 = vmatpush2.xpose.msra.mxu0 0.0
    %718 = vmatprep.subr.mxu0 0.0
    %719 = vmatpush2.xpose.msra.mxu0 0.0
    %720 = vmatprep.subr.mxu0 0.0
    %721 = vmatpush2.xpose.msra.mxu0 0.0
    %722 = vmatprep.subr.mxu0 0.0
    %723 = vmatpush2.xpose.msra.mxu0 0.0
    %724 = vmatprep.subr.mxu0 0.0
    %725 = vmatpush2.xpose.msra.mxu0 0.0
    %726 = vmatprep.subr.mxu0 0.0
    %727 = vmatpush2.xpose.msra.mxu0 0.0
    %728 = vmatprep.subr.mxu0 0.0
    %729 = vmatpush2.xpose.msra.mxu0 0.0
    %730 = vmatprep.subr.mxu0 0.0
    %731 = vmatpush2.xpose.msra.mxu0 0.0
    %732 = vmatprep.subr.mxu0 0.0
    %733 = vmatpush2.xpose.msra.mxu0 0.0
    %734 = vmatprep.subr.mxu0 0.0
    %735 = vmatpush2.xpose.msra.mxu0 0.0
    %736 = vmatprep.subr.mxu0 0.0
    %737 = vmatpush2.xpose.msra.mxu0 0.0
    %738 = vmatprep.mubr.f32.mxu0 0.0
    %739 = vmatmul.mubr.f32.gmra.mxu0 %v670
    %v740 = vpop.f32.mrf.mxu0
    %v741 = vadd.f32 %v111, %v740
    %v742 = vpop.f32.mrf.mxu0
    %743 = vdwg.mxu0
    %v744 = vsel %vm260, %v663, -inf
    %745 = vmax.xlane.f32.xlu0 %v744
    %v746 = vpop.xlane.xlu0 %745
    %v747 = vsel %vm260, %v741, -inf
    %748 = vmax.xlane.f32.xlu0 %v747
    %v749 = vpop.xlane.xlu0 %748
    %v750 = vsub.f32 %v663, %v746
    %v751 = vsub.f32 %v741, %v749
    %v752 = vmul.f32 %v750, 1.442695
    %v753 = vpow.pop %v752
    %v754 = vmul.f32 %v751, 1.442695
    %v755 = vpow.pop %v754
    %v756 = vsel %vm260, %v753, 0.0
    %757 = vadd.xlane.f32.xlu0 %v756
    %v758 = vpop.xlane.xlu0 %757
    %v759 = vsel %vm260, %v755, 0.0
    %760 = vadd.xlane.f32.xlu0 %v759
    %v761 = vpop.xlane.xlu0 %760
    %v762 = vrcp.pop %v758
    %v763 = vrcp.pop %v761
    %v764 = vmul.f32 %v753, %v762
    %v765 = vmul.f32 %v755, %v763
    %766 = vrot.lane.b32.xlu0 %v247, 56
    %v767 = vpop.permute.xlu0 %766
    %v770 = vsel %vm260, %v764, 0
    %772 = vmatprep.subr.mxu0 0.0
    %773 = vmatpush1.msra.mxu0 0.0
    %774 = vmatprep.subr.mxu0 0.0
    %775 = vmatpush1.msra.mxu0 0.0
    %776 = vmatprep.subr.mxu0 0.0
    %777 = vmatpush1.msra.mxu0 0.0
    %778 = vmatprep.subr.mxu0 0.0
    %779 = vmatpush1.msra.mxu0 0.0
    %780 = vmatprep.subr.mxu0 0.0
    %781 = vmatpush1.msra.mxu0 0.0
    %782 = vmatprep.subr.mxu0 0.0
    %783 = vmatpush1.msra.mxu0 0.0
    %784 = vmatprep.subr.mxu0 0.0
    %785 = vmatpush1.msra.mxu0 0.0
    %786 = vmatprep.subr.mxu0 0.0
    %787 = vmatpush1.msra.mxu0 0.0
    %788 = vmatprep.subr.mxu0 0.0
    %789 = vmatpush1.msra.mxu0 0.0
    %790 = vmatprep.subr.mxu0 0.0
    %791 = vmatpush1.msra.mxu0 0.0
    %792 = vmatprep.subr.mxu0 0.0
    %793 = vmatpush1.msra.mxu0 0.0
    %794 = vmatprep.subr.mxu0 0.0
    %795 = vmatpush1.msra.mxu0 0.0
    %796 = vmatprep.subr.mxu0 0.0
    %797 = vmatpush1.msra.mxu0 0.0
    %798 = vmatprep.subr.mxu0 0.0
    %799 = vmatpush1.msra.mxu0 0.0
    %800 = vmatprep.subr.mxu0 0.0
    %801 = vmatpush1.msra.mxu0 0.0
    %802 = vmatprep.subr.mxu0 0.0
    %803 = vmatpush1.msra.mxu0 %v767
    %804 = vmatprep.subr.mxu0 0.0
    %805 = vmatpush2.msra.mxu0 0.0
    %806 = vmatprep.subr.mxu0 0.0
    %807 = vmatpush2.msra.mxu0 0.0
    %808 = vmatprep.subr.mxu0 0.0
    %809 = vmatpush2.msra.mxu0 0.0
    %810 = vmatprep.subr.mxu0 0.0
    %811 = vmatpush2.msra.mxu0 0.0
    %812 = vmatprep.subr.mxu0 0.0
    %813 = vmatpush2.msra.mxu0 0.0
    %814 = vmatprep.subr.mxu0 0.0
    %815 = vmatpush2.msra.mxu0 0.0
    %816 = vmatprep.subr.mxu0 0.0
    %817 = vmatpush2.msra.mxu0 0.0
    %818 = vmatprep.subr.mxu0 0.0
    %819 = vmatpush2.msra.mxu0 0.0
    %820 = vmatprep.subr.mxu0 0.0
    %821 = vmatpush2.msra.mxu0 0.0
    %822 = vmatprep.subr.mxu0 0.0
    %823 = vmatpush2.msra.mxu0 0.0
    %824 = vmatprep.subr.mxu0 0.0
    %825 = vmatpush2.msra.mxu0 0.0
    %826 = vmatprep.subr.mxu0 0.0
    %827 = vmatpush2.msra.mxu0 0.0
    %828 = vmatprep.subr.mxu0 0.0
    %829 = vmatpush2.msra.mxu0 0.0
    %830 = vmatprep.subr.mxu0 0.0
    %831 = vmatpush2.msra.mxu0 0.0
    %832 = vmatprep.subr.mxu0 0.0
    %833 = vmatpush2.msra.mxu0 0.0
    %834 = vmatprep.subr.mxu0 0.0
    %835 = vmatpush2.msra.mxu0 0.0
    %836 = vmatprep.mubr.f32.mxu0 0.0
    %837 = vmatmul.mubr.f32.gmra.mxu0 %v770
    %v838 = vpop.f32.mrf.mxu0
    %v839 = vadd.f32 0.0, %v838
    %v840 = vpop.f32.mrf.mxu0
    %841 = vdwg.mxu0
    %842 = vrot.lane.b32.xlu0 %v252, 56
    %v843 = vpop.permute.xlu0 %842
    %v846 = vsel %vm260, %v765, 0
    %848 = vmatprep.subr.mxu0 0.0
    %849 = vmatpush1.msra.mxu0 0.0
    %850 = vmatprep.subr.mxu0 0.0
    %851 = vmatpush1.msra.mxu0 0.0
    %852 = vmatprep.subr.mxu0 0.0
    %853 = vmatpush1.msra.mxu0 0.0
    %854 = vmatprep.subr.mxu0 0.0
    %855 = vmatpush1.msra.mxu0 0.0
    %856 = vmatprep.subr.mxu0 0.0
    %857 = vmatpush1.msra.mxu0 0.0
    %858 = vmatprep.subr.mxu0 0.0
    %859 = vmatpush1.msra.mxu0 0.0
    %860 = vmatprep.subr.mxu0 0.0
    %861 = vmatpush1.msra.mxu0 0.0
    %862 = vmatprep.subr.mxu0 0.0
    %863 = vmatpush1.msra.mxu0 0.0
    %864 = vmatprep.subr.mxu0 0.0
    %865 = vmatpush1.msra.mxu0 0.0
    %866 = vmatprep.subr.mxu0 0.0
    %867 = vmatpush1.msra.mxu0 0.0
    %868 = vmatprep.subr.mxu0 0.0
    %869 = vmatpush1.msra.mxu0 0.0
    %870 = vmatprep.subr.mxu0 0.0
    %871 = vmatpush1.msra.mxu0 0.0
    %872 = vmatprep.subr.mxu0 0.0
    %873 = vmatpush1.msra.mxu0 0.0
    %874 = vmatprep.subr.mxu0 0.0
    %875 = vmatpush1.msra.mxu0 0.0
    %876 = vmatprep.subr.mxu0 0.0
    %877 = vmatpush1.msra.mxu0 0.0
    %878 = vmatprep.subr.mxu0 0.0
    %879 = vmatpush1.msra.mxu0 %v843
    %880 = vmatprep.subr.mxu0 0.0
    %881 = vmatpush2.msra.mxu0 0.0
    %882 = vmatprep.subr.mxu0 0.0
    %883 = vmatpush2.msra.mxu0 0.0
    %884 = vmatprep.subr.mxu0 0.0
    %885 = vmatpush2.msra.mxu0 0.0
    %886 = vmatprep.subr.mxu0 0.0
    %887 = vmatpush2.msra.mxu0 0.0
    %888 = vmatprep.subr.mxu0 0.0
    %889 = vmatpush2.msra.mxu0 0.0
    %890 = vmatprep.subr.mxu0 0.0
    %891 = vmatpush2.msra.mxu0 0.0
    %892 = vmatprep.subr.mxu0 0.0
    %893 = vmatpush2.msra.mxu0 0.0
    %894 = vmatprep.subr.mxu0 0.0
    %895 = vmatpush2.msra.mxu0 0.0
    %896 = vmatprep.subr.mxu0 0.0
    %897 = vmatpush2.msra.mxu0 0.0
    %898 = vmatprep.subr.mxu0 0.0
    %899 = vmatpush2.msra.mxu0 0.0
    %900 = vmatprep.subr.mxu0 0.0
    %901 = vmatpush2.msra.mxu0 0.0
    %902 = vmatprep.subr.mxu0 0.0
    %903 = vmatpush2.msra.mxu0 0.0
    %904 = vmatprep.subr.mxu0 0.0
    %905 = vmatpush2.msra.mxu0 0.0
    %906 = vmatprep.subr.mxu0 0.0
    %907 = vmatpush2.msra.mxu0 0.0
    %908 = vmatprep.subr.mxu0 0.0
    %909 = vmatpush2.msra.mxu0 0.0
    %910 = vmatprep.subr.mxu0 0.0
    %911 = vmatpush2.msra.mxu0 0.0
    %912 = vmatprep.mubr.f32.mxu0 0.0
    %913 = vmatmul.mubr.f32.gmra.mxu0 %v846
    %v914 = vpop.f32.mrf.mxu0
    %v915 = vadd.f32 0.0, %v914
    %v916 = vpop.f32.mrf.mxu0
    %917 = vdwg.mxu0
    %v919 = vsel %vm260, %v839, 0
    %v922 = vsel %vm260, %v915, 0
    %924 = vmatprep.subr.mxu0 0.0
    %925 = vmatpush1.msra.mxu0 0.0
    %926 = vmatprep.subr.mxu0 0.0
    %927 = vmatpush1.msra.mxu0 0.0
    %928 = vmatprep.subr.mxu0 0.0
    %929 = vmatpush1.msra.mxu0 0.0
    %930 = vmatprep.subr.mxu0 0.0
    %931 = vmatpush1.msra.mxu0 0.0
    %932 = vmatprep.subr.mxu0 0.0
    %933 = vmatpush1.msra.mxu0 0.0
    %934 = vmatprep.subr.mxu0 0.0
    %935 = vmatpush1.msra.mxu0 0.0
    %936 = vmatprep.subr.mxu0 0.0
    %937 = vmatpush1.msra.mxu0 0.0
    %938 = vmatprep.subr.mxu0 0.0
    %939 = vmatpush1.msra.mxu0 0.0
    %940 = vmatprep.subr.mxu0 0.0
    %941 = vmatpush1.msra.mxu0 0.0
    %942 = vmatprep.subr.mxu0 0.0
    %943 = vmatpush1.msra.mxu0 0.0
    %944 = vmatprep.subr.mxu0 0.0
    %945 = vmatpush1.msra.mxu0 0.0
    %946 = vmatprep.subr.mxu0 0.0
    %947 = vmatpush1.msra.mxu0 0.0
    %948 = vmatprep.subr.mxu0 0.0
    %949 = vmatpush1.msra.mxu0 0.0
    %950 = vmatprep.subr.mxu0 0.0
    %951 = vmatpush1.msra.mxu0 0.0
    %952 = vmatprep.subr.mxu0 0.0
    %953 = vmatpush1.msra.mxu0 0.0
    %954 = vmatprep.subr.mxu0 0.0
    %955 = vmatpush1.msra.mxu0 %v164
    %956 = vmatprep.subr.mxu0 0.0
    %957 = vmatpush2.msra.mxu0 0.0
    %958 = vmatprep.subr.mxu0 0.0
    %959 = vmatpush2.msra.mxu0 0.0
    %960 = vmatprep.subr.mxu0 0.0
    %961 = vmatpush2.msra.mxu0 0.0
    %962 = vmatprep.subr.mxu0 0.0
    %963 = vmatpush2.msra.mxu0 0.0
    %964 = vmatprep.subr.mxu0 0.0
    %965 = vmatpush2.msra.mxu0 0.0
    %966 = vmatprep.subr.mxu0 0.0
    %967 = vmatpush2.msra.mxu0 0.0
    %968 = vmatprep.subr.mxu0 0.0
    %969 = vmatpush2.msra.mxu0 0.0
    %970 = vmatprep.subr.mxu0 0.0
    %971 = vmatpush2.msra.mxu0 0.0
    %972 = vmatprep.subr.mxu0 0.0
    %973 = vmatpush2.msra.mxu0 0.0
    %974 = vmatprep.subr.mxu0 0.0
    %975 = vmatpush2.msra.mxu0 0.0
    %976 = vmatprep.subr.mxu0 0.0
    %977 = vmatpush2.msra.mxu0 0.0
    %978 = vmatprep.subr.mxu0 0.0
    %979 = vmatpush2.msra.mxu0 0.0
    %980 = vmatprep.subr.mxu0 0.0
    %981 = vmatpush2.msra.mxu0 0.0
    %982 = vmatprep.subr.mxu0 0.0
    %983 = vmatpush2.msra.mxu0 0.0
    %984 = vmatprep.subr.mxu0 0.0
    %985 = vmatpush2.msra.mxu0 0.0
    %986 = vmatprep.subr.mxu0 0.0
    %987 = vmatpush2.msra.mxu0 0.0
    %988 = vmatprep.mubr.f32.mxu0 0.0
    %989 = vmatmul.mubr.f32.gmra.mxu0 %v919
    %v990 = vpop.f32.mrf.mxu0
    %v991 = vadd.f32 0.0, %v990
    %v992 = vpop.f32.mrf.mxu0
    %993 = vmatprep.mubr.f32.mxu0 0.0
    %994 = vmatmul.mubr.f32.gmra.mxu0 %v922
    %v995 = vpop.f32.mrf.mxu0
    %v996 = vadd.f32 0.0, %v995
    %v997 = vpop.f32.mrf.mxu0
    %998 = vdwg.mxu0
    %v1000 = vsel %vm260, %v509, 0
    %v1003 = vsel %vm260, %v585, 0
    %1005 = vmatprep.subr.mxu0 0.0
    %1006 = vmatpush1.msra.mxu0 0.0
    %1007 = vmatprep.subr.mxu0 0.0
    %1008 = vmatpush1.msra.mxu0 0.0
    %1009 = vmatprep.subr.mxu0 0.0
    %1010 = vmatpush1.msra.mxu0 0.0
    %1011 = vmatprep.subr.mxu0 0.0
    %1012 = vmatpush1.msra.mxu0 0.0
    %1013 = vmatprep.subr.mxu0 0.0
    %1014 = vmatpush1.msra.mxu0 0.0
    %1015 = vmatprep.subr.mxu0 0.0
    %1016 = vmatpush1.msra.mxu0 0.0
    %1017 = vmatprep.subr.mxu0 0.0
    %1018 = vmatpush1.msra.mxu0 0.0
    %1019 = vmatprep.subr.mxu0 0.0
    %1020 = vmatpush1.msra.mxu0 0.0
    %1021 = vmatprep.subr.mxu0 0.0
    %1022 = vmatpush1.msra.mxu0 0.0
    %1023 = vmatprep.subr.mxu0 0.0
    %1024 = vmatpush1.msra.mxu0 0.0
    %1025 = vmatprep.subr.mxu0 0.0
    %1026 = vmatpush1.msra.mxu0 0.0
    %1027 = vmatprep.subr.mxu0 0.0
    %1028 = vmatpush1.msra.mxu0 0.0
    %1029 = vmatprep.subr.mxu0 0.0
    %1030 = vmatpush1.msra.mxu0 0.0
    %1031 = vmatprep.subr.mxu0 0.0
    %1032 = vmatpush1.msra.mxu0 0.0
    %1033 = vmatprep.subr.mxu0 0.0
    %1034 = vmatpush1.msra.mxu0 0.0
    %1035 = vmatprep.subr.mxu0 0.0
    %1036 = vmatpush1.msra.mxu0 %v163
    %1037 = vmatprep.subr.mxu0 0.0
    %1038 = vmatpush2.msra.mxu0 0.0
    %1039 = vmatprep.subr.mxu0 0.0
    %1040 = vmatpush2.msra.mxu0 0.0
    %1041 = vmatprep.subr.mxu0 0.0
    %1042 = vmatpush2.msra.mxu0 0.0
    %1043 = vmatprep.subr.mxu0 0.0
    %1044 = vmatpush2.msra.mxu0 0.0
    %1045 = vmatprep.subr.mxu0 0.0
    %1046 = vmatpush2.msra.mxu0 0.0
    %1047 = vmatprep.subr.mxu0 0.0
    %1048 = vmatpush2.msra.mxu0 0.0
    %1049 = vmatprep.subr.mxu0 0.0
    %1050 = vmatpush2.msra.mxu0 0.0
    %1051 = vmatprep.subr.mxu0 0.0
    %1052 = vmatpush2.msra.mxu0 0.0
    %1053 = vmatprep.subr.mxu0 0.0
    %1054 = vmatpush2.msra.mxu0 0.0
    %1055 = vmatprep.subr.mxu0 0.0
    %1056 = vmatpush2.msra.mxu0 0.0
    %1057 = vmatprep.subr.mxu0 0.0
    %1058 = vmatpush2.msra.mxu0 0.0
    %1059 = vmatprep.subr.mxu0 0.0
    %1060 = vmatpush2.msra.mxu0 0.0
    %1061 = vmatprep.subr.mxu0 0.0
    %1062 = vmatpush2.msra.mxu0 0.0
    %1063 = vmatprep.subr.mxu0 0.0
    %1064 = vmatpush2.msra.mxu0 0.0
    %1065 = vmatprep.subr.mxu0 0.0
    %1066 = vmatpush2.msra.mxu0 0.0
    %1067 = vmatprep.subr.mxu0 0.0
    %1068 = vmatpush2.msra.mxu0 0.0
    %1069 = vmatprep.mubr.f32.mxu0 0.0
    %1070 = vmatmul.mubr.f32.gmra.mxu0 %v1000
    %v1071 = vpop.f32.mrf.mxu0
    %v1072 = vadd.f32 %v991, %v1071
    %v1073 = vpop.f32.mrf.mxu0
    %1074 = vmatprep.mubr.f32.mxu0 0.0
    %1075 = vmatmul.mubr.f32.gmra.mxu0 %v1003
    %v1076 = vpop.f32.mrf.mxu0
    %v1077 = vadd.f32 %v996, %v1076
    %v1078 = vpop.f32.mrf.mxu0
    %1079 = vdwg.mxu0
    %1080 = vrot.lane.b32.xlu0 %v255, 112
    %v1081 = vpop.permute.xlu0 %1080
    %1082 = vrot.lane.b32.xlu0 %v247, 80
    %v1083 = vpop.permute.xlu0 %1082
    %v1084 = vsel %vm260, %v1081, 0
    %v1086 = vsel %vm260, %v1083, 0
    %1088 = vmatprep.subr.mxu0 0.0
    %1089 = vmatpush1.xpose.msra.mxu0 0.0
    %1090 = vmatprep.subr.mxu0 0.0
    %1091 = vmatpush1.xpose.msra.mxu0 0.0
    %1092 = vmatprep.subr.mxu0 0.0
    %1093 = vmatpush1.xpose.msra.mxu0 0.0
    %1094 = vmatprep.subr.mxu0 0.0
    %1095 = vmatpush1.xpose.msra.mxu0 0.0
    %1096 = vmatprep.subr.mxu0 0.0
    %1097 = vmatpush1.xpose.msra.mxu0 0.0
    %1098 = vmatprep.subr.mxu0 0.0
    %1099 = vmatpush1.xpose.msra.mxu0 0.0
    %1100 = vmatprep.subr.mxu0 0.0
    %1101 = vmatpush1.xpose.msra.mxu0 0.0
    %1102 = vmatprep.subr.mxu0 0.0
    %1103 = vmatpush1.xpose.msra.mxu0 0.0
    %1104 = vmatprep.subr.mxu0 0.0
    %1105 = vmatpush1.xpose.msra.mxu0 0.0
    %1106 = vmatprep.subr.mxu0 0.0
    %1107 = vmatpush1.xpose.msra.mxu0 0.0
    %1108 = vmatprep.subr.mxu0 0.0
    %1109 = vmatpush1.xpose.msra.mxu0 0.0
    %1110 = vmatprep.subr.mxu0 0.0
    %1111 = vmatpush1.xpose.msra.mxu0 0.0
    %1112 = vmatprep.subr.mxu0 0.0
    %1113 = vmatpush1.xpose.msra.mxu0 0.0
    %1114 = vmatprep.subr.mxu0 0.0
    %1115 = vmatpush1.xpose.msra.mxu0 0.0
    %1116 = vmatprep.subr.mxu0 0.0
    %1117 = vmatpush1.xpose.msra.mxu0 0.0
    %1118 = vmatprep.subr.mxu0 0.0
    %1119 = vmatpush1.xpose.msra.mxu0 %v1086
    %1120 = vmatprep.subr.mxu0 0.0
    %1121 = vmatpush2.xpose.msra.mxu0 0.0
    %1122 = vmatprep.subr.mxu0 0.0
    %1123 = vmatpush2.xpose.msra.mxu0 0.0
    %1124 = vmatprep.subr.mxu0 0.0
    %1125 = vmatpush2.xpose.msra.mxu0 0.0
    %1126 = vmatprep.subr.mxu0 0.0
    %1127 = vmatpush2.xpose.msra.mxu0 0.0
    %1128 = vmatprep.subr.mxu0 0.0
    %1129 = vmatpush2.xpose.msra.mxu0 0.0
    %1130 = vmatprep.subr.mxu0 0.0
    %1131 = vmatpush2.xpose.msra.mxu0 0.0
    %1132 = vmatprep.subr.mxu0 0.0
    %1133 = vmatpush2.xpose.msra.mxu0 0.0
    %1134 = vmatprep.subr.mxu0 0.0
    %1135 = vmatpush2.xpose.msra.mxu0 0.0
    %1136 = vmatprep.subr.mxu0 0.0
    %1137 = vmatpush2.xpose.msra.mxu0 0.0
    %1138 = vmatprep.subr.mxu0 0.0
    %1139 = vmatpush2.xpose.msra.mxu0 0.0
    %1140 = vmatprep.subr.mxu0 0.0
    %1141 = vmatpush2.xpose.msra.mxu0 0.0
    %1142 = vmatprep.subr.mxu0 0.0
    %1143 = vmatpush2.xpose.msra.mxu0 0.0
    %1144 = vmatprep.subr.mxu0 0.0
    %1145 = vmatpush2.xpose.msra.mxu0 0.0
    %1146 = vmatprep.subr.mxu0 0.0
    %1147 = vmatpush2.xpose.msra.mxu0 0.0
    %1148 = vmatprep.subr.mxu0 0.0
    %1149 = vmatpush2.xpose.msra.mxu0 0.0
    %1150 = vmatprep.subr.mxu0 0.0
    %1151 = vmatpush2.xpose.msra.mxu0 0.0
    %1152 = vmatprep.mubr.f32.mxu0 0.0
    %1153 = vmatmul.mubr.f32.gmra.mxu0 %v1084
    %v1154 = vpop.f32.mrf.mxu0
    %v1155 = vadd.f32 %v111, %v1154
    %v1156 = vpop.f32.mrf.mxu0
    %1157 = vdwg.mxu0
    %1158 = vrot.lane.b32.xlu0 %v256, 112
    %v1159 = vpop.permute.xlu0 %1158
    %1160 = vrot.lane.b32.xlu0 %v252, 80
    %v1161 = vpop.permute.xlu0 %1160
    %v1162 = vsel %vm260, %v1159, 0
    %v1164 = vsel %vm260, %v1161, 0
    %1166 = vmatprep.subr.mxu0 0.0
    %1167 = vmatpush1.xpose.msra.mxu0 0.0
    %1168 = vmatprep.subr.mxu0 0.0
    %1169 = vmatpush1.xpose.msra.mxu0 0.0
    %1170 = vmatprep.subr.mxu0 0.0
    %1171 = vmatpush1.xpose.msra.mxu0 0.0
    %1172 = vmatprep.subr.mxu0 0.0
    %1173 = vmatpush1.xpose.msra.mxu0 0.0
    %1174 = vmatprep.subr.mxu0 0.0
    %1175 = vmatpush1.xpose.msra.mxu0 0.0
    %1176 = vmatprep.subr.mxu0 0.0
    %1177 = vmatpush1.xpose.msra.mxu0 0.0
    %1178 = vmatprep.subr.mxu0 0.0
    %1179 = vmatpush1.xpose.msra.mxu0 0.0
    %1180 = vmatprep.subr.mxu0 0.0
    %1181 = vmatpush1.xpose.msra.mxu0 0.0
    %1182 = vmatprep.subr.mxu0 0.0
    %1183 = vmatpush1.xpose.msra.mxu0 0.0
    %1184 = vmatprep.subr.mxu0 0.0
    %1185 = vmatpush1.xpose.msra.mxu0 0.0
    %1186 = vmatprep.subr.mxu0 0.0
    %1187 = vmatpush1.xpose.msra.mxu0 0.0
    %1188 = vmatprep.subr.mxu0 0.0
    %1189 = vmatpush1.xpose.msra.mxu0 0.0
    %1190 = vmatprep.subr.mxu0 0.0
    %1191 = vmatpush1.xpose.msra.mxu0 0.0
    %1192 = vmatprep.subr.mxu0 0.0
    %1193 = vmatpush1.xpose.msra.mxu0 0.0
    %1194 = vmatprep.subr.mxu0 0.0
    %1195 = vmatpush1.xpose.msra.mxu0 0.0
    %1196 = vmatprep.subr.mxu0 0.0
    %1197 = vmatpush1.xpose.msra.mxu0 %v1164
    %1198 = vmatprep.subr.mxu0 0.0
    %1199 = vmatpush2.xpose.msra.mxu0 0.0
    %1200 = vmatprep.subr.mxu0 0.0
    %1201 = vmatpush2.xpose.msra.mxu0 0.0
    %1202 = vmatprep.subr.mxu0 0.0
    %1203 = vmatpush2.xpose.msra.mxu0 0.0
    %1204 = vmatprep.subr.mxu0 0.0
    %1205 = vmatpush2.xpose.msra.mxu0 0.0
    %1206 = vmatprep.subr.mxu0 0.0
    %1207 = vmatpush2.xpose.msra.mxu0 0.0
    %1208 = vmatprep.subr.mxu0 0.0
    %1209 = vmatpush2.xpose.msra.mxu0 0.0
    %1210 = vmatprep.subr.mxu0 0.0
    %1211 = vmatpush2.xpose.msra.mxu0 0.0
    %1212 = vmatprep.subr.mxu0 0.0
    %1213 = vmatpush2.xpose.msra.mxu0 0.0
    %1214 = vmatprep.subr.mxu0 0.0
    %1215 = vmatpush2.xpose.msra.mxu0 0.0
    %1216 = vmatprep.subr.mxu0 0.0
    %1217 = vmatpush2.xpose.msra.mxu0 0.0
    %1218 = vmatprep.subr.mxu0 0.0
    %1219 = vmatpush2.xpose.msra.mxu0 0.0
    %1220 = vmatprep.subr.mxu0 0.0
    %1221 = vmatpush2.xpose.msra.mxu0 0.0
    %1222 = vmatprep.subr.mxu0 0.0
    %1223 = vmatpush2.xpose.msra.mxu0 0.0
    %1224 = vmatprep.subr.mxu0 0.0
    %1225 = vmatpush2.xpose.msra.mxu0 0.0
    %1226 = vmatprep.subr.mxu0 0.0
    %1227 = vmatpush2.xpose.msra.mxu0 0.0
    %1228 = vmatprep.subr.mxu0 0.0
    %1229 = vmatpush2.xpose.msra.mxu0 0.0
    %1230 = vmatprep.mubr.f32.mxu0 0.0
    %1231 = vmatmul.mubr.f32.gmra.mxu0 %v1162
    %v1232 = vpop.f32.mrf.mxu0
    %v1233 = vadd.f32 %v111, %v1232
    %v1234 = vpop.f32.mrf.mxu0
    %1235 = vdwg.mxu0
    %v1236 = vsel %vm260, %v1155, -inf
    %1237 = vmax.xlane.f32.xlu0 %v1236
    %v1238 = vpop.xlane.xlu0 %1237
    %v1239 = vsel %vm260, %v1233, -inf
    %1240 = vmax.xlane.f32.xlu0 %v1239
    %v1241 = vpop.xlane.xlu0 %1240
    %v1242 = vsub.f32 %v1155, %v1238
    %v1243 = vsub.f32 %v1233, %v1241
    %v1244 = vmul.f32 %v1242, 1.442695
    %v1245 = vpow.pop %v1244
    %v1246 = vmul.f32 %v1243, 1.442695
    %v1247 = vpow.pop %v1246
    %v1248 = vsel %vm260, %v1245, 0.0
    %1249 = vadd.xlane.f32.xlu0 %v1248
    %v1250 = vpop.xlane.xlu0 %1249
    %v1251 = vsel %vm260, %v1247, 0.0
    %1252 = vadd.xlane.f32.xlu0 %v1251
    %v1253 = vpop.xlane.xlu0 %1252
    %v1254 = vrcp.pop %v1250
    %v1255 = vrcp.pop %v1253
    %v1256 = vmul.f32 %v1245, %v1254
    %v1257 = vmul.f32 %v1247, %v1255
    %1258 = vrot.lane.b32.xlu0 %v247, 48
    %v1259 = vpop.permute.xlu0 %1258
    %v1262 = vsel %vm260, %v1256, 0
    %1264 = vmatprep.subr.mxu0 0.0
    %1265 = vmatpush1.msra.mxu0 0.0
    %1266 = vmatprep.subr.mxu0 0.0
    %1267 = vmatpush1.msra.mxu0 0.0
    %1268 = vmatprep.subr.mxu0 0.0
    %1269 = vmatpush1.msra.mxu0 0.0
    %1270 = vmatprep.subr.mxu0 0.0
    %1271 = vmatpush1.msra.mxu0 0.0
    %1272 = vmatprep.subr.mxu0 0.0
    %1273 = vmatpush1.msra.mxu0 0.0
    %1274 = vmatprep.subr.mxu0 0.0
    %1275 = vmatpush1.msra.mxu0 0.0
    %1276 = vmatprep.subr.mxu0 0.0
    %1277 = vmatpush1.msra.mxu0 0.0
    %1278 = vmatprep.subr.mxu0 0.0
    %1279 = vmatpush1.msra.mxu0 0.0
    %1280 = vmatprep.subr.mxu0 0.0
    %1281 = vmatpush1.msra.mxu0 0.0
    %1282 = vmatprep.subr.mxu0 0.0
    %1283 = vmatpush1.msra.mxu0 0.0
    %1284 = vmatprep.subr.mxu0 0.0
    %1285 = vmatpush1.msra.mxu0 0.0
    %1286 = vmatprep.subr.mxu0 0.0
    %1287 = vmatpush1.msra.mxu0 0.0
    %1288 = vmatprep.subr.mxu0 0.0
    %1289 = vmatpush1.msra.mxu0 0.0
    %1290 = vmatprep.subr.mxu0 0.0
    %1291 = vmatpush1.msra.mxu0 0.0
    %1292 = vmatprep.subr.mxu0 0.0
    %1293 = vmatpush1.msra.mxu0 0.0
    %1294 = vmatprep.subr.mxu0 0.0
    %1295 = vmatpush1.msra.mxu0 %v1259
    %1296 = vmatprep.subr.mxu0 0.0
    %1297 = vmatpush2.msra.mxu0 0.0
    %1298 = vmatprep.subr.mxu0 0.0
    %1299 = vmatpush2.msra.mxu0 0.0
    %1300 = vmatprep.subr.mxu0 0.0
    %1301 = vmatpush2.msra.mxu0 0.0
    %1302 = vmatprep.subr.mxu0 0.0
    %1303 = vmatpush2.msra.mxu0 0.0
    %1304 = vmatprep.subr.mxu0 0.0
    %1305 = vmatpush2.msra.mxu0 0.0
    %1306 = vmatprep.subr.mxu0 0.0
    %1307 = vmatpush2.msra.mxu0 0.0
    %1308 = vmatprep.subr.mxu0 0.0
    %1309 = vmatpush2.msra.mxu0 0.0
    %1310 = vmatprep.subr.mxu0 0.0
    %1311 = vmatpush2.msra.mxu0 0.0
    %1312 = vmatprep.subr.mxu0 0.0
    %1313 = vmatpush2.msra.mxu0 0.0
    %1314 = vmatprep.subr.mxu0 0.0
    %1315 = vmatpush2.msra.mxu0 0.0
    %1316 = vmatprep.subr.mxu0 0.0
    %1317 = vmatpush2.msra.mxu0 0.0
    %1318 = vmatprep.subr.mxu0 0.0
    %1319 = vmatpush2.msra.mxu0 0.0
    %1320 = vmatprep.subr.mxu0 0.0
    %1321 = vmatpush2.msra.mxu0 0.0
    %1322 = vmatprep.subr.mxu0 0.0
    %1323 = vmatpush2.msra.mxu0 0.0
    %1324 = vmatprep.subr.mxu0 0.0
    %1325 = vmatpush2.msra.mxu0 0.0
    %1326 = vmatprep.subr.mxu0 0.0
    %1327 = vmatpush2.msra.mxu0 0.0
    %1328 = vmatprep.mubr.f32.mxu0 0.0
    %1329 = vmatmul.mubr.f32.gmra.mxu0 %v1262
    %v1330 = vpop.f32.mrf.mxu0
    %v1331 = vadd.f32 0.0, %v1330
    %v1332 = vpop.f32.mrf.mxu0
    %1333 = vdwg.mxu0
    %1334 = vrot.lane.b32.xlu0 %v252, 48
    %v1335 = vpop.permute.xlu0 %1334
    %v1338 = vsel %vm260, %v1257, 0
    %1340 = vmatprep.subr.mxu0 0.0
    %1341 = vmatpush1.msra.mxu0 0.0
    %1342 = vmatprep.subr.mxu0 0.0
    %1343 = vmatpush1.msra.mxu0 0.0
    %1344 = vmatprep.subr.mxu0 0.0
    %1345 = vmatpush1.msra.mxu0 0.0
    %1346 = vmatprep.subr.mxu0 0.0
    %1347 = vmatpush1.msra.mxu0 0.0
    %1348 = vmatprep.subr.mxu0 0.0
    %1349 = vmatpush1.msra.mxu0 0.0
    %1350 = vmatprep.subr.mxu0 0.0
    %1351 = vmatpush1.msra.mxu0 0.0
    %1352 = vmatprep.subr.mxu0 0.0
    %1353 = vmatpush1.msra.mxu0 0.0
    %1354 = vmatprep.subr.mxu0 0.0
    %1355 = vmatpush1.msra.mxu0 0.0
    %1356 = vmatprep.subr.mxu0 0.0
    %1357 = vmatpush1.msra.mxu0 0.0
    %1358 = vmatprep.subr.mxu0 0.0
    %1359 = vmatpush1.msra.mxu0 0.0
    %1360 = vmatprep.subr.mxu0 0.0
    %1361 = vmatpush1.msra.mxu0 0.0
    %1362 = vmatprep.subr.mxu0 0.0
    %1363 = vmatpush1.msra.mxu0 0.0
    %1364 = vmatprep.subr.mxu0 0.0
    %1365 = vmatpush1.msra.mxu0 0.0
    %1366 = vmatprep.subr.mxu0 0.0
    %1367 = vmatpush1.msra.mxu0 0.0
    %1368 = vmatprep.subr.mxu0 0.0
    %1369 = vmatpush1.msra.mxu0 0.0
    %1370 = vmatprep.subr.mxu0 0.0
    %1371 = vmatpush1.msra.mxu0 %v1335
    %1372 = vmatprep.subr.mxu0 0.0
    %1373 = vmatpush2.msra.mxu0 0.0
    %1374 = vmatprep.subr.mxu0 0.0
    %1375 = vmatpush2.msra.mxu0 0.0
    %1376 = vmatprep.subr.mxu0 0.0
    %1377 = vmatpush2.msra.mxu0 0.0
    %1378 = vmatprep.subr.mxu0 0.0
    %1379 = vmatpush2.msra.mxu0 0.0
    %1380 = vmatprep.subr.mxu0 0.0
    %1381 = vmatpush2.msra.mxu0 0.0
    %1382 = vmatprep.subr.mxu0 0.0
    %1383 = vmatpush2.msra.mxu0 0.0
    %1384 = vmatprep.subr.mxu0 0.0
    %1385 = vmatpush2.msra.mxu0 0.0
    %1386 = vmatprep.subr.mxu0 0.0
    %1387 = vmatpush2.msra.mxu0 0.0
    %1388 = vmatprep.subr.mxu0 0.0
    %1389 = vmatpush2.msra.mxu0 0.0
    %1390 = vmatprep.subr.mxu0 0.0
    %1391 = vmatpush2.msra.mxu0 0.0
    %1392 = vmatprep.subr.mxu0 0.0
    %1393 = vmatpush2.msra.mxu0 0.0
    %1394 = vmatprep.subr.mxu0 0.0
    %1395 = vmatpush2.msra.mxu0 0.0
    %1396 = vmatprep.subr.mxu0 0.0
    %1397 = vmatpush2.msra.mxu0 0.0
    %1398 = vmatprep.subr.mxu0 0.0
    %1399 = vmatpush2.msra.mxu0 0.0
    %1400 = vmatprep.subr.mxu0 0.0
    %1401 = vmatpush2.msra.mxu0 0.0
    %1402 = vmatprep.subr.mxu0 0.0
    %1403 = vmatpush2.msra.mxu0 0.0
    %1404 = vmatprep.mubr.f32.mxu0 0.0
    %1405 = vmatmul.mubr.f32.gmra.mxu0 %v1338
    %v1406 = vpop.f32.mrf.mxu0
    %v1407 = vadd.f32 0.0, %v1406
    %v1408 = vpop.f32.mrf.mxu0
    %1409 = vdwg.mxu0
    %v1411 = vsel %vm260, %v1331, 0
    %v1414 = vsel %vm260, %v1407, 0
    %1416 = vmatprep.subr.mxu0 0.0
    %1417 = vmatpush1.msra.mxu0 0.0
    %1418 = vmatprep.subr.mxu0 0.0
    %1419 = vmatpush1.msra.mxu0 0.0
    %1420 = vmatprep.subr.mxu0 0.0
    %1421 = vmatpush1.msra.mxu0 0.0
    %1422 = vmatprep.subr.mxu0 0.0
    %1423 = vmatpush1.msra.mxu0 0.0
    %1424 = vmatprep.subr.mxu0 0.0
    %1425 = vmatpush1.msra.mxu0 0.0
    %1426 = vmatprep.subr.mxu0 0.0
    %1427 = vmatpush1.msra.mxu0 0.0
    %1428 = vmatprep.subr.mxu0 0.0
    %1429 = vmatpush1.msra.mxu0 0.0
    %1430 = vmatprep.subr.mxu0 0.0
    %1431 = vmatpush1.msra.mxu0 0.0
    %1432 = vmatprep.subr.mxu0 0.0
    %1433 = vmatpush1.msra.mxu0 0.0
    %1434 = vmatprep.subr.mxu0 0.0
    %1435 = vmatpush1.msra.mxu0 0.0
    %1436 = vmatprep.subr.mxu0 0.0
    %1437 = vmatpush1.msra.mxu0 0.0
    %1438 = vmatprep.subr.mxu0 0.0
    %1439 = vmatpush1.msra.mxu0 0.0
    %1440 = vmatprep.subr.mxu0 0.0
    %1441 = vmatpush1.msra.mxu0 0.0
    %1442 = vmatprep.subr.mxu0 0.0
    %1443 = vmatpush1.msra.mxu0 0.0
    %1444 = vmatprep.subr.mxu0 0.0
    %1445 = vmatpush1.msra.mxu0 0.0
    %1446 = vmatprep.subr.mxu0 0.0
    %1447 = vmatpush1.msra.mxu0 %v165
    %1448 = vmatprep.subr.mxu0 0.0
    %1449 = vmatpush2.msra.mxu0 0.0
    %1450 = vmatprep.subr.mxu0 0.0
    %1451 = vmatpush2.msra.mxu0 0.0
    %1452 = vmatprep.subr.mxu0 0.0
    %1453 = vmatpush2.msra.mxu0 0.0
    %1454 = vmatprep.subr.mxu0 0.0
    %1455 = vmatpush2.msra.mxu0 0.0
    %1456 = vmatprep.subr.mxu0 0.0
    %1457 = vmatpush2.msra.mxu0 0.0
    %1458 = vmatprep.subr.mxu0 0.0
    %1459 = vmatpush2.msra.mxu0 0.0
    %1460 = vmatprep.subr.mxu0 0.0
    %1461 = vmatpush2.msra.mxu0 0.0
    %1462 = vmatprep.subr.mxu0 0.0
    %1463 = vmatpush2.msra.mxu0 0.0
    %1464 = vmatprep.subr.mxu0 0.0
    %1465 = vmatpush2.msra.mxu0 0.0
    %1466 = vmatprep.subr.mxu0 0.0
    %1467 = vmatpush2.msra.mxu0 0.0
    %1468 = vmatprep.subr.mxu0 0.0
    %1469 = vmatpush2.msra.mxu0 0.0
    %1470 = vmatprep.subr.mxu0 0.0
    %1471 = vmatpush2.msra.mxu0 0.0
    %1472 = vmatprep.subr.mxu0 0.0
    %1473 = vmatpush2.msra.mxu0 0.0
    %1474 = vmatprep.subr.mxu0 0.0
    %1475 = vmatpush2.msra.mxu0 0.0
    %1476 = vmatprep.subr.mxu0 0.0
    %1477 = vmatpush2.msra.mxu0 0.0
    %1478 = vmatprep.subr.mxu0 0.0
    %1479 = vmatpush2.msra.mxu0 0.0
    %1480 = vmatprep.mubr.f32.mxu0 0.0
    %1481 = vmatmul.mubr.f32.gmra.mxu0 %v1411
    %v1482 = vpop.f32.mrf.mxu0
    %v1483 = vadd.f32 0.0, %v1482
    %v1484 = vpop.f32.mrf.mxu0
    %1485 = vmatprep.mubr.f32.mxu0 0.0
    %1486 = vmatmul.mubr.f32.gmra.mxu0 %v1414
    %v1487 = vpop.f32.mrf.mxu0
    %v1488 = vadd.f32 0.0, %v1487
    %v1489 = vpop.f32.mrf.mxu0
    %1490 = vdwg.mxu0
    %v1491 = vadd.f32 %v1072, %v1483
    %v1492 = vadd.f32 %v1077, %v1488
    %1493 = vrot.lane.b32.xlu0 %v255, 104
    %v1494 = vpop.permute.xlu0 %1493
    %1495 = vrot.lane.b32.xlu0 %v247, 72
    %v1496 = vpop.permute.xlu0 %1495
    %v1497 = vsel %vm260, %v1494, 0
    %v1499 = vsel %vm260, %v1496, 0
    %1501 = vmatprep.subr.mxu0 0.0
    %1502 = vmatpush1.xpose.msra.mxu0 0.0
    %1503 = vmatprep.subr.mxu0 0.0
    %1504 = vmatpush1.xpose.msra.mxu0 0.0
    %1505 = vmatprep.subr.mxu0 0.0
    %1506 = vmatpush1.xpose.msra.mxu0 0.0
    %1507 = vmatprep.subr.mxu0 0.0
    %1508 = vmatpush1.xpose.msra.mxu0 0.0
    %1509 = vmatprep.subr.mxu0 0.0
    %1510 = vmatpush1.xpose.msra.mxu0 0.0
    %1511 = vmatprep.subr.mxu0 0.0
    %1512 = vmatpush1.xpose.msra.mxu0 0.0
    %1513 = vmatprep.subr.mxu0 0.0
    %1514 = vmatpush1.xpose.msra.mxu0 0.0
    %1515 = vmatprep.subr.mxu0 0.0
    %1516 = vmatpush1.xpose.msra.mxu0 0.0
    %1517 = vmatprep.subr.mxu0 0.0
    %1518 = vmatpush1.xpose.msra.mxu0 0.0
    %1519 = vmatprep.subr.mxu0 0.0
    %1520 = vmatpush1.xpose.msra.mxu0 0.0
    %1521 = vmatprep.subr.mxu0 0.0
    %1522 = vmatpush1.xpose.msra.mxu0 0.0
    %1523 = vmatprep.subr.mxu0 0.0
    %1524 = vmatpush1.xpose.msra.mxu0 0.0
    %1525 = vmatprep.subr.mxu0 0.0
    %1526 = vmatpush1.xpose.msra.mxu0 0.0
    %1527 = vmatprep.subr.mxu0 0.0
    %1528 = vmatpush1.xpose.msra.mxu0 0.0
    %1529 = vmatprep.subr.mxu0 0.0
    %1530 = vmatpush1.xpose.msra.mxu0 0.0
    %1531 = vmatprep.subr.mxu0 0.0
    %1532 = vmatpush1.xpose.msra.mxu0 %v1499
    %1533 = vmatprep.subr.mxu0 0.0
    %1534 = vmatpush2.xpose.msra.mxu0 0.0
    %1535 = vmatprep.subr.mxu0 0.0
    %1536 = vmatpush2.xpose.msra.mxu0 0.0
    %1537 = vmatprep.subr.mxu0 0.0
    %1538 = vmatpush2.xpose.msra.mxu0 0.0
    %1539 = vmatprep.subr.mxu0 0.0
    %1540 = vmatpush2.xpose.msra.mxu0 0.0
    %1541 = vmatprep.subr.mxu0 0.0
    %1542 = vmatpush2.xpose.msra.mxu0 0.0
    %1543 = vmatprep.subr.mxu0 0.0
    %1544 = vmatpush2.xpose.msra.mxu0 0.0
    %1545 = vmatprep.subr.mxu0 0.0
    %1546 = vmatpush2.xpose.msra.mxu0 0.0
    %1547 = vmatprep.subr.mxu0 0.0
    %1548 = vmatpush2.xpose.msra.mxu0 0.0
    %1549 = vmatprep.subr.mxu0 0.0
    %1550 = vmatpush2.xpose.msra.mxu0 0.0
    %1551 = vmatprep.subr.mxu0 0.0
    %1552 = vmatpush2.xpose.msra.mxu0 0.0
    %1553 = vmatprep.subr.mxu0 0.0
    %1554 = vmatpush2.xpose.msra.mxu0 0.0
    %1555 = vmatprep.subr.mxu0 0.0
    %1556 = vmatpush2.xpose.msra.mxu0 0.0
    %1557 = vmatprep.subr.mxu0 0.0
    %1558 = vmatpush2.xpose.msra.mxu0 0.0
    %1559 = vmatprep.subr.mxu0 0.0
    %1560 = vmatpush2.xpose.msra.mxu0 0.0
    %1561 = vmatprep.subr.mxu0 0.0
    %1562 = vmatpush2.xpose.msra.mxu0 0.0
    %1563 = vmatprep.subr.mxu0 0.0
    %1564 = vmatpush2.xpose.msra.mxu0 0.0
    %1565 = vmatprep.mubr.f32.mxu0 0.0
    %1566 = vmatmul.mubr.f32.gmra.mxu0 %v1497
    %v1567 = vpop.f32.mrf.mxu0
    %v1568 = vadd.f32 %v111, %v1567
    %v1569 = vpop.f32.mrf.mxu0
    %1570 = vdwg.mxu0
    %1571 = vrot.lane.b32.xlu0 %v256, 104
    %v1572 = vpop.permute.xlu0 %1571
    %1573 = vrot.lane.b32.xlu0 %v252, 72
    %v1574 = vpop.permute.xlu0 %1573
    %v1575 = vsel %vm260, %v1572, 0
    %v1577 = vsel %vm260, %v1574, 0
    %1579 = vmatprep.subr.mxu0 0.0
    %1580 = vmatpush1.xpose.msra.mxu0 0.0
    %1581 = vmatprep.subr.mxu0 0.0
    %1582 = vmatpush1.xpose.msra.mxu0 0.0
    %1583 = vmatprep.subr.mxu0 0.0
    %1584 = vmatpush1.xpose.msra.mxu0 0.0
    %1585 = vmatprep.subr.mxu0 0.0
    %1586 = vmatpush1.xpose.msra.mxu0 0.0
    %1587 = vmatprep.subr.mxu0 0.0
    %1588 = vmatpush1.xpose.msra.mxu0 0.0
    %1589 = vmatprep.subr.mxu0 0.0
    %1590 = vmatpush1.xpose.msra.mxu0 0.0
    %1591 = vmatprep.subr.mxu0 0.0
    %1592 = vmatpush1.xpose.msra.mxu0 0.0
    %1593 = vmatprep.subr.mxu0 0.0
    %1594 = vmatpush1.xpose.msra.mxu0 0.0
    %1595 = vmatprep.subr.mxu0 0.0
    %1596 = vmatpush1.xpose.msra.mxu0 0.0
    %1597 = vmatprep.subr.mxu0 0.0
    %1598 = vmatpush1.xpose.msra.mxu0 0.0
    %1599 = vmatprep.subr.mxu0 0.0
    %1600 = vmatpush1.xpose.msra.mxu0 0.0
    %1601 = vmatprep.subr.mxu0 0.0
    %1602 = vmatpush1.xpose.msra.mxu0 0.0
    %1603 = vmatprep.subr.mxu0 0.0
    %1604 = vmatpush1.xpose.msra.mxu0 0.0
    %1605 = vmatprep.subr.mxu0 0.0
    %1606 = vmatpush1.xpose.msra.mxu0 0.0
    %1607 = vmatprep.subr.mxu0 0.0
    %1608 = vmatpush1.xpose.msra.mxu0 0.0
    %1609 = vmatprep.subr.mxu0 0.0
    %1610 = vmatpush1.xpose.msra.mxu0 %v1577
    %1611 = vmatprep.subr.mxu0 0.0
    %1612 = vmatpush2.xpose.msra.mxu0 0.0
    %1613 = vmatprep.subr.mxu0 0.0
    %1614 = vmatpush2.xpose.msra.mxu0 0.0
    %1615 = vmatprep.subr.mxu0 0.0
    %1616 = vmatpush2.xpose.msra.mxu0 0.0
    %1617 = vmatprep.subr.mxu0 0.0
    %1618 = vmatpush2.xpose.msra.mxu0 0.0
    %1619 = vmatprep.subr.mxu0 0.0
    %1620 = vmatpush2.xpose.msra.mxu0 0.0
    %1621 = vmatprep.subr.mxu0 0.0
    %1622 = vmatpush2.xpose.msra.mxu0 0.0
    %1623 = vmatprep.subr.mxu0 0.0
    %1624 = vmatpush2.xpose.msra.mxu0 0.0
    %1625 = vmatprep.subr.mxu0 0.0
    %1626 = vmatpush2.xpose.msra.mxu0 0.0
    %1627 = vmatprep.subr.mxu0 0.0
    %1628 = vmatpush2.xpose.msra.mxu0 0.0
    %1629 = vmatprep.subr.mxu0 0.0
    %1630 = vmatpush2.xpose.msra.mxu0 0.0
    %1631 = vmatprep.subr.mxu0 0.0
    %1632 = vmatpush2.xpose.msra.mxu0 0.0
    %1633 = vmatprep.subr.mxu0 0.0
    %1634 = vmatpush2.xpose.msra.mxu0 0.0
    %1635 = vmatprep.subr.mxu0 0.0
    %1636 = vmatpush2.xpose.msra.mxu0 0.0
    %1637 = vmatprep.subr.mxu0 0.0
    %1638 = vmatpush2.xpose.msra.mxu0 0.0
    %1639 = vmatprep.subr.mxu0 0.0
    %1640 = vmatpush2.xpose.msra.mxu0 0.0
    %1641 = vmatprep.subr.mxu0 0.0
    %1642 = vmatpush2.xpose.msra.mxu0 0.0
    %1643 = vmatprep.mubr.f32.mxu0 0.0
    %1644 = vmatmul.mubr.f32.gmra.mxu0 %v1575
    %v1645 = vpop.f32.mrf.mxu0
    %v1646 = vadd.f32 %v111, %v1645
    %v1647 = vpop.f32.mrf.mxu0
    %1648 = vdwg.mxu0
    %v1649 = vsel %vm260, %v1568, -inf
    %1650 = vmax.xlane.f32.xlu0 %v1649
    %v1651 = vpop.xlane.xlu0 %1650
    %v1652 = vsel %vm260, %v1646, -inf
    %1653 = vmax.xlane.f32.xlu0 %v1652
    %v1654 = vpop.xlane.xlu0 %1653
    %v1655 = vsub.f32 %v1568, %v1651
    %v1656 = vsub.f32 %v1646, %v1654
    %v1657 = vmul.f32 %v1655, 1.442695
    %v1658 = vpow.pop %v1657
    %v1659 = vmul.f32 %v1656, 1.442695
    %v1660 = vpow.pop %v1659
    %v1661 = vsel %vm260, %v1658, 0.0
    %1662 = vadd.xlane.f32.xlu0 %v1661
    %v1663 = vpop.xlane.xlu0 %1662
    %v1664 = vsel %vm260, %v1660, 0.0
    %1665 = vadd.xlane.f32.xlu0 %v1664
    %v1666 = vpop.xlane.xlu0 %1665
    %v1667 = vrcp.pop %v1663
    %v1668 = vrcp.pop %v1666
    %v1669 = vmul.f32 %v1658, %v1667
    %v1670 = vmul.f32 %v1660, %v1668
    %1671 = vrot.lane.b32.xlu0 %v247, 40
    %v1672 = vpop.permute.xlu0 %1671
    %v1675 = vsel %vm260, %v1669, 0
    %1677 = vmatprep.subr.mxu0 0.0
    %1678 = vmatpush1.msra.mxu0 0.0
    %1679 = vmatprep.subr.mxu0 0.0
    %1680 = vmatpush1.msra.mxu0 0.0
    %1681 = vmatprep.subr.mxu0 0.0
    %1682 = vmatpush1.msra.mxu0 0.0
    %1683 = vmatprep.subr.mxu0 0.0
    %1684 = vmatpush1.msra.mxu0 0.0
    %1685 = vmatprep.subr.mxu0 0.0
    %1686 = vmatpush1.msra.mxu0 0.0
    %1687 = vmatprep.subr.mxu0 0.0
    %1688 = vmatpush1.msra.mxu0 0.0
    %1689 = vmatprep.subr.mxu0 0.0
    %1690 = vmatpush1.msra.mxu0 0.0
    %1691 = vmatprep.subr.mxu0 0.0
    %1692 = vmatpush1.msra.mxu0 0.0
    %1693 = vmatprep.subr.mxu0 0.0
    %1694 = vmatpush1.msra.mxu0 0.0
    %1695 = vmatprep.subr.mxu0 0.0
    %1696 = vmatpush1.msra.mxu0 0.0
    %1697 = vmatprep.subr.mxu0 0.0
    %1698 = vmatpush1.msra.mxu0 0.0
    %1699 = vmatprep.subr.mxu0 0.0
    %1700 = vmatpush1.msra.mxu0 0.0
    %1701 = vmatprep.subr.mxu0 0.0
    %1702 = vmatpush1.msra.mxu0 0.0
    %1703 = vmatprep.subr.mxu0 0.0
    %1704 = vmatpush1.msra.mxu0 0.0
    %1705 = vmatprep.subr.mxu0 0.0
    %1706 = vmatpush1.msra.mxu0 0.0
    %1707 = vmatprep.subr.mxu0 0.0
    %1708 = vmatpush1.msra.mxu0 %v1672
    %1709 = vmatprep.subr.mxu0 0.0
    %1710 = vmatpush2.msra.mxu0 0.0
    %1711 = vmatprep.subr.mxu0 0.0
    %1712 = vmatpush2.msra.mxu0 0.0
    %1713 = vmatprep.subr.mxu0 0.0
    %1714 = vmatpush2.msra.mxu0 0.0
    %1715 = vmatprep.subr.mxu0 0.0
    %1716 = vmatpush2.msra.mxu0 0.0
    %1717 = vmatprep.subr.mxu0 0.0
    %1718 = vmatpush2.msra.mxu0 0.0
    %1719 = vmatprep.subr.mxu0 0.0
    %1720 = vmatpush2.msra.mxu0 0.0
    %1721 = vmatprep.subr.mxu0 0.0
    %1722 = vmatpush2.msra.mxu0 0.0
    %1723 = vmatprep.subr.mxu0 0.0
    %1724 = vmatpush2.msra.mxu0 0.0
    %1725 = vmatprep.subr.mxu0 0.0
    %1726 = vmatpush2.msra.mxu0 0.0
    %1727 = vmatprep.subr.mxu0 0.0
    %1728 = vmatpush2.msra.mxu0 0.0
    %1729 = vmatprep.subr.mxu0 0.0
    %1730 = vmatpush2.msra.mxu0 0.0
    %1731 = vmatprep.subr.mxu0 0.0
    %1732 = vmatpush2.msra.mxu0 0.0
    %1733 = vmatprep.subr.mxu0 0.0
    %1734 = vmatpush2.msra.mxu0 0.0
    %1735 = vmatprep.subr.mxu0 0.0
    %1736 = vmatpush2.msra.mxu0 0.0
    %1737 = vmatprep.subr.mxu0 0.0
    %1738 = vmatpush2.msra.mxu0 0.0
    %1739 = vmatprep.subr.mxu0 0.0
    %1740 = vmatpush2.msra.mxu0 0.0
    %1741 = vmatprep.mubr.f32.mxu0 0.0
    %1742 = vmatmul.mubr.f32.gmra.mxu0 %v1675
    %v1743 = vpop.f32.mrf.mxu0
    %v1744 = vadd.f32 0.0, %v1743
    %v1745 = vpop.f32.mrf.mxu0
    %1746 = vdwg.mxu0
    %1747 = vrot.lane.b32.xlu0 %v252, 40
    %v1748 = vpop.permute.xlu0 %1747
    %v1751 = vsel %vm260, %v1670, 0
    %1753 = vmatprep.subr.mxu0 0.0
    %1754 = vmatpush1.msra.mxu0 0.0
    %1755 = vmatprep.subr.mxu0 0.0
    %1756 = vmatpush1.msra.mxu0 0.0
    %1757 = vmatprep.subr.mxu0 0.0
    %1758 = vmatpush1.msra.mxu0 0.0
    %1759 = vmatprep.subr.mxu0 0.0
    %1760 = vmatpush1.msra.mxu0 0.0
    %1761 = vmatprep.subr.mxu0 0.0
    %1762 = vmatpush1.msra.mxu0 0.0
    %1763 = vmatprep.subr.mxu0 0.0
    %1764 = vmatpush1.msra.mxu0 0.0
    %1765 = vmatprep.subr.mxu0 0.0
    %1766 = vmatpush1.msra.mxu0 0.0
    %1767 = vmatprep.subr.mxu0 0.0
    %1768 = vmatpush1.msra.mxu0 0.0
    %1769 = vmatprep.subr.mxu0 0.0
    %1770 = vmatpush1.msra.mxu0 0.0
    %1771 = vmatprep.subr.mxu0 0.0
    %1772 = vmatpush1.msra.mxu0 0.0
    %1773 = vmatprep.subr.mxu0 0.0
    %1774 = vmatpush1.msra.mxu0 0.0
    %1775 = vmatprep.subr.mxu0 0.0
    %1776 = vmatpush1.msra.mxu0 0.0
    %1777 = vmatprep.subr.mxu0 0.0
    %1778 = vmatpush1.msra.mxu0 0.0
    %1779 = vmatprep.subr.mxu0 0.0
    %1780 = vmatpush1.msra.mxu0 0.0
    %1781 = vmatprep.subr.mxu0 0.0
    %1782 = vmatpush1.msra.mxu0 0.0
    %1783 = vmatprep.subr.mxu0 0.0
    %1784 = vmatpush1.msra.mxu0 %v1748
    %1785 = vmatprep.subr.mxu0 0.0
    %1786 = vmatpush2.msra.mxu0 0.0
    %1787 = vmatprep.subr.mxu0 0.0
    %1788 = vmatpush2.msra.mxu0 0.0
    %1789 = vmatprep.subr.mxu0 0.0
    %1790 = vmatpush2.msra.mxu0 0.0
    %1791 = vmatprep.subr.mxu0 0.0
    %1792 = vmatpush2.msra.mxu0 0.0
    %1793 = vmatprep.subr.mxu0 0.0
    %1794 = vmatpush2.msra.mxu0 0.0
    %1795 = vmatprep.subr.mxu0 0.0
    %1796 = vmatpush2.msra.mxu0 0.0
    %1797 = vmatprep.subr.mxu0 0.0
    %1798 = vmatpush2.msra.mxu0 0.0
    %1799 = vmatprep.subr.mxu0 0.0
    %1800 = vmatpush2.msra.mxu0 0.0
    %1801 = vmatprep.subr.mxu0 0.0
    %1802 = vmatpush2.msra.mxu0 0.0
    %1803 = vmatprep.subr.mxu0 0.0
    %1804 = vmatpush2.msra.mxu0 0.0
    %1805 = vmatprep.subr.mxu0 0.0
    %1806 = vmatpush2.msra.mxu0 0.0
    %1807 = vmatprep.subr.mxu0 0.0
    %1808 = vmatpush2.msra.mxu0 0.0
    %1809 = vmatprep.subr.mxu0 0.0
    %1810 = vmatpush2.msra.mxu0 0.0
    %1811 = vmatprep.subr.mxu0 0.0
    %1812 = vmatpush2.msra.mxu0 0.0
    %1813 = vmatprep.subr.mxu0 0.0
    %1814 = vmatpush2.msra.mxu0 0.0
    %1815 = vmatprep.subr.mxu0 0.0
    %1816 = vmatpush2.msra.mxu0 0.0
    %1817 = vmatprep.mubr.f32.mxu0 0.0
    %1818 = vmatmul.mubr.f32.gmra.mxu0 %v1751
    %v1819 = vpop.f32.mrf.mxu0
    %v1820 = vadd.f32 0.0, %v1819
    %v1821 = vpop.f32.mrf.mxu0
    %1822 = vdwg.mxu0
    %v1824 = vsel %vm260, %v1744, 0
    %v1827 = vsel %vm260, %v1820, 0
    %1829 = vmatprep.subr.mxu0 0.0
    %1830 = vmatpush1.msra.mxu0 0.0
    %1831 = vmatprep.subr.mxu0 0.0
    %1832 = vmatpush1.msra.mxu0 0.0
    %1833 = vmatprep.subr.mxu0 0.0
    %1834 = vmatpush1.msra.mxu0 0.0
    %1835 = vmatprep.subr.mxu0 0.0
    %1836 = vmatpush1.msra.mxu0 0.0
    %1837 = vmatprep.subr.mxu0 0.0
    %1838 = vmatpush1.msra.mxu0 0.0
    %1839 = vmatprep.subr.mxu0 0.0
    %1840 = vmatpush1.msra.mxu0 0.0
    %1841 = vmatprep.subr.mxu0 0.0
    %1842 = vmatpush1.msra.mxu0 0.0
    %1843 = vmatprep.subr.mxu0 0.0
    %1844 = vmatpush1.msra.mxu0 0.0
    %1845 = vmatprep.subr.mxu0 0.0
    %1846 = vmatpush1.msra.mxu0 0.0
    %1847 = vmatprep.subr.mxu0 0.0
    %1848 = vmatpush1.msra.mxu0 0.0
    %1849 = vmatprep.subr.mxu0 0.0
    %1850 = vmatpush1.msra.mxu0 0.0
    %1851 = vmatprep.subr.mxu0 0.0
    %1852 = vmatpush1.msra.mxu0 0.0
    %1853 = vmatprep.subr.mxu0 0.0
    %1854 = vmatpush1.msra.mxu0 0.0
    %1855 = vmatprep.subr.mxu0 0.0
    %1856 = vmatpush1.msra.mxu0 0.0
    %1857 = vmatprep.subr.mxu0 0.0
    %1858 = vmatpush1.msra.mxu0 0.0
    %1859 = vmatprep.subr.mxu0 0.0
    %1860 = vmatpush1.msra.mxu0 %v166
    %1861 = vmatprep.subr.mxu0 0.0
    %1862 = vmatpush2.msra.mxu0 0.0
    %1863 = vmatprep.subr.mxu0 0.0
    %1864 = vmatpush2.msra.mxu0 0.0
    %1865 = vmatprep.subr.mxu0 0.0
    %1866 = vmatpush2.msra.mxu0 0.0
    %1867 = vmatprep.subr.mxu0 0.0
    %1868 = vmatpush2.msra.mxu0 0.0
    %1869 = vmatprep.subr.mxu0 0.0
    %1870 = vmatpush2.msra.mxu0 0.0
    %1871 = vmatprep.subr.mxu0 0.0
    %1872 = vmatpush2.msra.mxu0 0.0
    %1873 = vmatprep.subr.mxu0 0.0
    %1874 = vmatpush2.msra.mxu0 0.0
    %1875 = vmatprep.subr.mxu0 0.0
    %1876 = vmatpush2.msra.mxu0 0.0
    %1877 = vmatprep.subr.mxu0 0.0
    %1878 = vmatpush2.msra.mxu0 0.0
    %1879 = vmatprep.subr.mxu0 0.0
    %1880 = vmatpush2.msra.mxu0 0.0
    %1881 = vmatprep.subr.mxu0 0.0
    %1882 = vmatpush2.msra.mxu0 0.0
    %1883 = vmatprep.subr.mxu0 0.0
    %1884 = vmatpush2.msra.mxu0 0.0
    %1885 = vmatprep.subr.mxu0 0.0
    %1886 = vmatpush2.msra.mxu0 0.0
    %1887 = vmatprep.subr.mxu0 0.0
    %1888 = vmatpush2.msra.mxu0 0.0
    %1889 = vmatprep.subr.mxu0 0.0
    %1890 = vmatpush2.msra.mxu0 0.0
    %1891 = vmatprep.subr.mxu0 0.0
    %1892 = vmatpush2.msra.mxu0 0.0
    %1893 = vmatprep.mubr.f32.mxu0 0.0
    %1894 = vmatmul.mubr.f32.gmra.mxu0 %v1824
    %v1895 = vpop.f32.mrf.mxu0
    %v1896 = vadd.f32 0.0, %v1895
    %v1897 = vpop.f32.mrf.mxu0
    %1898 = vmatprep.mubr.f32.mxu0 0.0
    %1899 = vmatmul.mubr.f32.gmra.mxu0 %v1827
    %v1900 = vpop.f32.mrf.mxu0
    %v1901 = vadd.f32 0.0, %v1900
    %v1902 = vpop.f32.mrf.mxu0
    %1903 = vdwg.mxu0
    %v1904 = vadd.f32 %v1491, %v1896
    %v1905 = vadd.f32 %v1492, %v1901
    %v1907 = vlaneseq
    %v1908 = vshrl.u32 %v1907, 7
    %v1909 = vsub.s32 0, %v1908
    %v1910 = vrot.slane %v167, %v1909
    %v1912 = vadd.f32 %v1904, %v1910
    %v1913 = vadd.f32 %v1905, %v1910
    %v1914 = vadd.f32 %v104, %v1912
    %v1915 = vadd.f32 %v105, %v1913
    %v1916 = vld [vmem:[%s7] sm:$0x1]
    %v1917 = vld [vmem:[%s8] sm:$0x1]
    %v1918 = vsel %vm114, %v1914, 0.0
    %1919 = vadd.xlane.f32.xlu0 %v1918
    %v1920 = vpop.xlane.xlu0 %1919
    %v1921 = vsel %vm114, %v1915, 0.0
    %1922 = vadd.xlane.f32.xlu0 %v1921
    %v1923 = vpop.xlane.xlu0 %1922
    %v1924 = vmul.f32 %v1920, %v121
    %v1925 = vmul.f32 %v1923, %v121
    %v1926 = vsub.f32 %v1914, %v1924
    %v1927 = vsub.f32 %v1915, %v1925
    %v1928 = vmul.f32 %v1926, %v1926
    %v1929 = vmul.f32 %v1927, %v1927
    %v1930 = vsel %vm114, %v1928, 0.0
    %1931 = vadd.xlane.f32.xlu0 %v1930
    %v1932 = vpop.xlane.xlu0 %1931
    %v1933 = vsel %vm114, %v1929, 0.0
    %1934 = vadd.xlane.f32.xlu0 %v1933
    %v1935 = vpop.xlane.xlu0 %1934
    %v1936 = vmul.f32 %v1932, %v121
    %v1937 = vmul.f32 %v1935, %v121
    %v1938 = vadd.f32 %v1936, 1e-05
    %v1939 = vadd.f32 %v1937, 1e-05
    %v1940 = vrsqrt.pop %v1938
    %v1941 = vrsqrt.pop %v1939
    %v1942 = vmul.f32 %v1926, %v1940
    %v1943 = vmul.f32 %v1927, %v1941
    %v1945 = vlaneseq
    %v1946 = vshrl.u32 %v1945, 7
    %v1947 = vsub.s32 0, %v1946
    %v1948 = vrot.slane %v1916, %v1947
    %v1950 = vmul.f32 %v1942, %v1948
    %v1951 = vmul.f32 %v1943, %v1948
    %v1953 = vlaneseq
    %v1954 = vshrl.u32 %v1953, 7
    %v1955 = vsub.s32 0, %v1954
    %v1956 = vrot.slane %v1917, %v1955
    %v1958 = vadd.f32 %v1950, %v1956
    %v1959 = vadd.f32 %v1951, %v1956
    %v1960 = vld [vmem:[%s9] sm:$0xff]
    %v1961 = vld [vmem:[%s9 + $0x8] sm:$0xff]
    %v1962 = vld [vmem:[%s9 + $0x10] sm:$0xff]
    %v1963 = vld [vmem:[%s9 + $0x18] sm:$0xff]
    %v1964 = vld [vmem:[%s10] sm:$0x1]
    %v1965 = vld [vmem:[#allocation5] sm:$0xff]
    %v1966 = vld [vmem:[#allocation5 + $0x8] sm:$0xff]
    %v1967 = vld [vmem:[#allocation5 + $0x10] sm:$0xff]
    %v1968 = vld [vmem:[#allocation5 + $0x18] sm:$0xff]
    %v1969 = vld [vmem:[%s12] sm:$0x1]
    %v1971 = vlaneseq
    %v1972 = vshrl.u32 %v1971, 7
    %v1973 = vsub.s32 0, %v1972
    %v1974 = vrot.slane %v1964, %v1973
    %v1977 = vsel %vm114, %v1958, 0
    %v1980 = vsel %vm114, %v1959, 0
    %1982 = vmatprep.subr.mxu0 0.0
    %1983 = vmatpush1.msra.mxu0 0.0
    %1984 = vmatprep.subr.mxu0 0.0
    %1985 = vmatpush1.msra.mxu0 0.0
    %1986 = vmatprep.subr.mxu0 0.0
    %1987 = vmatpush1.msra.mxu0 0.0
    %1988 = vmatprep.subr.mxu0 0.0
    %1989 = vmatpush1.msra.mxu0 0.0
    %1990 = vmatprep.subr.mxu0 0.0
    %1991 = vmatpush1.msra.mxu0 0.0
    %1992 = vmatprep.subr.mxu0 0.0
    %1993 = vmatpush1.msra.mxu0 0.0
    %1994 = vmatprep.subr.mxu0 0.0
    %1995 = vmatpush1.msra.mxu0 0.0
    %1996 = vmatprep.subr.mxu0 0.0
    %1997 = vmatpush1.msra.mxu0 0.0
    %1998 = vmatprep.subr.mxu0 0.0
    %1999 = vmatpush1.msra.mxu0 0.0
    %2000 = vmatprep.subr.mxu0 0.0
    %2001 = vmatpush1.msra.mxu0 0.0
    %2002 = vmatprep.subr.mxu0 0.0
    %2003 = vmatpush1.msra.mxu0 0.0
    %2004 = vmatprep.subr.mxu0 0.0
    %2005 = vmatpush1.msra.mxu0 0.0
    %2006 = vmatprep.subr.mxu0 0.0
    %2007 = vmatpush1.msra.mxu0 %v1963
    %2008 = vmatprep.subr.mxu0 0.0
    %2009 = vmatpush1.msra.mxu0 %v1962
    %2010 = vmatprep.subr.mxu0 0.0
    %2011 = vmatpush1.msra.mxu0 %v1961
    %2012 = vmatprep.subr.mxu0 0.0
    %2013 = vmatpush1.msra.mxu0 %v1960
    %2014 = vmatprep.subr.mxu0 0.0
    %2015 = vmatpush2.msra.mxu0 0.0
    %2016 = vmatprep.subr.mxu0 0.0
    %2017 = vmatpush2.msra.mxu0 0.0
    %2018 = vmatprep.subr.mxu0 0.0
    %2019 = vmatpush2.msra.mxu0 0.0
    %2020 = vmatprep.subr.mxu0 0.0
    %2021 = vmatpush2.msra.mxu0 0.0
    %2022 = vmatprep.subr.mxu0 0.0
    %2023 = vmatpush2.msra.mxu0 0.0
    %2024 = vmatprep.subr.mxu0 0.0
    %2025 = vmatpush2.msra.mxu0 0.0
    %2026 = vmatprep.subr.mxu0 0.0
    %2027 = vmatpush2.msra.mxu0 0.0
    %2028 = vmatprep.subr.mxu0 0.0
    %2029 = vmatpush2.msra.mxu0 0.0
    %2030 = vmatprep.subr.mxu0 0.0
    %2031 = vmatpush2.msra.mxu0 0.0
    %2032 = vmatprep.subr.mxu0 0.0
    %2033 = vmatpush2.msra.mxu0 0.0
    %2034 = vmatprep.subr.mxu0 0.0
    %2035 = vmatpush2.msra.mxu0 0.0
    %2036 = vmatprep.subr.mxu0 0.0
    %2037 = vmatpush2.msra.mxu0 0.0
    %2038 = vmatprep.subr.mxu0 0.0
    %2039 = vmatpush2.msra.mxu0 0.0
    %2040 = vmatprep.subr.mxu0 0.0
    %2041 = vmatpush2.msra.mxu0 0.0
    %2042 = vmatprep.subr.mxu0 0.0
    %2043 = vmatpush2.msra.mxu0 0.0
    %2044 = vmatprep.subr.mxu0 0.0
    %2045 = vmatpush2.msra.mxu0 0.0
    %2046 = vmatprep.mubr.f32.mxu0 0.0
    %2047 = vmatmul.mubr.f32.gmra.mxu0 %v1977
    %v2048 = vpop.f32.mrf.mxu0
    %v2049 = vadd.f32 %v1974, %v2048
    %v2050 = vpop.f32.mrf.mxu0
    %2051 = vmatprep.mubr.f32.mxu0 0.0
    %2052 = vmatmul.mubr.f32.gmra.mxu0 %v1980
    %v2053 = vpop.f32.mrf.mxu0
    %v2054 = vadd.f32 %v1974, %v2053
    %v2055 = vpop.f32.mrf.mxu0
    %2056 = vdwg.mxu0
    %v2057 = vmul.f32 %v2049, 0.35355338
    %v2058 = vmul.f32 %v2054, 0.35355338
    %2060 = vrot.lane.b32.xlu0 %v2049, 96
    %v2061 = vpop.permute.xlu0 %2060
    %v2063 = vsel %vm260, %v2057, 0
    %v2065 = vsel %vm260, %v2061, 0
    %2067 = vmatprep.subr.mxu0 0.0
    %2068 = vmatpush1.xpose.msra.mxu0 0.0
    %2069 = vmatprep.subr.mxu0 0.0
    %2070 = vmatpush1.xpose.msra.mxu0 0.0
    %2071 = vmatprep.subr.mxu0 0.0
    %2072 = vmatpush1.xpose.msra.mxu0 0.0
    %2073 = vmatprep.subr.mxu0 0.0
    %2074 = vmatpush1.xpose.msra.mxu0 0.0
    %2075 = vmatprep.subr.mxu0 0.0
    %2076 = vmatpush1.xpose.msra.mxu0 0.0
    %2077 = vmatprep.subr.mxu0 0.0
    %2078 = vmatpush1.xpose.msra.mxu0 0.0
    %2079 = vmatprep.subr.mxu0 0.0
    %2080 = vmatpush1.xpose.msra.mxu0 0.0
    %2081 = vmatprep.subr.mxu0 0.0
    %2082 = vmatpush1.xpose.msra.mxu0 0.0
    %2083 = vmatprep.subr.mxu0 0.0
    %2084 = vmatpush1.xpose.msra.mxu0 0.0
    %2085 = vmatprep.subr.mxu0 0.0
    %2086 = vmatpush1.xpose.msra.mxu0 0.0
    %2087 = vmatprep.subr.mxu0 0.0
    %2088 = vmatpush1.xpose.msra.mxu0 0.0
    %2089 = vmatprep.subr.mxu0 0.0
    %2090 = vmatpush1.xpose.msra.mxu0 0.0
    %2091 = vmatprep.subr.mxu0 0.0
    %2092 = vmatpush1.xpose.msra.mxu0 0.0
    %2093 = vmatprep.subr.mxu0 0.0
    %2094 = vmatpush1.xpose.msra.mxu0 0.0
    %2095 = vmatprep.subr.mxu0 0.0
    %2096 = vmatpush1.xpose.msra.mxu0 0.0
    %2097 = vmatprep.subr.mxu0 0.0
    %2098 = vmatpush1.xpose.msra.mxu0 %v2065
    %2099 = vmatprep.subr.mxu0 0.0
    %2100 = vmatpush2.xpose.msra.mxu0 0.0
    %2101 = vmatprep.subr.mxu0 0.0
    %2102 = vmatpush2.xpose.msra.mxu0 0.0
    %2103 = vmatprep.subr.mxu0 0.0
    %2104 = vmatpush2.xpose.msra.mxu0 0.0
    %2105 = vmatprep.subr.mxu0 0.0
    %2106 = vmatpush2.xpose.msra.mxu0 0.0
    %2107 = vmatprep.subr.mxu0 0.0
    %2108 = vmatpush2.xpose.msra.mxu0 0.0
    %2109 = vmatprep.subr.mxu0 0.0
    %2110 = vmatpush2.xpose.msra.mxu0 0.0
    %2111 = vmatprep.subr.mxu0 0.0
    %2112 = vmatpush2.xpose.msra.mxu0 0.0
    %2113 = vmatprep.subr.mxu0 0.0
    %2114 = vmatpush2.xpose.msra.mxu0 0.0
    %2115 = vmatprep.subr.mxu0 0.0
    %2116 = vmatpush2.xpose.msra.mxu0 0.0
    %2117 = vmatprep.subr.mxu0 0.0
    %2118 = vmatpush2.xpose.msra.mxu0 0.0
    %2119 = vmatprep.subr.mxu0 0.0
    %2120 = vmatpush2.xpose.msra.mxu0 0.0
    %2121 = vmatprep.subr.mxu0 0.0
    %2122 = vmatpush2.xpose.msra.mxu0 0.0
    %2123 = vmatprep.subr.mxu0 0.0
    %2124 = vmatpush2.xpose.msra.mxu0 0.0
    %2125 = vmatprep.subr.mxu0 0.0
    %2126 = vmatpush2.xpose.msra.mxu0 0.0
    %2127 = vmatprep.subr.mxu0 0.0
    %2128 = vmatpush2.xpose.msra.mxu0 0.0
    %2129 = vmatprep.subr.mxu0 0.0
    %2130 = vmatpush2.xpose.msra.mxu0 0.0
    %2131 = vmatprep.mubr.f32.mxu0 0.0
    %2132 = vmatmul.mubr.f32.gmra.mxu0 %v2063
    %v2133 = vpop.f32.mrf.mxu0
    %v2134 = vadd.f32 %v111, %v2133
    %v2135 = vpop.f32.mrf.mxu0
    %2136 = vdwg.mxu0
    %2138 = vrot.lane.b32.xlu0 %v2054, 96
    %v2139 = vpop.permute.xlu0 %2138
    %v2141 = vsel %vm260, %v2058, 0
    %v2143 = vsel %vm260, %v2139, 0
    %2145 = vmatprep.subr.mxu0 0.0
    %2146 = vmatpush1.xpose.msra.mxu0 0.0
    %2147 = vmatprep.subr.mxu0 0.0
    %2148 = vmatpush1.xpose.msra.mxu0 0.0
    %2149 = vmatprep.subr.mxu0 0.0
    %2150 = vmatpush1.xpose.msra.mxu0 0.0
    %2151 = vmatprep.subr.mxu0 0.0
    %2152 = vmatpush1.xpose.msra.mxu0 0.0
    %2153 = vmatprep.subr.mxu0 0.0
    %2154 = vmatpush1.xpose.msra.mxu0 0.0
    %2155 = vmatprep.subr.mxu0 0.0
    %2156 = vmatpush1.xpose.msra.mxu0 0.0
    %2157 = vmatprep.subr.mxu0 0.0
    %2158 = vmatpush1.xpose.msra.mxu0 0.0
    %2159 = vmatprep.subr.mxu0 0.0
    %2160 = vmatpush1.xpose.msra.mxu0 0.0
    %2161 = vmatprep.subr.mxu0 0.0
    %2162 = vmatpush1.xpose.msra.mxu0 0.0
    %2163 = vmatprep.subr.mxu0 0.0
    %2164 = vmatpush1.xpose.msra.mxu0 0.0
    %2165 = vmatprep.subr.mxu0 0.0
    %2166 = vmatpush1.xpose.msra.mxu0 0.0
    %2167 = vmatprep.subr.mxu0 0.0
    %2168 = vmatpush1.xpose.msra.mxu0 0.0
    %2169 = vmatprep.subr.mxu0 0.0
    %2170 = vmatpush1.xpose.msra.mxu0 0.0
    %2171 = vmatprep.subr.mxu0 0.0
    %2172 = vmatpush1.xpose.msra.mxu0 0.0
    %2173 = vmatprep.subr.mxu0 0.0
    %2174 = vmatpush1.xpose.msra.mxu0 0.0
    %2175 = vmatprep.subr.mxu0 0.0
    %2176 = vmatpush1.xpose.msra.mxu0 %v2143
    %2177 = vmatprep.subr.mxu0 0.0
    %2178 = vmatpush2.xpose.msra.mxu0 0.0
    %2179 = vmatprep.subr.mxu0 0.0
    %2180 = vmatpush2.xpose.msra.mxu0 0.0
    %2181 = vmatprep.subr.mxu0 0.0
    %2182 = vmatpush2.xpose.msra.mxu0 0.0
    %2183 = vmatprep.subr.mxu0 0.0
    %2184 = vmatpush2.xpose.msra.mxu0 0.0
    %2185 = vmatprep.subr.mxu0 0.0
    %2186 = vmatpush2.xpose.msra.mxu0 0.0
    %2187 = vmatprep.subr.mxu0 0.0
    %2188 = vmatpush2.xpose.msra.mxu0 0.0
    %2189 = vmatprep.subr.mxu0 0.0
    %2190 = vmatpush2.xpose.msra.mxu0 0.0
    %2191 = vmatprep.subr.mxu0 0.0
    %2192 = vmatpush2.xpose.msra.mxu0 0.0
    %2193 = vmatprep.subr.mxu0 0.0
    %2194 = vmatpush2.xpose.msra.mxu0 0.0
    %2195 = vmatprep.subr.mxu0 0.0
    %2196 = vmatpush2.xpose.msra.mxu0 0.0
    %2197 = vmatprep.subr.mxu0 0.0
    %2198 = vmatpush2.xpose.msra.mxu0 0.0
    %2199 = vmatprep.subr.mxu0 0.0
    %2200 = vmatpush2.xpose.msra.mxu0 0.0
    %2201 = vmatprep.subr.mxu0 0.0
    %2202 = vmatpush2.xpose.msra.mxu0 0.0
    %2203 = vmatprep.subr.mxu0 0.0
    %2204 = vmatpush2.xpose.msra.mxu0 0.0
    %2205 = vmatprep.subr.mxu0 0.0
    %2206 = vmatpush2.xpose.msra.mxu0 0.0
    %2207 = vmatprep.subr.mxu0 0.0
    %2208 = vmatpush2.xpose.msra.mxu0 0.0
    %2209 = vmatprep.mubr.f32.mxu0 0.0
    %2210 = vmatmul.mubr.f32.gmra.mxu0 %v2141
    %v2211 = vpop.f32.mrf.mxu0
    %v2212 = vadd.f32 %v111, %v2211
    %v2213 = vpop.f32.mrf.mxu0
    %2214 = vdwg.mxu0
    %v2215 = vsel %vm260, %v2134, -inf
    %2216 = vmax.xlane.f32.xlu0 %v2215
    %v2217 = vpop.xlane.xlu0 %2216
    %v2218 = vsel %vm260, %v2212, -inf
    %2219 = vmax.xlane.f32.xlu0 %v2218
    %v2220 = vpop.xlane.xlu0 %2219
    %v2221 = vsub.f32 %v2134, %v2217
    %v2222 = vsub.f32 %v2212, %v2220
    %v2223 = vmul.f32 %v2221, 1.442695
    %v2224 = vpow.pop %v2223
    %v2225 = vmul.f32 %v2222, 1.442695
    %v2226 = vpow.pop %v2225
    %v2227 = vsel %vm260, %v2224, 0.0
    %2228 = vadd.xlane.f32.xlu0 %v2227
    %v2229 = vpop.xlane.xlu0 %2228
    %v2230 = vsel %vm260, %v2226, 0.0
    %2231 = vadd.xlane.f32.xlu0 %v2230
    %v2232 = vpop.xlane.xlu0 %2231
    %v2233 = vrcp.pop %v2229
    %v2234 = vrcp.pop %v2232
    %v2235 = vmul.f32 %v2224, %v2233
    %v2236 = vmul.f32 %v2226, %v2234
    %2237 = vrot.lane.b32.xlu0 %v2049, 64
    %v2238 = vpop.permute.xlu0 %2237
    %v2241 = vsel %vm260, %v2235, 0
    %2243 = vmatprep.subr.mxu0 0.0
    %2244 = vmatpush1.msra.mxu0 0.0
    %2245 = vmatprep.subr.mxu0 0.0
    %2246 = vmatpush1.msra.mxu0 0.0
    %2247 = vmatprep.subr.mxu0 0.0
    %2248 = vmatpush1.msra.mxu0 0.0
    %2249 = vmatprep.subr.mxu0 0.0
    %2250 = vmatpush1.msra.mxu0 0.0
    %2251 = vmatprep.subr.mxu0 0.0
    %2252 = vmatpush1.msra.mxu0 0.0
    %2253 = vmatprep.subr.mxu0 0.0
    %2254 = vmatpush1.msra.mxu0 0.0
    %2255 = vmatprep.subr.mxu0 0.0
    %2256 = vmatpush1.msra.mxu0 0.0
    %2257 = vmatprep.subr.mxu0 0.0
    %2258 = vmatpush1.msra.mxu0 0.0
    %2259 = vmatprep.subr.mxu0 0.0
    %2260 = vmatpush1.msra.mxu0 0.0
    %2261 = vmatprep.subr.mxu0 0.0
    %2262 = vmatpush1.msra.mxu0 0.0
    %2263 = vmatprep.subr.mxu0 0.0
    %2264 = vmatpush1.msra.mxu0 0.0
    %2265 = vmatprep.subr.mxu0 0.0
    %2266 = vmatpush1.msra.mxu0 0.0
    %2267 = vmatprep.subr.mxu0 0.0
    %2268 = vmatpush1.msra.mxu0 0.0
    %2269 = vmatprep.subr.mxu0 0.0
    %2270 = vmatpush1.msra.mxu0 0.0
    %2271 = vmatprep.subr.mxu0 0.0
    %2272 = vmatpush1.msra.mxu0 0.0
    %2273 = vmatprep.subr.mxu0 0.0
    %2274 = vmatpush1.msra.mxu0 %v2238
    %2275 = vmatprep.subr.mxu0 0.0
    %2276 = vmatpush2.msra.mxu0 0.0
    %2277 = vmatprep.subr.mxu0 0.0
    %2278 = vmatpush2.msra.mxu0 0.0
    %2279 = vmatprep.subr.mxu0 0.0
    %2280 = vmatpush2.msra.mxu0 0.0
    %2281 = vmatprep.subr.mxu0 0.0
    %2282 = vmatpush2.msra.mxu0 0.0
    %2283 = vmatprep.subr.mxu0 0.0
    %2284 = vmatpush2.msra.mxu0 0.0
    %2285 = vmatprep.subr.mxu0 0.0
    %2286 = vmatpush2.msra.mxu0 0.0
    %2287 = vmatprep.subr.mxu0 0.0
    %2288 = vmatpush2.msra.mxu0 0.0
    %2289 = vmatprep.subr.mxu0 0.0
    %2290 = vmatpush2.msra.mxu0 0.0
    %2291 = vmatprep.subr.mxu0 0.0
    %2292 = vmatpush2.msra.mxu0 0.0
    %2293 = vmatprep.subr.mxu0 0.0
    %2294 = vmatpush2.msra.mxu0 0.0
    %2295 = vmatprep.subr.mxu0 0.0
    %2296 = vmatpush2.msra.mxu0 0.0
    %2297 = vmatprep.subr.mxu0 0.0
    %2298 = vmatpush2.msra.mxu0 0.0
    %2299 = vmatprep.subr.mxu0 0.0
    %2300 = vmatpush2.msra.mxu0 0.0
    %2301 = vmatprep.subr.mxu0 0.0
    %2302 = vmatpush2.msra.mxu0 0.0
    %2303 = vmatprep.subr.mxu0 0.0
    %2304 = vmatpush2.msra.mxu0 0.0
    %2305 = vmatprep.subr.mxu0 0.0
    %2306 = vmatpush2.msra.mxu0 0.0
    %2307 = vmatprep.mubr.f32.mxu0 0.0
    %2308 = vmatmul.mubr.f32.gmra.mxu0 %v2241
    %v2309 = vpop.f32.mrf.mxu0
    %v2310 = vadd.f32 0.0, %v2309
    %v2311 = vpop.f32.mrf.mxu0
    %2312 = vdwg.mxu0
    %2313 = vrot.lane.b32.xlu0 %v2054, 64
    %v2314 = vpop.permute.xlu0 %2313
    %v2317 = vsel %vm260, %v2236, 0
    %2319 = vmatprep.subr.mxu0 0.0
    %2320 = vmatpush1.msra.mxu0 0.0
    %2321 = vmatprep.subr.mxu0 0.0
    %2322 = vmatpush1.msra.mxu0 0.0
    %2323 = vmatprep.subr.mxu0 0.0
    %2324 = vmatpush1.msra.mxu0 0.0
    %2325 = vmatprep.subr.mxu0 0.0
    %2326 = vmatpush1.msra.mxu0 0.0
    %2327 = vmatprep.subr.mxu0 0.0
    %2328 = vmatpush1.msra.mxu0 0.0
    %2329 = vmatprep.subr.mxu0 0.0
    %2330 = vmatpush1.msra.mxu0 0.0
    %2331 = vmatprep.subr.mxu0 0.0
    %2332 = vmatpush1.msra.mxu0 0.0
    %2333 = vmatprep.subr.mxu0 0.0
    %2334 = vmatpush1.msra.mxu0 0.0
    %2335 = vmatprep.subr.mxu0 0.0
    %2336 = vmatpush1.msra.mxu0 0.0
    %2337 = vmatprep.subr.mxu0 0.0
    %2338 = vmatpush1.msra.mxu0 0.0
    %2339 = vmatprep.subr.mxu0 0.0
    %2340 = vmatpush1.msra.mxu0 0.0
    %2341 = vmatprep.subr.mxu0 0.0
    %2342 = vmatpush1.msra.mxu0 0.0
    %2343 = vmatprep.subr.mxu0 0.0
    %2344 = vmatpush1.msra.mxu0 0.0
    %2345 = vmatprep.subr.mxu0 0.0
    %2346 = vmatpush1.msra.mxu0 0.0
    %2347 = vmatprep.subr.mxu0 0.0
    %2348 = vmatpush1.msra.mxu0 0.0
    %2349 = vmatprep.subr.mxu0 0.0
    %2350 = vmatpush1.msra.mxu0 %v2314
    %2351 = vmatprep.subr.mxu0 0.0
    %2352 = vmatpush2.msra.mxu0 0.0
    %2353 = vmatprep.subr.mxu0 0.0
    %2354 = vmatpush2.msra.mxu0 0.0
    %2355 = vmatprep.subr.mxu0 0.0
    %2356 = vmatpush2.msra.mxu0 0.0
    %2357 = vmatprep.subr.mxu0 0.0
    %2358 = vmatpush2.msra.mxu0 0.0
    %2359 = vmatprep.subr.mxu0 0.0
    %2360 = vmatpush2.msra.mxu0 0.0
    %2361 = vmatprep.subr.mxu0 0.0
    %2362 = vmatpush2.msra.mxu0 0.0
    %2363 = vmatprep.subr.mxu0 0.0
    %2364 = vmatpush2.msra.mxu0 0.0
    %2365 = vmatprep.subr.mxu0 0.0
    %2366 = vmatpush2.msra.mxu0 0.0
    %2367 = vmatprep.subr.mxu0 0.0
    %2368 = vmatpush2.msra.mxu0 0.0
    %2369 = vmatprep.subr.mxu0 0.0
    %2370 = vmatpush2.msra.mxu0 0.0
    %2371 = vmatprep.subr.mxu0 0.0
    %2372 = vmatpush2.msra.mxu0 0.0
    %2373 = vmatprep.subr.mxu0 0.0
    %2374 = vmatpush2.msra.mxu0 0.0
    %2375 = vmatprep.subr.mxu0 0.0
    %2376 = vmatpush2.msra.mxu0 0.0
    %2377 = vmatprep.subr.mxu0 0.0
    %2378 = vmatpush2.msra.mxu0 0.0
    %2379 = vmatprep.subr.mxu0 0.0
    %2380 = vmatpush2.msra.mxu0 0.0
    %2381 = vmatprep.subr.mxu0 0.0
    %2382 = vmatpush2.msra.mxu0 0.0
    %2383 = vmatprep.mubr.f32.mxu0 0.0
    %2384 = vmatmul.mubr.f32.gmra.mxu0 %v2317
    %v2385 = vpop.f32.mrf.mxu0
    %v2386 = vadd.f32 0.0, %v2385
    %v2387 = vpop.f32.mrf.mxu0
    %2388 = vdwg.mxu0
    %2389 = vrot.lane.b32.xlu0 %v2057, 120
    %v2390 = vpop.permute.xlu0 %2389
    %2391 = vrot.lane.b32.xlu0 %v2049, 88
    %v2392 = vpop.permute.xlu0 %2391
    %v2393 = vsel %vm260, %v2390, 0
    %v2395 = vsel %vm260, %v2392, 0
    %2397 = vmatprep.subr.mxu0 0.0
    %2398 = vmatpush1.xpose.msra.mxu0 0.0
    %2399 = vmatprep.subr.mxu0 0.0
    %2400 = vmatpush1.xpose.msra.mxu0 0.0
    %2401 = vmatprep.subr.mxu0 0.0
    %2402 = vmatpush1.xpose.msra.mxu0 0.0
    %2403 = vmatprep.subr.mxu0 0.0
    %2404 = vmatpush1.xpose.msra.mxu0 0.0
    %2405 = vmatprep.subr.mxu0 0.0
    %2406 = vmatpush1.xpose.msra.mxu0 0.0
    %2407 = vmatprep.subr.mxu0 0.0
    %2408 = vmatpush1.xpose.msra.mxu0 0.0
    %2409 = vmatprep.subr.mxu0 0.0
    %2410 = vmatpush1.xpose.msra.mxu0 0.0
    %2411 = vmatprep.subr.mxu0 0.0
    %2412 = vmatpush1.xpose.msra.mxu0 0.0
    %2413 = vmatprep.subr.mxu0 0.0
    %2414 = vmatpush1.xpose.msra.mxu0 0.0
    %2415 = vmatprep.subr.mxu0 0.0
    %2416 = vmatpush1.xpose.msra.mxu0 0.0
    %2417 = vmatprep.subr.mxu0 0.0
    %2418 = vmatpush1.xpose.msra.mxu0 0.0
    %2419 = vmatprep.subr.mxu0 0.0
    %2420 = vmatpush1.xpose.msra.mxu0 0.0
    %2421 = vmatprep.subr.mxu0 0.0
    %2422 = vmatpush1.xpose.msra.mxu0 0.0
    %2423 = vmatprep.subr.mxu0 0.0
    %2424 = vmatpush1.xpose.msra.mxu0 0.0
    %2425 = vmatprep.subr.mxu0 0.0
    %2426 = vmatpush1.xpose.msra.mxu0 0.0
    %2427 = vmatprep.subr.mxu0 0.0
    %2428 = vmatpush1.xpose.msra.mxu0 %v2395
    %2429 = vmatprep.subr.mxu0 0.0
    %2430 = vmatpush2.xpose.msra.mxu0 0.0
    %2431 = vmatprep.subr.mxu0 0.0
    %2432 = vmatpush2.xpose.msra.mxu0 0.0
    %2433 = vmatprep.subr.mxu0 0.0
    %2434 = vmatpush2.xpose.msra.mxu0 0.0
    %2435 = vmatprep.subr.mxu0 0.0
    %2436 = vmatpush2.xpose.msra.mxu0 0.0
    %2437 = vmatprep.subr.mxu0 0.0
    %2438 = vmatpush2.xpose.msra.mxu0 0.0
    %2439 = vmatprep.subr.mxu0 0.0
    %2440 = vmatpush2.xpose.msra.mxu0 0.0
    %2441 = vmatprep.subr.mxu0 0.0
    %2442 = vmatpush2.xpose.msra.mxu0 0.0
    %2443 = vmatprep.subr.mxu0 0.0
    %2444 = vmatpush2.xpose.msra.mxu0 0.0
    %2445 = vmatprep.subr.mxu0 0.0
    %2446 = vmatpush2.xpose.msra.mxu0 0.0
    %2447 = vmatprep.subr.mxu0 0.0
    %2448 = vmatpush2.xpose.msra.mxu0 0.0
    %2449 = vmatprep.subr.mxu0 0.0
    %2450 = vmatpush2.xpose.msra.mxu0 0.0
    %2451 = vmatprep.subr.mxu0 0.0
    %2452 = vmatpush2.xpose.msra.mxu0 0.0
    %2453 = vmatprep.subr.mxu0 0.0
    %2454 = vmatpush2.xpose.msra.mxu0 0.0
    %2455 = vmatprep.subr.mxu0 0.0
    %2456 = vmatpush2.xpose.msra.mxu0 0.0
    %2457 = vmatprep.subr.mxu0 0.0
    %2458 = vmatpush2.xpose.msra.mxu0 0.0
    %2459 = vmatprep.subr.mxu0 0.0
    %2460 = vmatpush2.xpose.msra.mxu0 0.0
    %2461 = vmatprep.mubr.f32.mxu0 0.0
    %2462 = vmatmul.mubr.f32.gmra.mxu0 %v2393
    %v2463 = vpop.f32.mrf.mxu0
    %v2464 = vadd.f32 %v111, %v2463
    %v2465 = vpop.f32.mrf.mxu0
    %2466 = vdwg.mxu0
    %2467 = vrot.lane.b32.xlu0 %v2058, 120
    %v2468 = vpop.permute.xlu0 %2467
    %2469 = vrot.lane.b32.xlu0 %v2054, 88
    %v2470 = vpop.permute.xlu0 %2469
    %v2471 = vsel %vm260, %v2468, 0
    %v2473 = vsel %vm260, %v2470, 0
    %2475 = vmatprep.subr.mxu0 0.0
    %2476 = vmatpush1.xpose.msra.mxu0 0.0
    %2477 = vmatprep.subr.mxu0 0.0
    %2478 = vmatpush1.xpose.msra.mxu0 0.0
    %2479 = vmatprep.subr.mxu0 0.0
    %2480 = vmatpush1.xpose.msra.mxu0 0.0
    %2481 = vmatprep.subr.mxu0 0.0
    %2482 = vmatpush1.xpose.msra.mxu0 0.0
    %2483 = vmatprep.subr.mxu0 0.0
    %2484 = vmatpush1.xpose.msra.mxu0 0.0
    %2485 = vmatprep.subr.mxu0 0.0
    %2486 = vmatpush1.xpose.msra.mxu0 0.0
    %2487 = vmatprep.subr.mxu0 0.0
    %2488 = vmatpush1.xpose.msra.mxu0 0.0
    %2489 = vmatprep.subr.mxu0 0.0
    %2490 = vmatpush1.xpose.msra.mxu0 0.0
    %2491 = vmatprep.subr.mxu0 0.0
    %2492 = vmatpush1.xpose.msra.mxu0 0.0
    %2493 = vmatprep.subr.mxu0 0.0
    %2494 = vmatpush1.xpose.msra.mxu0 0.0
    %2495 = vmatprep.subr.mxu0 0.0
    %2496 = vmatpush1.xpose.msra.mxu0 0.0
    %2497 = vmatprep.subr.mxu0 0.0
    %2498 = vmatpush1.xpose.msra.mxu0 0.0
    %2499 = vmatprep.subr.mxu0 0.0
    %2500 = vmatpush1.xpose.msra.mxu0 0.0
    %2501 = vmatprep.subr.mxu0 0.0
    %2502 = vmatpush1.xpose.msra.mxu0 0.0
    %2503 = vmatprep.subr.mxu0 0.0
    %2504 = vmatpush1.xpose.msra.mxu0 0.0
    %2505 = vmatprep.subr.mxu0 0.0
    %2506 = vmatpush1.xpose.msra.mxu0 %v2473
    %2507 = vmatprep.subr.mxu0 0.0
    %2508 = vmatpush2.xpose.msra.mxu0 0.0
    %2509 = vmatprep.subr.mxu0 0.0
    %2510 = vmatpush2.xpose.msra.mxu0 0.0
    %2511 = vmatprep.subr.mxu0 0.0
    %2512 = vmatpush2.xpose.msra.mxu0 0.0
    %2513 = vmatprep.subr.mxu0 0.0
    %2514 = vmatpush2.xpose.msra.mxu0 0.0
    %2515 = vmatprep.subr.mxu0 0.0
    %2516 = vmatpush2.xpose.msra.mxu0 0.0
    %2517 = vmatprep.subr.mxu0 0.0
    %2518 = vmatpush2.xpose.msra.mxu0 0.0
    %2519 = vmatprep.subr.mxu0 0.0
    %2520 = vmatpush2.xpose.msra.mxu0 0.0
    %2521 = vmatprep.subr.mxu0 0.0
    %2522 = vmatpush2.xpose.msra.mxu0 0.0
    %2523 = vmatprep.subr.mxu0 0.0
    %2524 = vmatpush2.xpose.msra.mxu0 0.0
    %2525 = vmatprep.subr.mxu0 0.0
    %2526 = vmatpush2.xpose.msra.mxu0 0.0
    %2527 = vmatprep.subr.mxu0 0.0
    %2528 = vmatpush2.xpose.msra.mxu0 0.0
    %2529 = vmatprep.subr.mxu0 0.0
    %2530 = vmatpush2.xpose.msra.mxu0 0.0
    %2531 = vmatprep.subr.mxu0 0.0
    %2532 = vmatpush2.xpose.msra.mxu0 0.0
    %2533 = vmatprep.subr.mxu0 0.0
    %2534 = vmatpush2.xpose.msra.mxu0 0.0
    %2535 = vmatprep.subr.mxu0 0.0
    %2536 = vmatpush2.xpose.msra.mxu0 0.0
    %2537 = vmatprep.subr.mxu0 0.0
    %2538 = vmatpush2.xpose.msra.mxu0 0.0
    %2539 = vmatprep.mubr.f32.mxu0 0.0
    %2540 = vmatmul.mubr.f32.gmra.mxu0 %v2471
    %v2541 = vpop.f32.mrf.mxu0
    %v2542 = vadd.f32 %v111, %v2541
    %v2543 = vpop.f32.mrf.mxu0
    %2544 = vdwg.mxu0
    %v2545 = vsel %vm260, %v2464, -inf
    %2546 = vmax.xlane.f32.xlu0 %v2545
    %v2547 = vpop.xlane.xlu0 %2546
    %v2548 = vsel %vm260, %v2542, -inf
    %2549 = vmax.xlane.f32.xlu0 %v2548
    %v2550 = vpop.xlane.xlu0 %2549
    %v2551 = vsub.f32 %v2464, %v2547
    %v2552 = vsub.f32 %v2542, %v2550
    %v2553 = vmul.f32 %v2551, 1.442695
    %v2554 = vpow.pop %v2553
    %v2555 = vmul.f32 %v2552, 1.442695
    %v2556 = vpow.pop %v2555
    %v2557 = vsel %vm260, %v2554, 0.0
    %2558 = vadd.xlane.f32.xlu0 %v2557
    %v2559 = vpop.xlane.xlu0 %2558
    %v2560 = vsel %vm260, %v2556, 0.0
    %2561 = vadd.xlane.f32.xlu0 %v2560
    %v2562 = vpop.xlane.xlu0 %2561
    %v2563 = vrcp.pop %v2559
    %v2564 = vrcp.pop %v2562
    %v2565 = vmul.f32 %v2554, %v2563
    %v2566 = vmul.f32 %v2556, %v2564
    %2567 = vrot.lane.b32.xlu0 %v2049, 56
    %v2568 = vpop.permute.xlu0 %2567
    %v2571 = vsel %vm260, %v2565, 0
    %2573 = vmatprep.subr.mxu0 0.0
    %2574 = vmatpush1.msra.mxu0 0.0
    %2575 = vmatprep.subr.mxu0 0.0
    %2576 = vmatpush1.msra.mxu0 0.0
    %2577 = vmatprep.subr.mxu0 0.0
    %2578 = vmatpush1.msra.mxu0 0.0
    %2579 = vmatprep.subr.mxu0 0.0
    %2580 = vmatpush1.msra.mxu0 0.0
    %2581 = vmatprep.subr.mxu0 0.0
    %2582 = vmatpush1.msra.mxu0 0.0
    %2583 = vmatprep.subr.mxu0 0.0
    %2584 = vmatpush1.msra.mxu0 0.0
    %2585 = vmatprep.subr.mxu0 0.0
    %2586 = vmatpush1.msra.mxu0 0.0
    %2587 = vmatprep.subr.mxu0 0.0
    %2588 = vmatpush1.msra.mxu0 0.0
    %2589 = vmatprep.subr.mxu0 0.0
    %2590 = vmatpush1.msra.mxu0 0.0
    %2591 = vmatprep.subr.mxu0 0.0
    %2592 = vmatpush1.msra.mxu0 0.0
    %2593 = vmatprep.subr.mxu0 0.0
    %2594 = vmatpush1.msra.mxu0 0.0
    %2595 = vmatprep.subr.mxu0 0.0
    %2596 = vmatpush1.msra.mxu0 0.0
    %2597 = vmatprep.subr.mxu0 0.0
    %2598 = vmatpush1.msra.mxu0 0.0
    %2599 = vmatprep.subr.mxu0 0.0
    %2600 = vmatpush1.msra.mxu0 0.0
    %2601 = vmatprep.subr.mxu0 0.0
    %2602 = vmatpush1.msra.mxu0 0.0
    %2603 = vmatprep.subr.mxu0 0.0
    %2604 = vmatpush1.msra.mxu0 %v2568
    %2605 = vmatprep.subr.mxu0 0.0
    %2606 = vmatpush2.msra.mxu0 0.0
    %2607 = vmatprep.subr.mxu0 0.0
    %2608 = vmatpush2.msra.mxu0 0.0
    %2609 = vmatprep.subr.mxu0 0.0
    %2610 = vmatpush2.msra.mxu0 0.0
    %2611 = vmatprep.subr.mxu0 0.0
    %2612 = vmatpush2.msra.mxu0 0.0
    %2613 = vmatprep.subr.mxu0 0.0
    %2614 = vmatpush2.msra.mxu0 0.0
    %2615 = vmatprep.subr.mxu0 0.0
    %2616 = vmatpush2.msra.mxu0 0.0
    %2617 = vmatprep.subr.mxu0 0.0
    %2618 = vmatpush2.msra.mxu0 0.0
    %2619 = vmatprep.subr.mxu0 0.0
    %2620 = vmatpush2.msra.mxu0 0.0
    %2621 = vmatprep.subr.mxu0 0.0
    %2622 = vmatpush2.msra.mxu0 0.0
    %2623 = vmatprep.subr.mxu0 0.0
    %2624 = vmatpush2.msra.mxu0 0.0
    %2625 = vmatprep.subr.mxu0 0.0
    %2626 = vmatpush2.msra.mxu0 0.0
    %2627 = vmatprep.subr.mxu0 0.0
    %2628 = vmatpush2.msra.mxu0 0.0
    %2629 = vmatprep.subr.mxu0 0.0
    %2630 = vmatpush2.msra.mxu0 0.0
    %2631 = vmatprep.subr.mxu0 0.0
    %2632 = vmatpush2.msra.mxu0 0.0
    %2633 = vmatprep.subr.mxu0 0.0
    %2634 = vmatpush2.msra.mxu0 0.0
    %2635 = vmatprep.subr.mxu0 0.0
    %2636 = vmatpush2.msra.mxu0 0.0
    %2637 = vmatprep.mubr.f32.mxu0 0.0
    %2638 = vmatmul.mubr.f32.gmra.mxu0 %v2571
    %v2639 = vpop.f32.mrf.mxu0
    %v2640 = vadd.f32 0.0, %v2639
    %v2641 = vpop.f32.mrf.mxu0
    %2642 = vdwg.mxu0
    %2643 = vrot.lane.b32.xlu0 %v2054, 56
    %v2644 = vpop.permute.xlu0 %2643
    %v2647 = vsel %vm260, %v2566, 0
    %2649 = vmatprep.subr.mxu0 0.0
    %2650 = vmatpush1.msra.mxu0 0.0
    %2651 = vmatprep.subr.mxu0 0.0
    %2652 = vmatpush1.msra.mxu0 0.0
    %2653 = vmatprep.subr.mxu0 0.0
    %2654 = vmatpush1.msra.mxu0 0.0
    %2655 = vmatprep.subr.mxu0 0.0
    %2656 = vmatpush1.msra.mxu0 0.0
    %2657 = vmatprep.subr.mxu0 0.0
    %2658 = vmatpush1.msra.mxu0 0.0
    %2659 = vmatprep.subr.mxu0 0.0
    %2660 = vmatpush1.msra.mxu0 0.0
    %2661 = vmatprep.subr.mxu0 0.0
    %2662 = vmatpush1.msra.mxu0 0.0
    %2663 = vmatprep.subr.mxu0 0.0
    %2664 = vmatpush1.msra.mxu0 0.0
    %2665 = vmatprep.subr.mxu0 0.0
    %2666 = vmatpush1.msra.mxu0 0.0
    %2667 = vmatprep.subr.mxu0 0.0
    %2668 = vmatpush1.msra.mxu0 0.0
    %2669 = vmatprep.subr.mxu0 0.0
    %2670 = vmatpush1.msra.mxu0 0.0
    %2671 = vmatprep.subr.mxu0 0.0
    %2672 = vmatpush1.msra.mxu0 0.0
    %2673 = vmatprep.subr.mxu0 0.0
    %2674 = vmatpush1.msra.mxu0 0.0
    %2675 = vmatprep.subr.mxu0 0.0
    %2676 = vmatpush1.msra.mxu0 0.0
    %2677 = vmatprep.subr.mxu0 0.0
    %2678 = vmatpush1.msra.mxu0 0.0
    %2679 = vmatprep.subr.mxu0 0.0
    %2680 = vmatpush1.msra.mxu0 %v2644
    %2681 = vmatprep.subr.mxu0 0.0
    %2682 = vmatpush2.msra.mxu0 0.0
    %2683 = vmatprep.subr.mxu0 0.0
    %2684 = vmatpush2.msra.mxu0 0.0
    %2685 = vmatprep.subr.mxu0 0.0
    %2686 = vmatpush2.msra.mxu0 0.0
    %2687 = vmatprep.subr.mxu0 0.0
    %2688 = vmatpush2.msra.mxu0 0.0
    %2689 = vmatprep.subr.mxu0 0.0
    %2690 = vmatpush2.msra.mxu0 0.0
    %2691 = vmatprep.subr.mxu0 0.0
    %2692 = vmatpush2.msra.mxu0 0.0
    %2693 = vmatprep.subr.mxu0 0.0
    %2694 = vmatpush2.msra.mxu0 0.0
    %2695 = vmatprep.subr.mxu0 0.0
    %2696 = vmatpush2.msra.mxu0 0.0
    %2697 = vmatprep.subr.mxu0 0.0
    %2698 = vmatpush2.msra.mxu0 0.0
    %2699 = vmatprep.subr.mxu0 0.0
    %2700 = vmatpush2.msra.mxu0 0.0
    %2701 = vmatprep.subr.mxu0 0.0
    %2702 = vmatpush2.msra.mxu0 0.0
    %2703 = vmatprep.subr.mxu0 0.0
    %2704 = vmatpush2.msra.mxu0 0.0
    %2705 = vmatprep.subr.mxu0 0.0
    %2706 = vmatpush2.msra.mxu0 0.0
    %2707 = vmatprep.subr.mxu0 0.0
    %2708 = vmatpush2.msra.mxu0 0.0
    %2709 = vmatprep.subr.mxu0 0.0
    %2710 = vmatpush2.msra.mxu0 0.0
    %2711 = vmatprep.subr.mxu0 0.0
    %2712 = vmatpush2.msra.mxu0 0.0
    %2713 = vmatprep.mubr.f32.mxu0 0.0
    %2714 = vmatmul.mubr.f32.gmra.mxu0 %v2647
    %v2715 = vpop.f32.mrf.mxu0
    %v2716 = vadd.f32 0.0, %v2715
    %v2717 = vpop.f32.mrf.mxu0
    %2718 = vdwg.mxu0
    %v2720 = vsel %vm260, %v2640, 0
    %v2723 = vsel %vm260, %v2716, 0
    %2725 = vmatprep.subr.mxu0 0.0
    %2726 = vmatpush1.msra.mxu0 0.0
    %2727 = vmatprep.subr.mxu0 0.0
    %2728 = vmatpush1.msra.mxu0 0.0
    %2729 = vmatprep.subr.mxu0 0.0
    %2730 = vmatpush1.msra.mxu0 0.0
    %2731 = vmatprep.subr.mxu0 0.0
    %2732 = vmatpush1.msra.mxu0 0.0
    %2733 = vmatprep.subr.mxu0 0.0
    %2734 = vmatpush1.msra.mxu0 0.0
    %2735 = vmatprep.subr.mxu0 0.0
    %2736 = vmatpush1.msra.mxu0 0.0
    %2737 = vmatprep.subr.mxu0 0.0
    %2738 = vmatpush1.msra.mxu0 0.0
    %2739 = vmatprep.subr.mxu0 0.0
    %2740 = vmatpush1.msra.mxu0 0.0
    %2741 = vmatprep.subr.mxu0 0.0
    %2742 = vmatpush1.msra.mxu0 0.0
    %2743 = vmatprep.subr.mxu0 0.0
    %2744 = vmatpush1.msra.mxu0 0.0
    %2745 = vmatprep.subr.mxu0 0.0
    %2746 = vmatpush1.msra.mxu0 0.0
    %2747 = vmatprep.subr.mxu0 0.0
    %2748 = vmatpush1.msra.mxu0 0.0
    %2749 = vmatprep.subr.mxu0 0.0
    %2750 = vmatpush1.msra.mxu0 0.0
    %2751 = vmatprep.subr.mxu0 0.0
    %2752 = vmatpush1.msra.mxu0 0.0
    %2753 = vmatprep.subr.mxu0 0.0
    %2754 = vmatpush1.msra.mxu0 0.0
    %2755 = vmatprep.subr.mxu0 0.0
    %2756 = vmatpush1.msra.mxu0 %v1966
    %2757 = vmatprep.subr.mxu0 0.0
    %2758 = vmatpush2.msra.mxu0 0.0
    %2759 = vmatprep.subr.mxu0 0.0
    %2760 = vmatpush2.msra.mxu0 0.0
    %2761 = vmatprep.subr.mxu0 0.0
    %2762 = vmatpush2.msra.mxu0 0.0
    %2763 = vmatprep.subr.mxu0 0.0
    %2764 = vmatpush2.msra.mxu0 0.0
    %2765 = vmatprep.subr.mxu0 0.0
    %2766 = vmatpush2.msra.mxu0 0.0
    %2767 = vmatprep.subr.mxu0 0.0
    %2768 = vmatpush2.msra.mxu0 0.0
    %2769 = vmatprep.subr.mxu0 0.0
    %2770 = vmatpush2.msra.mxu0 0.0
    %2771 = vmatprep.subr.mxu0 0.0
    %2772 = vmatpush2.msra.mxu0 0.0
    %2773 = vmatprep.subr.mxu0 0.0
    %2774 = vmatpush2.msra.mxu0 0.0
    %2775 = vmatprep.subr.mxu0 0.0
    %2776 = vmatpush2.msra.mxu0 0.0
    %2777 = vmatprep.subr.mxu0 0.0
    %2778 = vmatpush2.msra.mxu0 0.0
    %2779 = vmatprep.subr.mxu0 0.0
    %2780 = vmatpush2.msra.mxu0 0.0
    %2781 = vmatprep.subr.mxu0 0.0
    %2782 = vmatpush2.msra.mxu0 0.0
    %2783 = vmatprep.subr.mxu0 0.0
    %2784 = vmatpush2.msra.mxu0 0.0
    %2785 = vmatprep.subr.mxu0 0.0
    %2786 = vmatpush2.msra.mxu0 0.0
    %2787 = vmatprep.subr.mxu0 0.0
    %2788 = vmatpush2.msra.mxu0 0.0
    %2789 = vmatprep.mubr.f32.mxu0 0.0
    %2790 = vmatmul.mubr.f32.gmra.mxu0 %v2720
    %v2791 = vpop.f32.mrf.mxu0
    %v2792 = vadd.f32 0.0, %v2791
    %v2793 = vpop.f32.mrf.mxu0
    %2794 = vmatprep.mubr.f32.mxu0 0.0
    %2795 = vmatmul.mubr.f32.gmra.mxu0 %v2723
    %v2796 = vpop.f32.mrf.mxu0
    %v2797 = vadd.f32 0.0, %v2796
    %v2798 = vpop.f32.mrf.mxu0
    %2799 = vdwg.mxu0
    %v2801 = vsel %vm260, %v2310, 0
    %v2804 = vsel %vm260, %v2386, 0
    %2806 = vmatprep.subr.mxu0 0.0
    %2807 = vmatpush1.msra.mxu0 0.0
    %2808 = vmatprep.subr.mxu0 0.0
    %2809 = vmatpush1.msra.mxu0 0.0
    %2810 = vmatprep.subr.mxu0 0.0
    %2811 = vmatpush1.msra.mxu0 0.0
    %2812 = vmatprep.subr.mxu0 0.0
    %2813 = vmatpush1.msra.mxu0 0.0
    %2814 = vmatprep.subr.mxu0 0.0
    %2815 = vmatpush1.msra.mxu0 0.0
    %2816 = vmatprep.subr.mxu0 0.0
    %2817 = vmatpush1.msra.mxu0 0.0
    %2818 = vmatprep.subr.mxu0 0.0
    %2819 = vmatpush1.msra.mxu0 0.0
    %2820 = vmatprep.subr.mxu0 0.0
    %2821 = vmatpush1.msra.mxu0 0.0
    %2822 = vmatprep.subr.mxu0 0.0
    %2823 = vmatpush1.msra.mxu0 0.0
    %2824 = vmatprep.subr.mxu0 0.0
    %2825 = vmatpush1.msra.mxu0 0.0
    %2826 = vmatprep.subr.mxu0 0.0
    %2827 = vmatpush1.msra.mxu0 0.0
    %2828 = vmatprep.subr.mxu0 0.0
    %2829 = vmatpush1.msra.mxu0 0.0
    %2830 = vmatprep.subr.mxu0 0.0
    %2831 = vmatpush1.msra.mxu0 0.0
    %2832 = vmatprep.subr.mxu0 0.0
    %2833 = vmatpush1.msra.mxu0 0.0
    %2834 = vmatprep.subr.mxu0 0.0
    %2835 = vmatpush1.msra.mxu0 0.0
    %2836 = vmatprep.subr.mxu0 0.0
    %2837 = vmatpush1.msra.mxu0 %v1965
    %2838 = vmatprep.subr.mxu0 0.0
    %2839 = vmatpush2.msra.mxu0 0.0
    %2840 = vmatprep.subr.mxu0 0.0
    %2841 = vmatpush2.msra.mxu0 0.0
    %2842 = vmatprep.subr.mxu0 0.0
    %2843 = vmatpush2.msra.mxu0 0.0
    %2844 = vmatprep.subr.mxu0 0.0
    %2845 = vmatpush2.msra.mxu0 0.0
    %2846 = vmatprep.subr.mxu0 0.0
    %2847 = vmatpush2.msra.mxu0 0.0
    %2848 = vmatprep.subr.mxu0 0.0
    %2849 = vmatpush2.msra.mxu0 0.0
    %2850 = vmatprep.subr.mxu0 0.0
    %2851 = vmatpush2.msra.mxu0 0.0
    %2852 = vmatprep.subr.mxu0 0.0
    %2853 = vmatpush2.msra.mxu0 0.0
    %2854 = vmatprep.subr.mxu0 0.0
    %2855 = vmatpush2.msra.mxu0 0.0
    %2856 = vmatprep.subr.mxu0 0.0
    %2857 = vmatpush2.msra.mxu0 0.0
    %2858 = vmatprep.subr.mxu0 0.0
    %2859 = vmatpush2.msra.mxu0 0.0
    %2860 = vmatprep.subr.mxu0 0.0
    %2861 = vmatpush2.msra.mxu0 0.0
    %2862 = vmatprep.subr.mxu0 0.0
    %2863 = vmatpush2.msra.mxu0 0.0
    %2864 = vmatprep.subr.mxu0 0.0
    %2865 = vmatpush2.msra.mxu0 0.0
    %2866 = vmatprep.subr.mxu0 0.0
    %2867 = vmatpush2.msra.mxu0 0.0
    %2868 = vmatprep.subr.mxu0 0.0
    %2869 = vmatpush2.msra.mxu0 0.0
    %2870 = vmatprep.mubr.f32.mxu0 0.0
    %2871 = vmatmul.mubr.f32.gmra.mxu0 %v2801
    %v2872 = vpop.f32.mrf.mxu0
    %v2873 = vadd.f32 %v2792, %v2872
    %v2874 = vpop.f32.mrf.mxu0
    %2875 = vmatprep.mubr.f32.mxu0 0.0
    %2876 = vmatmul.mubr.f32.gmra.mxu0 %v2804
    %v2877 = vpop.f32.mrf.mxu0
    %v2878 = vadd.f32 %v2797, %v2877
    %v2879 = vpop.f32.mrf.mxu0
    %2880 = vdwg.mxu0
    %2881 = vrot.lane.b32.xlu0 %v2057, 112
    %v2882 = vpop.permute.xlu0 %2881
    %2883 = vrot.lane.b32.xlu0 %v2049, 80
    %v2884 = vpop.permute.xlu0 %2883
    %v2885 = vsel %vm260, %v2882, 0
    %v2887 = vsel %vm260, %v2884, 0
    %2889 = vmatprep.subr.mxu0 0.0
    %2890 = vmatpush1.xpose.msra.mxu0 0.0
    %2891 = vmatprep.subr.mxu0 0.0
    %2892 = vmatpush1.xpose.msra.mxu0 0.0
    %2893 = vmatprep.subr.mxu0 0.0
    %2894 = vmatpush1.xpose.msra.mxu0 0.0
    %2895 = vmatprep.subr.mxu0 0.0
    %2896 = vmatpush1.xpose.msra.mxu0 0.0
    %2897 = vmatprep.subr.mxu0 0.0
    %2898 = vmatpush1.xpose.msra.mxu0 0.0
    %2899 = vmatprep.subr.mxu0 0.0
    %2900 = vmatpush1.xpose.msra.mxu0 0.0
    %2901 = vmatprep.subr.mxu0 0.0
    %2902 = vmatpush1.xpose.msra.mxu0 0.0
    %2903 = vmatprep.subr.mxu0 0.0
    %2904 = vmatpush1.xpose.msra.mxu0 0.0
    %2905 = vmatprep.subr.mxu0 0.0
    %2906 = vmatpush1.xpose.msra.mxu0 0.0
    %2907 = vmatprep.subr.mxu0 0.0
    %2908 = vmatpush1.xpose.msra.mxu0 0.0
    %2909 = vmatprep.subr.mxu0 0.0
    %2910 = vmatpush1.xpose.msra.mxu0 0.0
    %2911 = vmatprep.subr.mxu0 0.0
    %2912 = vmatpush1.xpose.msra.mxu0 0.0
    %2913 = vmatprep.subr.mxu0 0.0
    %2914 = vmatpush1.xpose.msra.mxu0 0.0
    %2915 = vmatprep.subr.mxu0 0.0
    %2916 = vmatpush1.xpose.msra.mxu0 0.0
    %2917 = vmatprep.subr.mxu0 0.0
    %2918 = vmatpush1.xpose.msra.mxu0 0.0
    %2919 = vmatprep.subr.mxu0 0.0
    %2920 = vmatpush1.xpose.msra.mxu0 %v2887
    %2921 = vmatprep.subr.mxu0 0.0
    %2922 = vmatpush2.xpose.msra.mxu0 0.0
    %2923 = vmatprep.subr.mxu0 0.0
    %2924 = vmatpush2.xpose.msra.mxu0 0.0
    %2925 = vmatprep.subr.mxu0 0.0
    %2926 = vmatpush2.xpose.msra.mxu0 0.0
    %2927 = vmatprep.subr.mxu0 0.0
    %2928 = vmatpush2.xpose.msra.mxu0 0.0
    %2929 = vmatprep.subr.mxu0 0.0
    %2930 = vmatpush2.xpose.msra.mxu0 0.0
    %2931 = vmatprep.subr.mxu0 0.0
    %2932 = vmatpush2.xpose.msra.mxu0 0.0
    %2933 = vmatprep.subr.mxu0 0.0
    %2934 = vmatpush2.xpose.msra.mxu0 0.0
    %2935 = vmatprep.subr.mxu0 0.0
    %2936 = vmatpush2.xpose.msra.mxu0 0.0
    %2937 = vmatprep.subr.mxu0 0.0
    %2938 = vmatpush2.xpose.msra.mxu0 0.0
    %2939 = vmatprep.subr.mxu0 0.0
    %2940 = vmatpush2.xpose.msra.mxu0 0.0
    %2941 = vmatprep.subr.mxu0 0.0
    %2942 = vmatpush2.xpose.msra.mxu0 0.0
    %2943 = vmatprep.subr.mxu0 0.0
    %2944 = vmatpush2.xpose.msra.mxu0 0.0
    %2945 = vmatprep.subr.mxu0 0.0
    %2946 = vmatpush2.xpose.msra.mxu0 0.0
    %2947 = vmatprep.subr.mxu0 0.0
    %2948 = vmatpush2.xpose.msra.mxu0 0.0
    %2949 = vmatprep.subr.mxu0 0.0
    %2950 = vmatpush2.xpose.msra.mxu0 0.0
    %2951 = vmatprep.subr.mxu0 0.0
    %2952 = vmatpush2.xpose.msra.mxu0 0.0
    %2953 = vmatprep.mubr.f32.mxu0 0.0
    %2954 = vmatmul.mubr.f32.gmra.mxu0 %v2885
    %v2955 = vpop.f32.mrf.mxu0
    %v2956 = vadd.f32 %v111, %v2955
    %v2957 = vpop.f32.mrf.mxu0
    %2958 = vdwg.mxu0
    %2959 = vrot.lane.b32.xlu0 %v2058, 112
    %v2960 = vpop.permute.xlu0 %2959
    %2961 = vrot.lane.b32.xlu0 %v2054, 80
    %v2962 = vpop.permute.xlu0 %2961
    %v2963 = vsel %vm260, %v2960, 0
    %v2965 = vsel %vm260, %v2962, 0
    %2967 = vmatprep.subr.mxu0 0.0
    %2968 = vmatpush1.xpose.msra.mxu0 0.0
    %2969 = vmatprep.subr.mxu0 0.0
    %2970 = vmatpush1.xpose.msra.mxu0 0.0
    %2971 = vmatprep.subr.mxu0 0.0
    %2972 = vmatpush1.xpose.msra.mxu0 0.0
    %2973 = vmatprep.subr.mxu0 0.0
    %2974 = vmatpush1.xpose.msra.mxu0 0.0
    %2975 = vmatprep.subr.mxu0 0.0
    %2976 = vmatpush1.xpose.msra.mxu0 0.0
    %2977 = vmatprep.subr.mxu0 0.0
    %2978 = vmatpush1.xpose.msra.mxu0 0.0
    %2979 = vmatprep.subr.mxu0 0.0
    %2980 = vmatpush1.xpose.msra.mxu0 0.0
    %2981 = vmatprep.subr.mxu0 0.0
    %2982 = vmatpush1.xpose.msra.mxu0 0.0
    %2983 = vmatprep.subr.mxu0 0.0
    %2984 = vmatpush1.xpose.msra.mxu0 0.0
    %2985 = vmatprep.subr.mxu0 0.0
    %2986 = vmatpush1.xpose.msra.mxu0 0.0
    %2987 = vmatprep.subr.mxu0 0.0
    %2988 = vmatpush1.xpose.msra.mxu0 0.0
    %2989 = vmatprep.subr.mxu0 0.0
    %2990 = vmatpush1.xpose.msra.mxu0 0.0
    %2991 = vmatprep.subr.mxu0 0.0
    %2992 = vmatpush1.xpose.msra.mxu0 0.0
    %2993 = vmatprep.subr.mxu0 0.0
    %2994 = vmatpush1.xpose.msra.mxu0 0.0
    %2995 = vmatprep.subr.mxu0 0.0
    %2996 = vmatpush1.xpose.msra.mxu0 0.0
    %2997 = vmatprep.subr.mxu0 0.0
    %2998 = vmatpush1.xpose.msra.mxu0 %v2965
    %2999 = vmatprep.subr.mxu0 0.0
    %3000 = vmatpush2.xpose.msra.mxu0 0.0
    %3001 = vmatprep.subr.mxu0 0.0
    %3002 = vmatpush2.xpose.msra.mxu0 0.0
    %3003 = vmatprep.subr.mxu0 0.0
    %3004 = vmatpush2.xpose.msra.mxu0 0.0
    %3005 = vmatprep.subr.mxu0 0.0
    %3006 = vmatpush2.xpose.msra.mxu0 0.0
    %3007 = vmatprep.subr.mxu0 0.0
    %3008 = vmatpush2.xpose.msra.mxu0 0.0
    %3009 = vmatprep.subr.mxu0 0.0
    %3010 = vmatpush2.xpose.msra.mxu0 0.0
    %3011 = vmatprep.subr.mxu0 0.0
    %3012 = vmatpush2.xpose.msra.mxu0 0.0
    %3013 = vmatprep.subr.mxu0 0.0
    %3014 = vmatpush2.xpose.msra.mxu0 0.0
    %3015 = vmatprep.subr.mxu0 0.0
    %3016 = vmatpush2.xpose.msra.mxu0 0.0
    %3017 = vmatprep.subr.mxu0 0.0
    %3018 = vmatpush2.xpose.msra.mxu0 0.0
    %3019 = vmatprep.subr.mxu0 0.0
    %3020 = vmatpush2.xpose.msra.mxu0 0.0
    %3021 = vmatprep.subr.mxu0 0.0
    %3022 = vmatpush2.xpose.msra.mxu0 0.0
    %3023 = vmatprep.subr.mxu0 0.0
    %3024 = vmatpush2.xpose.msra.mxu0 0.0
    %3025 = vmatprep.subr.mxu0 0.0
    %3026 = vmatpush2.xpose.msra.mxu0 0.0
    %3027 = vmatprep.subr.mxu0 0.0
    %3028 = vmatpush2.xpose.msra.mxu0 0.0
    %3029 = vmatprep.subr.mxu0 0.0
    %3030 = vmatpush2.xpose.msra.mxu0 0.0
    %3031 = vmatprep.mubr.f32.mxu0 0.0
    %3032 = vmatmul.mubr.f32.gmra.mxu0 %v2963
    %v3033 = vpop.f32.mrf.mxu0
    %v3034 = vadd.f32 %v111, %v3033
    %v3035 = vpop.f32.mrf.mxu0
    %3036 = vdwg.mxu0
    %v3037 = vsel %vm260, %v2956, -inf
    %3038 = vmax.xlane.f32.xlu0 %v3037
    %v3039 = vpop.xlane.xlu0 %3038
    %v3040 = vsel %vm260, %v3034, -inf
    %3041 = vmax.xlane.f32.xlu0 %v3040
    %v3042 = vpop.xlane.xlu0 %3041
    %v3043 = vsub.f32 %v2956, %v3039
    %v3044 = vsub.f32 %v3034, %v3042
    %v3045 = vmul.f32 %v3043, 1.442695
    %v3046 = vpow.pop %v3045
    %v3047 = vmul.f32 %v3044, 1.442695
    %v3048 = vpow.pop %v3047
    %v3049 = vsel %vm260, %v3046, 0.0
    %3050 = vadd.xlane.f32.xlu0 %v3049
    %v3051 = vpop.xlane.xlu0 %3050
    %v3052 = vsel %vm260, %v3048, 0.0
    %3053 = vadd.xlane.f32.xlu0 %v3052
    %v3054 = vpop.xlane.xlu0 %3053
    %v3055 = vrcp.pop %v3051
    %v3056 = vrcp.pop %v3054
    %v3057 = vmul.f32 %v3046, %v3055
    %v3058 = vmul.f32 %v3048, %v3056
    %3059 = vrot.lane.b32.xlu0 %v2049, 48
    %v3060 = vpop.permute.xlu0 %3059
    %v3063 = vsel %vm260, %v3057, 0
    %3065 = vmatprep.subr.mxu0 0.0
    %3066 = vmatpush1.msra.mxu0 0.0
    %3067 = vmatprep.subr.mxu0 0.0
    %3068 = vmatpush1.msra.mxu0 0.0
    %3069 = vmatprep.subr.mxu0 0.0
    %3070 = vmatpush1.msra.mxu0 0.0
    %3071 = vmatprep.subr.mxu0 0.0
    %3072 = vmatpush1.msra.mxu0 0.0
    %3073 = vmatprep.subr.mxu0 0.0
    %3074 = vmatpush1.msra.mxu0 0.0
    %3075 = vmatprep.subr.mxu0 0.0
    %3076 = vmatpush1.msra.mxu0 0.0
    %3077 = vmatprep.subr.mxu0 0.0
    %3078 = vmatpush1.msra.mxu0 0.0
    %3079 = vmatprep.subr.mxu0 0.0
    %3080 = vmatpush1.msra.mxu0 0.0
    %3081 = vmatprep.subr.mxu0 0.0
    %3082 = vmatpush1.msra.mxu0 0.0
    %3083 = vmatprep.subr.mxu0 0.0
    %3084 = vmatpush1.msra.mxu0 0.0
    %3085 = vmatprep.subr.mxu0 0.0
    %3086 = vmatpush1.msra.mxu0 0.0
    %3087 = vmatprep.subr.mxu0 0.0
    %3088 = vmatpush1.msra.mxu0 0.0
    %3089 = vmatprep.subr.mxu0 0.0
    %3090 = vmatpush1.msra.mxu0 0.0
    %3091 = vmatprep.subr.mxu0 0.0
    %3092 = vmatpush1.msra.mxu0 0.0
    %3093 = vmatprep.subr.mxu0 0.0
    %3094 = vmatpush1.msra.mxu0 0.0
    %3095 = vmatprep.subr.mxu0 0.0
    %3096 = vmatpush1.msra.mxu0 %v3060
    %3097 = vmatprep.subr.mxu0 0.0
    %3098 = vmatpush2.msra.mxu0 0.0
    %3099 = vmatprep.subr.mxu0 0.0
    %3100 = vmatpush2.msra.mxu0 0.0
    %3101 = vmatprep.subr.mxu0 0.0
    %3102 = vmatpush2.msra.mxu0 0.0
    %3103 = vmatprep.subr.mxu0 0.0
    %3104 = vmatpush2.msra.mxu0 0.0
    %3105 = vmatprep.subr.mxu0 0.0
    %3106 = vmatpush2.msra.mxu0 0.0
    %3107 = vmatprep.subr.mxu0 0.0
    %3108 = vmatpush2.msra.mxu0 0.0
    %3109 = vmatprep.subr.mxu0 0.0
    %3110 = vmatpush2.msra.mxu0 0.0
    %3111 = vmatprep.subr.mxu0 0.0
    %3112 = vmatpush2.msra.mxu0 0.0
    %3113 = vmatprep.subr.mxu0 0.0
    %3114 = vmatpush2.msra.mxu0 0.0
    %3115 = vmatprep.subr.mxu0 0.0
    %3116 = vmatpush2.msra.mxu0 0.0
    %3117 = vmatprep.subr.mxu0 0.0
    %3118 = vmatpush2.msra.mxu0 0.0
    %3119 = vmatprep.subr.mxu0 0.0
    %3120 = vmatpush2.msra.mxu0 0.0
    %3121 = vmatprep.subr.mxu0 0.0
    %3122 = vmatpush2.msra.mxu0 0.0
    %3123 = vmatprep.subr.mxu0 0.0
    %3124 = vmatpush2.msra.mxu0 0.0
    %3125 = vmatprep.subr.mxu0 0.0
    %3126 = vmatpush2.msra.mxu0 0.0
    %3127 = vmatprep.subr.mxu0 0.0
    %3128 = vmatpush2.msra.mxu0 0.0
    %3129 = vmatprep.mubr.f32.mxu0 0.0
    %3130 = vmatmul.mubr.f32.gmra.mxu0 %v3063
    %v3131 = vpop.f32.mrf.mxu0
    %v3132 = vadd.f32 0.0, %v3131
    %v3133 = vpop.f32.mrf.mxu0
    %3134 = vdwg.mxu0
    %3135 = vrot.lane.b32.xlu0 %v2054, 48
    %v3136 = vpop.permute.xlu0 %3135
    %v3139 = vsel %vm260, %v3058, 0
    %3141 = vmatprep.subr.mxu0 0.0
    %3142 = vmatpush1.msra.mxu0 0.0
    %3143 = vmatprep.subr.mxu0 0.0
    %3144 = vmatpush1.msra.mxu0 0.0
    %3145 = vmatprep.subr.mxu0 0.0
    %3146 = vmatpush1.msra.mxu0 0.0
    %3147 = vmatprep.subr.mxu0 0.0
    %3148 = vmatpush1.msra.mxu0 0.0
    %3149 = vmatprep.subr.mxu0 0.0
    %3150 = vmatpush1.msra.mxu0 0.0
    %3151 = vmatprep.subr.mxu0 0.0
    %3152 = vmatpush1.msra.mxu0 0.0
    %3153 = vmatprep.subr.mxu0 0.0
    %3154 = vmatpush1.msra.mxu0 0.0
    %3155 = vmatprep.subr.mxu0 0.0
    %3156 = vmatpush1.msra.mxu0 0.0
    %3157 = vmatprep.subr.mxu0 0.0
    %3158 = vmatpush1.msra.mxu0 0.0
    %3159 = vmatprep.subr.mxu0 0.0
    %3160 = vmatpush1.msra.mxu0 0.0
    %3161 = vmatprep.subr.mxu0 0.0
    %3162 = vmatpush1.msra.mxu0 0.0
    %3163 = vmatprep.subr.mxu0 0.0
    %3164 = vmatpush1.msra.mxu0 0.0
    %3165 = vmatprep.subr.mxu0 0.0
    %3166 = vmatpush1.msra.mxu0 0.0
    %3167 = vmatprep.subr.mxu0 0.0
    %3168 = vmatpush1.msra.mxu0 0.0
    %3169 = vmatprep.subr.mxu0 0.0
    %3170 = vmatpush1.msra.mxu0 0.0
    %3171 = vmatprep.subr.mxu0 0.0
    %3172 = vmatpush1.msra.mxu0 %v3136
    %3173 = vmatprep.subr.mxu0 0.0
    %3174 = vmatpush2.msra.mxu0 0.0
    %3175 = vmatprep.subr.mxu0 0.0
    %3176 = vmatpush2.msra.mxu0 0.0
    %3177 = vmatprep.subr.mxu0 0.0
    %3178 = vmatpush2.msra.mxu0 0.0
    %3179 = vmatprep.subr.mxu0 0.0
    %3180 = vmatpush2.msra.mxu0 0.0
    %3181 = vmatprep.subr.mxu0 0.0
    %3182 = vmatpush2.msra.mxu0 0.0
    %3183 = vmatprep.subr.mxu0 0.0
    %3184 = vmatpush2.msra.mxu0 0.0
    %3185 = vmatprep.subr.mxu0 0.0
    %3186 = vmatpush2.msra.mxu0 0.0
    %3187 = vmatprep.subr.mxu0 0.0
    %3188 = vmatpush2.msra.mxu0 0.0
    %3189 = vmatprep.subr.mxu0 0.0
    %3190 = vmatpush2.msra.mxu0 0.0
    %3191 = vmatprep.subr.mxu0 0.0
    %3192 = vmatpush2.msra.mxu0 0.0
    %3193 = vmatprep.subr.mxu0 0.0
    %3194 = vmatpush2.msra.mxu0 0.0
    %3195 = vmatprep.subr.mxu0 0.0
    %3196 = vmatpush2.msra.mxu0 0.0
    %3197 = vmatprep.subr.mxu0 0.0
    %3198 = vmatpush2.msra.mxu0 0.0
    %3199 = vmatprep.subr.mxu0 0.0
    %3200 = vmatpush2.msra.mxu0 0.0
    %3201 = vmatprep.subr.mxu0 0.0
    %3202 = vmatpush2.msra.mxu0 0.0
    %3203 = vmatprep.subr.mxu0 0.0
    %3204 = vmatpush2.msra.mxu0 0.0
    %3205 = vmatprep.mubr.f32.mxu0 0.0
    %3206 = vmatmul.mubr.f32.gmra.mxu0 %v3139
    %v3207 = vpop.f32.mrf.mxu0
    %v3208 = vadd.f32 0.0, %v3207
    %v3209 = vpop.f32.mrf.mxu0
    %3210 = vdwg.mxu0
    %v3212 = vsel %vm260, %v3132, 0
    %v3215 = vsel %vm260, %v3208, 0
    %3217 = vmatprep.subr.mxu0 0.0
    %3218 = vmatpush1.msra.mxu0 0.0
    %3219 = vmatprep.subr.mxu0 0.0
    %3220 = vmatpush1.msra.mxu0 0.0
    %3221 = vmatprep.subr.mxu0 0.0
    %3222 = vmatpush1.msra.mxu0 0.0
    %3223 = vmatprep.subr.mxu0 0.0
    %3224 = vmatpush1.msra.mxu0 0.0
    %3225 = vmatprep.subr.mxu0 0.0
    %3226 = vmatpush1.msra.mxu0 0.0
    %3227 = vmatprep.subr.mxu0 0.0
    %3228 = vmatpush1.msra.mxu0 0.0
    %3229 = vmatprep.subr.mxu0 0.0
    %3230 = vmatpush1.msra.mxu0 0.0
    %3231 = vmatprep.subr.mxu0 0.0
    %3232 = vmatpush1.msra.mxu0 0.0
    %3233 = vmatprep.subr.mxu0 0.0
    %3234 = vmatpush1.msra.mxu0 0.0
    %3235 = vmatprep.subr.mxu0 0.0
    %3236 = vmatpush1.msra.mxu0 0.0
    %3237 = vmatprep.subr.mxu0 0.0
    %3238 = vmatpush1.msra.mxu0 0.0
    %3239 = vmatprep.subr.mxu0 0.0
    %3240 = vmatpush1.msra.mxu0 0.0
    %3241 = vmatprep.subr.mxu0 0.0
    %3242 = vmatpush1.msra.mxu0 0.0
    %3243 = vmatprep.subr.mxu0 0.0
    %3244 = vmatpush1.msra.mxu0 0.0
    %3245 = vmatprep.subr.mxu0 0.0
    %3246 = vmatpush1.msra.mxu0 0.0
    %3247 = vmatprep.subr.mxu0 0.0
    %3248 = vmatpush1.msra.mxu0 %v1967
    %3249 = vmatprep.subr.mxu0 0.0
    %3250 = vmatpush2.msra.mxu0 0.0
    %3251 = vmatprep.subr.mxu0 0.0
    %3252 = vmatpush2.msra.mxu0 0.0
    %3253 = vmatprep.subr.mxu0 0.0
    %3254 = vmatpush2.msra.mxu0 0.0
    %3255 = vmatprep.subr.mxu0 0.0
    %3256 = vmatpush2.msra.mxu0 0.0
    %3257 = vmatprep.subr.mxu0 0.0
    %3258 = vmatpush2.msra.mxu0 0.0
    %3259 = vmatprep.subr.mxu0 0.0
    %3260 = vmatpush2.msra.mxu0 0.0
    %3261 = vmatprep.subr.mxu0 0.0
    %3262 = vmatpush2.msra.mxu0 0.0
    %3263 = vmatprep.subr.mxu0 0.0
    %3264 = vmatpush2.msra.mxu0 0.0
    %3265 = vmatprep.subr.mxu0 0.0
    %3266 = vmatpush2.msra.mxu0 0.0
    %3267 = vmatprep.subr.mxu0 0.0
    %3268 = vmatpush2.msra.mxu0 0.0
    %3269 = vmatprep.subr.mxu0 0.0
    %3270 = vmatpush2.msra.mxu0 0.0
    %3271 = vmatprep.subr.mxu0 0.0
    %3272 = vmatpush2.msra.mxu0 0.0
    %3273 = vmatprep.subr.mxu0 0.0
    %3274 = vmatpush2.msra.mxu0 0.0
    %3275 = vmatprep.subr.mxu0 0.0
    %3276 = vmatpush2.msra.mxu0 0.0
    %3277 = vmatprep.subr.mxu0 0.0
    %3278 = vmatpush2.msra.mxu0 0.0
    %3279 = vmatprep.subr.mxu0 0.0
    %3280 = vmatpush2.msra.mxu0 0.0
    %3281 = vmatprep.mubr.f32.mxu0 0.0
    %3282 = vmatmul.mubr.f32.gmra.mxu0 %v3212
    %v3283 = vpop.f32.mrf.mxu0
    %v3284 = vadd.f32 0.0, %v3283
    %v3285 = vpop.f32.mrf.mxu0
    %3286 = vmatprep.mubr.f32.mxu0 0.0
    %3287 = vmatmul.mubr.f32.gmra.mxu0 %v3215
    %v3288 = vpop.f32.mrf.mxu0
    %v3289 = vadd.f32 0.0, %v3288
    %v3290 = vpop.f32.mrf.mxu0
    %3291 = vdwg.mxu0
    %v3292 = vadd.f32 %v2873, %v3284
    %v3293 = vadd.f32 %v2878, %v3289
    %3294 = vrot.lane.b32.xlu0 %v2057, 104
    %v3295 = vpop.permute.xlu0 %3294
    %3296 = vrot.lane.b32.xlu0 %v2049, 72
    %v3297 = vpop.permute.xlu0 %3296
    %v3298 = vsel %vm260, %v3295, 0
    %v3300 = vsel %vm260, %v3297, 0
    %3302 = vmatprep.subr.mxu0 0.0
    %3303 = vmatpush1.xpose.msra.mxu0 0.0
    %3304 = vmatprep.subr.mxu0 0.0
    %3305 = vmatpush1.xpose.msra.mxu0 0.0
    %3306 = vmatprep.subr.mxu0 0.0
    %3307 = vmatpush1.xpose.msra.mxu0 0.0
    %3308 = vmatprep.subr.mxu0 0.0
    %3309 = vmatpush1.xpose.msra.mxu0 0.0
    %3310 = vmatprep.subr.mxu0 0.0
    %3311 = vmatpush1.xpose.msra.mxu0 0.0
    %3312 = vmatprep.subr.mxu0 0.0
    %3313 = vmatpush1.xpose.msra.mxu0 0.0
    %3314 = vmatprep.subr.mxu0 0.0
    %3315 = vmatpush1.xpose.msra.mxu0 0.0
    %3316 = vmatprep.subr.mxu0 0.0
    %3317 = vmatpush1.xpose.msra.mxu0 0.0
    %3318 = vmatprep.subr.mxu0 0.0
    %3319 = vmatpush1.xpose.msra.mxu0 0.0
    %3320 = vmatprep.subr.mxu0 0.0
    %3321 = vmatpush1.xpose.msra.mxu0 0.0
    %3322 = vmatprep.subr.mxu0 0.0
    %3323 = vmatpush1.xpose.msra.mxu0 0.0
    %3324 = vmatprep.subr.mxu0 0.0
    %3325 = vmatpush1.xpose.msra.mxu0 0.0
    %3326 = vmatprep.subr.mxu0 0.0
    %3327 = vmatpush1.xpose.msra.mxu0 0.0
    %3328 = vmatprep.subr.mxu0 0.0
    %3329 = vmatpush1.xpose.msra.mxu0 0.0
    %3330 = vmatprep.subr.mxu0 0.0
    %3331 = vmatpush1.xpose.msra.mxu0 0.0
    %3332 = vmatprep.subr.mxu0 0.0
    %3333 = vmatpush1.xpose.msra.mxu0 %v3300
    %3334 = vmatprep.subr.mxu0 0.0
    %3335 = vmatpush2.xpose.msra.mxu0 0.0
    %3336 = vmatprep.subr.mxu0 0.0
    %3337 = vmatpush2.xpose.msra.mxu0 0.0
    %3338 = vmatprep.subr.mxu0 0.0
    %3339 = vmatpush2.xpose.msra.mxu0 0.0
    %3340 = vmatprep.subr.mxu0 0.0
    %3341 = vmatpush2.xpose.msra.mxu0 0.0
    %3342 = vmatprep.subr.mxu0 0.0
    %3343 = vmatpush2.xpose.msra.mxu0 0.0
    %3344 = vmatprep.subr.mxu0 0.0
    %3345 = vmatpush2.xpose.msra.mxu0 0.0
    %3346 = vmatprep.subr.mxu0 0.0
    %3347 = vmatpush2.xpose.msra.mxu0 0.0
    %3348 = vmatprep.subr.mxu0 0.0
    %3349 = vmatpush2.xpose.msra.mxu0 0.0
    %3350 = vmatprep.subr.mxu0 0.0
    %3351 = vmatpush2.xpose.msra.mxu0 0.0
    %3352 = vmatprep.subr.mxu0 0.0
    %3353 = vmatpush2.xpose.msra.mxu0 0.0
    %3354 = vmatprep.subr.mxu0 0.0
    %3355 = vmatpush2.xpose.msra.mxu0 0.0
    %3356 = vmatprep.subr.mxu0 0.0
    %3357 = vmatpush2.xpose.msra.mxu0 0.0
    %3358 = vmatprep.subr.mxu0 0.0
    %3359 = vmatpush2.xpose.msra.mxu0 0.0
    %3360 = vmatprep.subr.mxu0 0.0
    %3361 = vmatpush2.xpose.msra.mxu0 0.0
    %3362 = vmatprep.subr.mxu0 0.0
    %3363 = vmatpush2.xpose.msra.mxu0 0.0
    %3364 = vmatprep.subr.mxu0 0.0
    %3365 = vmatpush2.xpose.msra.mxu0 0.0
    %3366 = vmatprep.mubr.f32.mxu0 0.0
    %3367 = vmatmul.mubr.f32.gmra.mxu0 %v3298
    %v3368 = vpop.f32.mrf.mxu0
    %v3369 = vadd.f32 %v111, %v3368
    %v3370 = vpop.f32.mrf.mxu0
    %3371 = vdwg.mxu0
    %3372 = vrot.lane.b32.xlu0 %v2058, 104
    %v3373 = vpop.permute.xlu0 %3372
    %3374 = vrot.lane.b32.xlu0 %v2054, 72
    %v3375 = vpop.permute.xlu0 %3374
    %v3376 = vsel %vm260, %v3373, 0
    %v3378 = vsel %vm260, %v3375, 0
    %3380 = vmatprep.subr.mxu0 0.0
    %3381 = vmatpush1.xpose.msra.mxu0 0.0
    %3382 = vmatprep.subr.mxu0 0.0
    %3383 = vmatpush1.xpose.msra.mxu0 0.0
    %3384 = vmatprep.subr.mxu0 0.0
    %3385 = vmatpush1.xpose.msra.mxu0 0.0
    %3386 = vmatprep.subr.mxu0 0.0
    %3387 = vmatpush1.xpose.msra.mxu0 0.0
    %3388 = vmatprep.subr.mxu0 0.0
    %3389 = vmatpush1.xpose.msra.mxu0 0.0
    %3390 = vmatprep.subr.mxu0 0.0
    %3391 = vmatpush1.xpose.msra.mxu0 0.0
    %3392 = vmatprep.subr.mxu0 0.0
    %3393 = vmatpush1.xpose.msra.mxu0 0.0
    %3394 = vmatprep.subr.mxu0 0.0
    %3395 = vmatpush1.xpose.msra.mxu0 0.0
    %3396 = vmatprep.subr.mxu0 0.0
    %3397 = vmatpush1.xpose.msra.mxu0 0.0
    %3398 = vmatprep.subr.mxu0 0.0
    %3399 = vmatpush1.xpose.msra.mxu0 0.0
    %3400 = vmatprep.subr.mxu0 0.0
    %3401 = vmatpush1.xpose.msra.mxu0 0.0
    %3402 = vmatprep.subr.mxu0 0.0
    %3403 = vmatpush1.xpose.msra.mxu0 0.0
    %3404 = vmatprep.subr.mxu0 0.0
    %3405 = vmatpush1.xpose.msra.mxu0 0.0
    %3406 = vmatprep.subr.mxu0 0.0
    %3407 = vmatpush1.xpose.msra.mxu0 0.0
    %3408 = vmatprep.subr.mxu0 0.0
    %3409 = vmatpush1.xpose.msra.mxu0 0.0
    %3410 = vmatprep.subr.mxu0 0.0
    %3411 = vmatpush1.xpose.msra.mxu0 %v3378
    %3412 = vmatprep.subr.mxu0 0.0
    %3413 = vmatpush2.xpose.msra.mxu0 0.0
    %3414 = vmatprep.subr.mxu0 0.0
    %3415 = vmatpush2.xpose.msra.mxu0 0.0
    %3416 = vmatprep.subr.mxu0 0.0
    %3417 = vmatpush2.xpose.msra.mxu0 0.0
    %3418 = vmatprep.subr.mxu0 0.0
    %3419 = vmatpush2.xpose.msra.mxu0 0.0
    %3420 = vmatprep.subr.mxu0 0.0
    %3421 = vmatpush2.xpose.msra.mxu0 0.0
    %3422 = vmatprep.subr.mxu0 0.0
    %3423 = vmatpush2.xpose.msra.mxu0 0.0
    %3424 = vmatprep.subr.mxu0 0.0
    %3425 = vmatpush2.xpose.msra.mxu0 0.0
    %3426 = vmatprep.subr.mxu0 0.0
    %3427 = vmatpush2.xpose.msra.mxu0 0.0
    %3428 = vmatprep.subr.mxu0 0.0
    %3429 = vmatpush2.xpose.msra.mxu0 0.0
    %3430 = vmatprep.subr.mxu0 0.0
    %3431 = vmatpush2.xpose.msra.mxu0 0.0
    %3432 = vmatprep.subr.mxu0 0.0
    %3433 = vmatpush2.xpose.msra.mxu0 0.0
    %3434 = vmatprep.subr.mxu0 0.0
    %3435 = vmatpush2.xpose.msra.mxu0 0.0
    %3436 = vmatprep.subr.mxu0 0.0
    %3437 = vmatpush2.xpose.msra.mxu0 0.0
    %3438 = vmatprep.subr.mxu0 0.0
    %3439 = vmatpush2.xpose.msra.mxu0 0.0
    %3440 = vmatprep.subr.mxu0 0.0
    %3441 = vmatpush2.xpose.msra.mxu0 0.0
    %3442 = vmatprep.subr.mxu0 0.0
    %3443 = vmatpush2.xpose.msra.mxu0 0.0
    %3444 = vmatprep.mubr.f32.mxu0 0.0
    %3445 = vmatmul.mubr.f32.gmra.mxu0 %v3376
    %v3446 = vpop.f32.mrf.mxu0
    %v3447 = vadd.f32 %v111, %v3446
    %v3448 = vpop.f32.mrf.mxu0
    %3449 = vdwg.mxu0
    %v3450 = vsel %vm260, %v3369, -inf
    %3451 = vmax.xlane.f32.xlu0 %v3450
    %v3452 = vpop.xlane.xlu0 %3451
    %v3453 = vsel %vm260, %v3447, -inf
    %3454 = vmax.xlane.f32.xlu0 %v3453
    %v3455 = vpop.xlane.xlu0 %3454
    %v3456 = vsub.f32 %v3369, %v3452
    %v3457 = vsub.f32 %v3447, %v3455
    %v3458 = vmul.f32 %v3456, 1.442695
    %v3459 = vpow.pop %v3458
    %v3460 = vmul.f32 %v3457, 1.442695
    %v3461 = vpow.pop %v3460
    %v3462 = vsel %vm260, %v3459, 0.0
    %3463 = vadd.xlane.f32.xlu0 %v3462
    %v3464 = vpop.xlane.xlu0 %3463
    %v3465 = vsel %vm260, %v3461, 0.0
    %3466 = vadd.xlane.f32.xlu0 %v3465
    %v3467 = vpop.xlane.xlu0 %3466
    %v3468 = vrcp.pop %v3464
    %v3469 = vrcp.pop %v3467
    %v3470 = vmul.f32 %v3459, %v3468
    %v3471 = vmul.f32 %v3461, %v3469
    %3472 = vrot.lane.b32.xlu0 %v2049, 40
    %v3473 = vpop.permute.xlu0 %3472
    %v3476 = vsel %vm260, %v3470, 0
    %3478 = vmatprep.subr.mxu0 0.0
    %3479 = vmatpush1.msra.mxu0 0.0
    %3480 = vmatprep.subr.mxu0 0.0
    %3481 = vmatpush1.msra.mxu0 0.0
    %3482 = vmatprep.subr.mxu0 0.0
    %3483 = vmatpush1.msra.mxu0 0.0
    %3484 = vmatprep.subr.mxu0 0.0
    %3485 = vmatpush1.msra.mxu0 0.0
    %3486 = vmatprep.subr.mxu0 0.0
    %3487 = vmatpush1.msra.mxu0 0.0
    %3488 = vmatprep.subr.mxu0 0.0
    %3489 = vmatpush1.msra.mxu0 0.0
    %3490 = vmatprep.subr.mxu0 0.0
    %3491 = vmatpush1.msra.mxu0 0.0
    %3492 = vmatprep.subr.mxu0 0.0
    %3493 = vmatpush1.msra.mxu0 0.0
    %3494 = vmatprep.subr.mxu0 0.0
    %3495 = vmatpush1.msra.mxu0 0.0
    %3496 = vmatprep.subr.mxu0 0.0
    %3497 = vmatpush1.msra.mxu0 0.0
    %3498 = vmatprep.subr.mxu0 0.0
    %3499 = vmatpush1.msra.mxu0 0.0
    %3500 = vmatprep.subr.mxu0 0.0
    %3501 = vmatpush1.msra.mxu0 0.0
    %3502 = vmatprep.subr.mxu0 0.0
    %3503 = vmatpush1.msra.mxu0 0.0
    %3504 = vmatprep.subr.mxu0 0.0
    %3505 = vmatpush1.msra.mxu0 0.0
    %3506 = vmatprep.subr.mxu0 0.0
    %3507 = vmatpush1.msra.mxu0 0.0
    %3508 = vmatprep.subr.mxu0 0.0
    %3509 = vmatpush1.msra.mxu0 %v3473
    %3510 = vmatprep.subr.mxu0 0.0
    %3511 = vmatpush2.msra.mxu0 0.0
    %3512 = vmatprep.subr.mxu0 0.0
    %3513 = vmatpush2.msra.mxu0 0.0
    %3514 = vmatprep.subr.mxu0 0.0
    %3515 = vmatpush2.msra.mxu0 0.0
    %3516 = vmatprep.subr.mxu0 0.0
    %3517 = vmatpush2.msra.mxu0 0.0
    %3518 = vmatprep.subr.mxu0 0.0
    %3519 = vmatpush2.msra.mxu0 0.0
    %3520 = vmatprep.subr.mxu0 0.0
    %3521 = vmatpush2.msra.mxu0 0.0
    %3522 = vmatprep.subr.mxu0 0.0
    %3523 = vmatpush2.msra.mxu0 0.0
    %3524 = vmatprep.subr.mxu0 0.0
    %3525 = vmatpush2.msra.mxu0 0.0
    %3526 = vmatprep.subr.mxu0 0.0
    %3527 = vmatpush2.msra.mxu0 0.0
    %3528 = vmatprep.subr.mxu0 0.0
    %3529 = vmatpush2.msra.mxu0 0.0
    %3530 = vmatprep.subr.mxu0 0.0
    %3531 = vmatpush2.msra.mxu0 0.0
    %3532 = vmatprep.subr.mxu0 0.0
    %3533 = vmatpush2.msra.mxu0 0.0
    %3534 = vmatprep.subr.mxu0 0.0
    %3535 = vmatpush2.msra.mxu0 0.0
    %3536 = vmatprep.subr.mxu0 0.0
    %3537 = vmatpush2.msra.mxu0 0.0
    %3538 = vmatprep.subr.mxu0 0.0
    %3539 = vmatpush2.msra.mxu0 0.0
    %3540 = vmatprep.subr.mxu0 0.0
    %3541 = vmatpush2.msra.mxu0 0.0
    %3542 = vmatprep.mubr.f32.mxu0 0.0
    %3543 = vmatmul.mubr.f32.gmra.mxu0 %v3476
    %v3544 = vpop.f32.mrf.mxu0
    %v3545 = vadd.f32 0.0, %v3544
    %v3546 = vpop.f32.mrf.mxu0
    %3547 = vdwg.mxu0
    %3548 = vrot.lane.b32.xlu0 %v2054, 40
    %v3549 = vpop.permute.xlu0 %3548
    %v3552 = vsel %vm260, %v3471, 0
    %3554 = vmatprep.subr.mxu0 0.0
    %3555 = vmatpush1.msra.mxu0 0.0
    %3556 = vmatprep.subr.mxu0 0.0
    %3557 = vmatpush1.msra.mxu0 0.0
    %3558 = vmatprep.subr.mxu0 0.0
    %3559 = vmatpush1.msra.mxu0 0.0
    %3560 = vmatprep.subr.mxu0 0.0
    %3561 = vmatpush1.msra.mxu0 0.0
    %3562 = vmatprep.subr.mxu0 0.0
    %3563 = vmatpush1.msra.mxu0 0.0
    %3564 = vmatprep.subr.mxu0 0.0
    %3565 = vmatpush1.msra.mxu0 0.0
    %3566 = vmatprep.subr.mxu0 0.0
    %3567 = vmatpush1.msra.mxu0 0.0
    %3568 = vmatprep.subr.mxu0 0.0
    %3569 = vmatpush1.msra.mxu0 0.0
    %3570 = vmatprep.subr.mxu0 0.0
    %3571 = vmatpush1.msra.mxu0 0.0
    %3572 = vmatprep.subr.mxu0 0.0
    %3573 = vmatpush1.msra.mxu0 0.0
    %3574 = vmatprep.subr.mxu0 0.0
    %3575 = vmatpush1.msra.mxu0 0.0
    %3576 = vmatprep.subr.mxu0 0.0
    %3577 = vmatpush1.msra.mxu0 0.0
    %3578 = vmatprep.subr.mxu0 0.0
    %3579 = vmatpush1.msra.mxu0 0.0
    %3580 = vmatprep.subr.mxu0 0.0
    %3581 = vmatpush1.msra.mxu0 0.0
    %3582 = vmatprep.subr.mxu0 0.0
    %3583 = vmatpush1.msra.mxu0 0.0
    %3584 = vmatprep.subr.mxu0 0.0
    %3585 = vmatpush1.msra.mxu0 %v3549
    %3586 = vmatprep.subr.mxu0 0.0
    %3587 = vmatpush2.msra.mxu0 0.0
    %3588 = vmatprep.subr.mxu0 0.0
    %3589 = vmatpush2.msra.mxu0 0.0
    %3590 = vmatprep.subr.mxu0 0.0
    %3591 = vmatpush2.msra.mxu0 0.0
    %3592 = vmatprep.subr.mxu0 0.0
    %3593 = vmatpush2.msra.mxu0 0.0
    %3594 = vmatprep.subr.mxu0 0.0
    %3595 = vmatpush2.msra.mxu0 0.0
    %3596 = vmatprep.subr.mxu0 0.0
    %3597 = vmatpush2.msra.mxu0 0.0
    %3598 = vmatprep.subr.mxu0 0.0
    %3599 = vmatpush2.msra.mxu0 0.0
    %3600 = vmatprep.subr.mxu0 0.0
    %3601 = vmatpush2.msra.mxu0 0.0
    %3602 = vmatprep.subr.mxu0 0.0
    %3603 = vmatpush2.msra.mxu0 0.0
    %3604 = vmatprep.subr.mxu0 0.0
    %3605 = vmatpush2.msra.mxu0 0.0
    %3606 = vmatprep.subr.mxu0 0.0
    %3607 = vmatpush2.msra.mxu0 0.0
    %3608 = vmatprep.subr.mxu0 0.0
    %3609 = vmatpush2.msra.mxu0 0.0
    %3610 = vmatprep.subr.mxu0 0.0
    %3611 = vmatpush2.msra.mxu0 0.0
    %3612 = vmatprep.subr.mxu0 0.0
    %3613 = vmatpush2.msra.mxu0 0.0
    %3614 = vmatprep.subr.mxu0 0.0
    %3615 = vmatpush2.msra.mxu0 0.0
    %3616 = vmatprep.subr.mxu0 0.0
    %3617 = vmatpush2.msra.mxu0 0.0
    %3618 = vmatprep.mubr.f32.mxu0 0.0
    %3619 = vmatmul.mubr.f32.gmra.mxu0 %v3552
    %v3620 = vpop.f32.mrf.mxu0
    %v3621 = vadd.f32 0.0, %v3620
    %v3622 = vpop.f32.mrf.mxu0
    %3623 = vdwg.mxu0
    %v3625 = vsel %vm260, %v3545, 0
    %v3628 = vsel %vm260, %v3621, 0
    %3630 = vmatprep.subr.mxu0 0.0
    %3631 = vmatpush1.msra.mxu0 0.0
    %3632 = vmatprep.subr.mxu0 0.0
    %3633 = vmatpush1.msra.mxu0 0.0
    %3634 = vmatprep.subr.mxu0 0.0
    %3635 = vmatpush1.msra.mxu0 0.0
    %3636 = vmatprep.subr.mxu0 0.0
    %3637 = vmatpush1.msra.mxu0 0.0
    %3638 = vmatprep.subr.mxu0 0.0
    %3639 = vmatpush1.msra.mxu0 0.0
    %3640 = vmatprep.subr.mxu0 0.0
    %3641 = vmatpush1.msra.mxu0 0.0
    %3642 = vmatprep.subr.mxu0 0.0
    %3643 = vmatpush1.msra.mxu0 0.0
    %3644 = vmatprep.subr.mxu0 0.0
    %3645 = vmatpush1.msra.mxu0 0.0
    %3646 = vmatprep.subr.mxu0 0.0
    %3647 = vmatpush1.msra.mxu0 0.0
    %3648 = vmatprep.subr.mxu0 0.0
    %3649 = vmatpush1.msra.mxu0 0.0
    %3650 = vmatprep.subr.mxu0 0.0
    %3651 = vmatpush1.msra.mxu0 0.0
    %3652 = vmatprep.subr.mxu0 0.0
    %3653 = vmatpush1.msra.mxu0 0.0
    %3654 = vmatprep.subr.mxu0 0.0
    %3655 = vmatpush1.msra.mxu0 0.0
    %3656 = vmatprep.subr.mxu0 0.0
    %3657 = vmatpush1.msra.mxu0 0.0
    %3658 = vmatprep.subr.mxu0 0.0
    %3659 = vmatpush1.msra.mxu0 0.0
    %3660 = vmatprep.subr.mxu0 0.0
    %3661 = vmatpush1.msra.mxu0 %v1968
    %3662 = vmatprep.subr.mxu0 0.0
    %3663 = vmatpush2.msra.mxu0 0.0
    %3664 = vmatprep.subr.mxu0 0.0
    %3665 = vmatpush2.msra.mxu0 0.0
    %3666 = vmatprep.subr.mxu0 0.0
    %3667 = vmatpush2.msra.mxu0 0.0
    %3668 = vmatprep.subr.mxu0 0.0
    %3669 = vmatpush2.msra.mxu0 0.0
    %3670 = vmatprep.subr.mxu0 0.0
    %3671 = vmatpush2.msra.mxu0 0.0
    %3672 = vmatprep.subr.mxu0 0.0
    %3673 = vmatpush2.msra.mxu0 0.0
    %3674 = vmatprep.subr.mxu0 0.0
    %3675 = vmatpush2.msra.mxu0 0.0
    %3676 = vmatprep.subr.mxu0 0.0
    %3677 = vmatpush2.msra.mxu0 0.0
    %3678 = vmatprep.subr.mxu0 0.0
    %3679 = vmatpush2.msra.mxu0 0.0
    %3680 = vmatprep.subr.mxu0 0.0
    %3681 = vmatpush2.msra.mxu0 0.0
    %3682 = vmatprep.subr.mxu0 0.0
    %3683 = vmatpush2.msra.mxu0 0.0
    %3684 = vmatprep.subr.mxu0 0.0
    %3685 = vmatpush2.msra.mxu0 0.0
    %3686 = vmatprep.subr.mxu0 0.0
    %3687 = vmatpush2.msra.mxu0 0.0
    %3688 = vmatprep.subr.mxu0 0.0
    %3689 = vmatpush2.msra.mxu0 0.0
    %3690 = vmatprep.subr.mxu0 0.0
    %3691 = vmatpush2.msra.mxu0 0.0
    %3692 = vmatprep.subr.mxu0 0.0
    %3693 = vmatpush2.msra.mxu0 0.0
    %3694 = vmatprep.mubr.f32.mxu0 0.0
    %3695 = vmatmul.mubr.f32.gmra.mxu0 %v3625
    %v3696 = vpop.f32.mrf.mxu0
    %v3697 = vadd.f32 0.0, %v3696
    %v3698 = vpop.f32.mrf.mxu0
    %3699 = vmatprep.mubr.f32.mxu0 0.0
    %3700 = vmatmul.mubr.f32.gmra.mxu0 %v3628
    %v3701 = vpop.f32.mrf.mxu0
    %v3702 = vadd.f32 0.0, %v3701
    %v3703 = vpop.f32.mrf.mxu0
    %3704 = vdwg.mxu0
    %v3705 = vadd.f32 %v3292, %v3697
    %v3706 = vadd.f32 %v3293, %v3702
    %v3708 = vlaneseq
    %v3709 = vshrl.u32 %v3708, 7
    %v3710 = vsub.s32 0, %v3709
    %v3711 = vrot.slane %v1969, %v3710
    %v3713 = vadd.f32 %v3705, %v3711
    %v3714 = vadd.f32 %v3706, %v3711
    %v3715 = vadd.f32 %v1914, %v3713
    %v3716 = vadd.f32 %v1915, %v3714
    %v3717 = vld [vmem:[%s13] sm:$0x1]
    %v3718 = vld [vmem:[%s14] sm:$0x1]
    %v3719 = vsel %vm114, %v3715, 0.0
    %3720 = vadd.xlane.f32.xlu0 %v3719
    %v3721 = vpop.xlane.xlu0 %3720
    %v3722 = vsel %vm114, %v3716, 0.0
    %3723 = vadd.xlane.f32.xlu0 %v3722
    %v3724 = vpop.xlane.xlu0 %3723
    %v3725 = vmul.f32 %v3721, %v121
    %v3726 = vmul.f32 %v3724, %v121
    %v3727 = vsub.f32 %v3715, %v3725
    %v3728 = vsub.f32 %v3716, %v3726
    %v3729 = vmul.f32 %v3727, %v3727
    %v3730 = vmul.f32 %v3728, %v3728
    %v3731 = vsel %vm114, %v3729, 0.0
    %3732 = vadd.xlane.f32.xlu0 %v3731
    %v3733 = vpop.xlane.xlu0 %3732
    %v3734 = vsel %vm114, %v3730, 0.0
    %3735 = vadd.xlane.f32.xlu0 %v3734
    %v3736 = vpop.xlane.xlu0 %3735
    %v3737 = vmul.f32 %v3733, %v121
    %v3738 = vmul.f32 %v3736, %v121
    %v3739 = vadd.f32 %v3737, 1e-05
    %v3740 = vadd.f32 %v3738, 1e-05
    %v3741 = vrsqrt.pop %v3739
    %v3742 = vrsqrt.pop %v3740
    %v3743 = vmul.f32 %v3727, %v3741
    %v3744 = vmul.f32 %v3728, %v3742
    %v3746 = vlaneseq
    %v3747 = vshrl.u32 %v3746, 7
    %v3748 = vsub.s32 0, %v3747
    %v3749 = vrot.slane %v3717, %v3748
    %v3751 = vmul.f32 %v3743, %v3749
    %v3752 = vmul.f32 %v3744, %v3749
    %v3754 = vlaneseq
    %v3755 = vshrl.u32 %v3754, 7
    %v3756 = vsub.s32 0, %v3755
    %v3757 = vrot.slane %v3718, %v3756
    %v3759 = vadd.f32 %v3751, %v3757
    %v3760 = vadd.f32 %v3752, %v3757
    %v3761 = vld [vmem:[#allocation7] sm:$0xff]
    %v3762 = vld [vmem:[#allocation7 + $0x8] sm:$0xff]
    %v3763 = vld [vmem:[#allocation7 + $0x10] sm:$0xff]
    %v3764 = vld [vmem:[#allocation7 + $0x18] sm:$0xff]
    %v3765 = vld [vmem:[%s16] sm:$0x1]
    %v3767 = vlaneseq
    %v3768 = vshrl.u32 %v3767, 7
    %v3769 = vsub.s32 0, %v3768
    %v3770 = vrot.slane %v3765, %v3769
    %v3773 = vsel %vm114, %v3759, 0
    %v3776 = vsel %vm114, %v3760, 0
    %3778 = vmatprep.subr.mxu0 0.0
    %3779 = vmatpush1.msra.mxu0 0.0
    %3780 = vmatprep.subr.mxu0 0.0
    %3781 = vmatpush1.msra.mxu0 0.0
    %3782 = vmatprep.subr.mxu0 0.0
    %3783 = vmatpush1.msra.mxu0 0.0
    %3784 = vmatprep.subr.mxu0 0.0
    %3785 = vmatpush1.msra.mxu0 0.0
    %3786 = vmatprep.subr.mxu0 0.0
    %3787 = vmatpush1.msra.mxu0 0.0
    %3788 = vmatprep.subr.mxu0 0.0
    %3789 = vmatpush1.msra.mxu0 0.0
    %3790 = vmatprep.subr.mxu0 0.0
    %3791 = vmatpush1.msra.mxu0 0.0
    %3792 = vmatprep.subr.mxu0 0.0
    %3793 = vmatpush1.msra.mxu0 0.0
    %3794 = vmatprep.subr.mxu0 0.0
    %3795 = vmatpush1.msra.mxu0 0.0
    %3796 = vmatprep.subr.mxu0 0.0
    %3797 = vmatpush1.msra.mxu0 0.0
    %3798 = vmatprep.subr.mxu0 0.0
    %3799 = vmatpush1.msra.mxu0 0.0
    %3800 = vmatprep.subr.mxu0 0.0
    %3801 = vmatpush1.msra.mxu0 0.0
    %3802 = vmatprep.subr.mxu0 0.0
    %3803 = vmatpush1.msra.mxu0 %v3764
    %3804 = vmatprep.subr.mxu0 0.0
    %3805 = vmatpush1.msra.mxu0 %v3763
    %3806 = vmatprep.subr.mxu0 0.0
    %3807 = vmatpush1.msra.mxu0 %v3762
    %3808 = vmatprep.subr.mxu0 0.0
    %3809 = vmatpush1.msra.mxu0 %v3761
    %3810 = vmatprep.subr.mxu0 0.0
    %3811 = vmatpush2.msra.mxu0 0.0
    %3812 = vmatprep.subr.mxu0 0.0
    %3813 = vmatpush2.msra.mxu0 0.0
    %3814 = vmatprep.subr.mxu0 0.0
    %3815 = vmatpush2.msra.mxu0 0.0
    %3816 = vmatprep.subr.mxu0 0.0
    %3817 = vmatpush2.msra.mxu0 0.0
    %3818 = vmatprep.subr.mxu0 0.0
    %3819 = vmatpush2.msra.mxu0 0.0
    %3820 = vmatprep.subr.mxu0 0.0
    %3821 = vmatpush2.msra.mxu0 0.0
    %3822 = vmatprep.subr.mxu0 0.0
    %3823 = vmatpush2.msra.mxu0 0.0
    %3824 = vmatprep.subr.mxu0 0.0
    %3825 = vmatpush2.msra.mxu0 0.0
    %3826 = vmatprep.subr.mxu0 0.0
    %3827 = vmatpush2.msra.mxu0 0.0
    %3828 = vmatprep.subr.mxu0 0.0
    %3829 = vmatpush2.msra.mxu0 0.0
    %3830 = vmatprep.subr.mxu0 0.0
    %3831 = vmatpush2.msra.mxu0 0.0
    %3832 = vmatprep.subr.mxu0 0.0
    %3833 = vmatpush2.msra.mxu0 0.0
    %3834 = vmatprep.subr.mxu0 0.0
    %3835 = vmatpush2.msra.mxu0 0.0
    %3836 = vmatprep.subr.mxu0 0.0
    %3837 = vmatpush2.msra.mxu0 0.0
    %3838 = vmatprep.subr.mxu0 0.0
    %3839 = vmatpush2.msra.mxu0 0.0
    %3840 = vmatprep.subr.mxu0 0.0
    %3841 = vmatpush2.msra.mxu0 0.0
    %3842 = vmatprep.mubr.f32.mxu0 0.0
    %3843 = vmatmul.mubr.f32.gmra.mxu0 %v3773
    %v3844 = vpop.f32.mrf.mxu0
    %v3845 = vadd.f32 %v3770, %v3844
    %v3846 = vpop.f32.mrf.mxu0
    %3847 = vmatprep.mubr.f32.mxu0 0.0
    %3848 = vmatmul.mubr.f32.gmra.mxu0 %v3776
    %v3849 = vpop.f32.mrf.mxu0
    %v3850 = vadd.f32 %v3770, %v3849
    %v3851 = vpop.f32.mrf.mxu0
    %3852 = vdwg.mxu0
    %v3853 = vmul.f32 %v3845, 0.5
    %v3854 = vmul.f32 %v3850, 0.5
    %v3855 = vrcp.pop 1.4142135
    %v3856 = vmul.f32 %v3845, %v3855
    %v3857 = vmul.f32 %v3850, %v3855
    %v3858 = verf.f32.pop %v3856
    %v3859 = verf.f32.pop %v3857
    %v3860 = vadd.f32 %v3858, 1.0
    %v3861 = vadd.f32 %v3859, 1.0
    %v3862 = vmul.f32 %v3853, %v3860
    %v3863 = vmul.f32 %v3854, %v3861
    %v3864 = vld [vmem:[%s17] sm:$0xff]
    %v3865 = vld [vmem:[%s17 + $0x8] sm:$0xff]
    %v3866 = vld [vmem:[%s17 + $0x10] sm:$0xff]
    %v3867 = vld [vmem:[%s17 + $0x18] sm:$0xff]
    %v3868 = vld [vmem:[%s17 + $0x20] sm:$0xff]
    %v3869 = vld [vmem:[%s17 + $0x28] sm:$0xff]
    %v3870 = vld [vmem:[%s17 + $0x30] sm:$0xff]
    %v3871 = vld [vmem:[%s17 + $0x38] sm:$0xff]
    %v3872 = vld [vmem:[%s18] sm:$0x1]
    %v3874 = vlaneseq
    %v3875 = vshrl.u32 %v3874, 7
    %v3876 = vsub.s32 0, %v3875
    %v3877 = vrot.slane %v3872, %v3876
    %vm3879 = vcmask 523264
    %v3881 = vsel %vm3879, %v3862, 0
    %v3884 = vsel %vm3879, %v3863, 0
    %3886 = vmatprep.subr.mxu0 0.0
    %3887 = vmatpush1.msra.mxu0 0.0
    %3888 = vmatprep.subr.mxu0 0.0
    %3889 = vmatpush1.msra.mxu0 0.0
    %3890 = vmatprep.subr.mxu0 0.0
    %3891 = vmatpush1.msra.mxu0 0.0
    %3892 = vmatprep.subr.mxu0 0.0
    %3893 = vmatpush1.msra.mxu0 0.0
    %3894 = vmatprep.subr.mxu0 0.0
    %3895 = vmatpush1.msra.mxu0 0.0
    %3896 = vmatprep.subr.mxu0 0.0
    %3897 = vmatpush1.msra.mxu0 0.0
    %3898 = vmatprep.subr.mxu0 0.0
    %3899 = vmatpush1.msra.mxu0 0.0
    %3900 = vmatprep.subr.mxu0 0.0
    %3901 = vmatpush1.msra.mxu0 0.0
    %3902 = vmatprep.subr.mxu0 0.0
    %3903 = vmatpush1.msra.mxu0 %v3871
    %3904 = vmatprep.subr.mxu0 0.0
    %3905 = vmatpush1.msra.mxu0 %v3870
    %3906 = vmatprep.subr.mxu0 0.0
    %3907 = vmatpush1.msra.mxu0 %v3869
    %3908 = vmatprep.subr.mxu0 0.0
    %3909 = vmatpush1.msra.mxu0 %v3868
    %3910 = vmatprep.subr.mxu0 0.0
    %3911 = vmatpush1.msra.mxu0 %v3867
    %3912 = vmatprep.subr.mxu0 0.0
    %3913 = vmatpush1.msra.mxu0 %v3866
    %3914 = vmatprep.subr.mxu0 0.0
    %3915 = vmatpush1.msra.mxu0 %v3865
    %3916 = vmatprep.subr.mxu0 0.0
    %3917 = vmatpush1.msra.mxu0 %v3864
    %3918 = vmatprep.subr.mxu0 0.0
    %3919 = vmatpush2.msra.mxu0 0.0
    %3920 = vmatprep.subr.mxu0 0.0
    %3921 = vmatpush2.msra.mxu0 0.0
    %3922 = vmatprep.subr.mxu0 0.0
    %3923 = vmatpush2.msra.mxu0 0.0
    %3924 = vmatprep.subr.mxu0 0.0
    %3925 = vmatpush2.msra.mxu0 0.0
    %3926 = vmatprep.subr.mxu0 0.0
    %3927 = vmatpush2.msra.mxu0 0.0
    %3928 = vmatprep.subr.mxu0 0.0
    %3929 = vmatpush2.msra.mxu0 0.0
    %3930 = vmatprep.subr.mxu0 0.0
    %3931 = vmatpush2.msra.mxu0 0.0
    %3932 = vmatprep.subr.mxu0 0.0
    %3933 = vmatpush2.msra.mxu0 0.0
    %3934 = vmatprep.subr.mxu0 0.0
    %3935 = vmatpush2.msra.mxu0 0.0
    %3936 = vmatprep.subr.mxu0 0.0
    %3937 = vmatpush2.msra.mxu0 0.0
    %3938 = vmatprep.subr.mxu0 0.0
    %3939 = vmatpush2.msra.mxu0 0.0
    %3940 = vmatprep.subr.mxu0 0.0
    %3941 = vmatpush2.msra.mxu0 0.0
    %3942 = vmatprep.subr.mxu0 0.0
    %3943 = vmatpush2.msra.mxu0 0.0
    %3944 = vmatprep.subr.mxu0 0.0
    %3945 = vmatpush2.msra.mxu0 0.0
    %3946 = vmatprep.subr.mxu0 0.0
    %3947 = vmatpush2.msra.mxu0 0.0
    %3948 = vmatprep.subr.mxu0 0.0
    %3949 = vmatpush2.msra.mxu0 0.0
    %3950 = vmatprep.mubr.f32.mxu0 0.0
    %3951 = vmatmul.mubr.f32.gmra.mxu0 %v3881
    %v3952 = vpop.f32.mrf.mxu0
    %v3953 = vadd.f32 %v3877, %v3952
    %v3954 = vpop.f32.mrf.mxu0
    %3955 = vmatprep.mubr.f32.mxu0 0.0
    %3956 = vmatmul.mubr.f32.gmra.mxu0 %v3884
    %v3957 = vpop.f32.mrf.mxu0
    %v3958 = vadd.f32 %v3877, %v3957
    %v3959 = vpop.f32.mrf.mxu0
    %3960 = vdwg.mxu0
    %v3961 = vadd.f32 %v3715, %v3953
    %v3962 = vadd.f32 %v3716, %v3958
    %3963 = vst.msk [vmem:[#allocation8] sm:$0xff] %vm114, %v3961
    %3964 = vst.msk [vmem:[#allocation8 + $0x8] sm:$0xff] %vm114, %v3962
    // Predicated region
    $region90: #{tpu_custom_call.1} parent=1 // pred_check
      _
    $region91: #{tpu_custom_call.1} parent=1 // pred_check_branch
      %3966 = sbr.rel (0) target = $region93
    $region92: #{tpu_custom_call.1} parent=1 // pred_region
      %s3968 = ssub.s32 256, 256
      %3969 = vsyncadd [#allocation4], %s3968
      %s3970 = sshll.u32 [#allocation8], 4
      %s3971 = int_to_ptr.vmem [resolvable:$true] %s3970
      %3976 = dma.vmem_to_hbm [thread:$0]  %s3971, 256, %s19, [#allocation4], 128, 128, 8
    $region93: #{tpu_custom_call.1} parent=1 // pred_fallthru
      _
    // Predicated region
    $region94: #{tpu_custom_call.1} parent=1 // pred_check
      _
    $region95: #{tpu_custom_call.1} parent=1 // pred_check_branch
      %3978 = sbr.rel (0) target = $region97
    $region96: #{tpu_custom_call.1} parent=1 // pred_region
      %3979 = dma.done [#allocation4], 256
    $region97: #{tpu_custom_call.1} parent=1 // pred_fallthru
      _
    %3980 = vsyncpa [#allocation3], 1
    %3981 = vsyncpa [#allocation6], 1
    %3982 = vsyncpa [#allocation4], 1

</llo_original>
